<compile_context>
chip_gen: v7x
topology: tpu7x:2x2x1
jax: 0.10.0
libtpu: 0.0.40
codegen_flags: <defaults>
</compile_context>

<pallas_src>
import jax
import jax.numpy as jnp
from jax.experimental import pallas as pl
from jax.experimental.pallas import tpu as pltpu


# ----------------------------------------------------------------------------
# Layer 1: im2col matmul + folded BN + ReLU + fused 2x2 max-pool.
# Grid: (batch, row-tiles).  Input block is (1, TH, W, 27) pre-gathered
# patches; one matmul with K=27 produces TH conv rows, pooled to TH/2 rows.
# ----------------------------------------------------------------------------
def _conv1_im2col_kernel(x_ref, w_ref, b_ref, o_ref):
    # x_ref: (1, TH, W, 27) bf16   im2col patches
    # w_ref: (27, Cout)     bf16   folded conv1 weight
    # b_ref: (1, Cout)      f32    folded bias
    # o_ref: (1, TH//2, W//2, Cout) bf16  pooled output tile
    TH, W, KK = x_ref.shape[1], x_ref.shape[2], x_ref.shape[3]
    Cout = o_ref.shape[3]

    p = x_ref[0].reshape(TH * W, KK)
    acc = jnp.dot(p, w_ref[...], preferred_element_type=jnp.float32)
    acc = jnp.maximum(acc + b_ref[0], 0.0)

    # Fused 2x2 max-pool (reshape-based pair reductions, no strided loads).
    y = jnp.max(acc.reshape(TH // 2, 2, W, Cout), axis=1)      # row pairs
    y = jnp.max(y.reshape(TH // 2, W // 2, 2, Cout), axis=2)   # col pairs
    o_ref[0] = y.astype(o_ref.dtype)


def conv1_bn_relu_pool(patches, w27, bias, *, th=8):
    N, H, W, KK = patches.shape
    Cout = w27.shape[1]
    assert H % th == 0 and th % 2 == 0 and W % 2 == 0
    grid = (N, H // th)
    return pl.pallas_call(
        _conv1_im2col_kernel,
        out_shape=jax.ShapeDtypeStruct((N, H // 2, W // 2, Cout), jnp.bfloat16),
        grid_spec=pltpu.PrefetchScalarGridSpec(
            num_scalar_prefetch=0,
            grid=grid,
            in_specs=[
                pl.BlockSpec((1, th, W, KK), lambda n, r: (n, r, 0, 0)),
                pl.BlockSpec((KK, Cout), lambda n, r: (0, 0)),
                pl.BlockSpec((1, Cout), lambda n, r: (0, 0)),
            ],
            out_specs=pl.BlockSpec((1, th // 2, W // 2, Cout),
                                   lambda n, r: (n, r, 0, 0)),
        ),
        compiler_params=pltpu.CompilerParams(
            dimension_semantics=("parallel", "parallel")),
    )(patches, w27, bias)


# ----------------------------------------------------------------------------
# Layers 2-4: 3x3 conv (pad=1) + folded BN + ReLU + fused 2x2 max-pool.
# Grid: (batch, row-tiles).  The full zero-padded image of one batch element
# lives in VMEM; each step builds the 3 dx-shifted views once, concatenates
# them along lanes, and runs 3 matmuls with K = 3*Cin on the MXU.
# ----------------------------------------------------------------------------
def _conv3x3_bn_relu_pool_kernel(x_ref, w_ref, b_ref, o_ref):
    # x_ref: (1, H+2, W+2, Cin)  bf16  padded input image (whole image/batch)
    # w_ref: (3, 3*Cin, Cout)    bf16  folded weights, indexed by ky
    # b_ref: (1, Cout)           f32   folded bias
    # o_ref: (1, TH//2, W//2, Cout) bf16  pooled output row tile
    TH2, Wh, Cout = o_ref.shape[1], o_ref.shape[2], o_ref.shape[3]
    TH, W = 2 * TH2, 2 * Wh
    Cin = x_ref.shape[3]
    r = pl.program_id(1)
    row0 = pl.multiple_of(r * TH, TH)

    # Three dx-shifted views, concatenated along lanes -> (TH+2, W, 3*Cin).
    S = jnp.concatenate(
        [x_ref[0, pl.ds(row0, TH + 2), pl.ds(dx, W), :] for dx in range(3)],
        axis=-1)

    acc = None
    for ky in range(3):
        d = jnp.dot(S[ky:ky + TH].reshape(TH * W, 3 * Cin), w_ref[ky],
                    preferred_element_type=jnp.float32)
        acc = d if acc is None else acc + d

    acc = jnp.maximum(acc + b_ref[0], 0.0)

    # Fused 2x2 max-pool.
    y = jnp.max(acc.reshape(TH2, 2, W, Cout), axis=1)     # row pairs
    y = jnp.max(y.reshape(TH2, Wh, 2, Cout), axis=2)      # col pairs
    o_ref[0] = y.astype(o_ref.dtype)


def conv3x3_bn_relu_pool(x_nhwc, w3, bias, *, th=8):
    N, H, W, Cin = x_nhwc.shape
    Cout = w3.shape[-1]
    th = min(th, H)
    assert H % th == 0 and th % 2 == 0 and W % 2 == 0
    xp = jnp.pad(x_nhwc, ((0, 0), (1, 1), (1, 1), (0, 0)))
    Hp, Wp = H + 2, W + 2
    grid = (N, H // th)
    return pl.pallas_call(
        _conv3x3_bn_relu_pool_kernel,
        out_shape=jax.ShapeDtypeStruct((N, H // 2, W // 2, Cout), jnp.bfloat16),
        grid_spec=pltpu.PrefetchScalarGridSpec(
            num_scalar_prefetch=0,
            grid=grid,
            in_specs=[
                pl.BlockSpec((1, Hp, Wp, Cin), lambda n, r: (n, 0, 0, 0)),
                pl.BlockSpec((3, 3 * Cin, Cout), lambda n, r: (0, 0, 0)),
                pl.BlockSpec((1, Cout), lambda n, r: (0, 0)),
            ],
            out_specs=pl.BlockSpec((1, th // 2, W // 2, Cout),
                                   lambda n, r: (n, r, 0, 0)),
        ),
        compiler_params=pltpu.CompilerParams(
            dimension_semantics=("parallel", "parallel")),
    )(xp, w3, bias)


# ----------------------------------------------------------------------------
# feature_layer: (N, 16384) @ (16384, 1024) + bias.
# Grid (D tiles [parallel], K tiles [arbitrary, last]); in-place accumulation
# into the resident output block; bf16 weight stream, f32 accumulation.
# ----------------------------------------------------------------------------
def _fc_kernel(x_ref, w_ref, b_ref, o_ref):
    k = pl.program_id(1)

    @pl.when(k == 0)
    def _():
        o_ref[...] = jnp.zeros_like(o_ref)

    o_ref[...] += jnp.dot(x_ref[...], w_ref[...],
                          preferred_element_type=jnp.float32)

    @pl.when(k == pl.num_programs(1) - 1)
    def _():
        o_ref[...] += b_ref[...]


def feature_linear(x_flat, w, b, *, tk=2048, tn=512):
    N, K = x_flat.shape
    Kw, D = w.shape
    assert K == Kw and K % tk == 0 and D % tn == 0
    return pl.pallas_call(
        _fc_kernel,
        out_shape=jax.ShapeDtypeStruct((N, D), jnp.float32),
        grid_spec=pltpu.PrefetchScalarGridSpec(
            num_scalar_prefetch=0,
            grid=(D // tn, K // tk),          # K last -> accumulation correct
            in_specs=[
                pl.BlockSpec((N, tk), lambda j, k: (0, k)),
                pl.BlockSpec((tk, tn), lambda j, k: (k, j)),
                pl.BlockSpec((1, tn), lambda j, k: (0, j)),
            ],
            out_specs=pl.BlockSpec((N, tn), lambda j, k: (0, j)),
        ),
        compiler_params=pltpu.CompilerParams(
            dimension_semantics=("parallel", "arbitrary")),
    )(x_flat, w, b)


# ----------------------------------------------------------------------------
# Fused head: hash_like_layer (Linear+tanh), discrete_hash_layer
# (Linear -> (.+1)*0.5 -> clamp -> binarize), classification layer (no bias).
# All operands are tiny and live fully in VMEM (single kernel launch).
# ----------------------------------------------------------------------------
def _head_kernel(f_ref, w2_ref, b2_ref, w3_ref, b3_ref, wc_ref,
                 h_ref, b_ref, y_ref):
    f = f_ref[...]                                                 # (N, 1024)
    h = jnp.tanh(jnp.dot(f, w2_ref[...],
                         preferred_element_type=jnp.float32) + b2_ref[0])
    h_ref[...] = h
    t = jnp.dot(h, w3_ref[...], preferred_element_type=jnp.float32) + b3_ref[0]
    t = jnp.clip((t + 1.0) * 0.5, 0.0, 1.0)
    bsign = jnp.where(t >= 0.5, 1.0, -1.0).astype(jnp.float32)     # (b>=.5)*2-1
    b_ref[...] = bsign
    y_ref[...] = jnp.dot(bsign, wc_ref[...],
                         preferred_element_type=jnp.float32)


def head(feature, w2, b2, w3, b3, wc):
    N = feature.shape[0]
    bit = w2.shape[1]
    n_class = wc.shape[1]
    return pl.pallas_call(
        _head_kernel,
        out_shape=(
            jax.ShapeDtypeStruct((N, bit), jnp.float32),
            jax.ShapeDtypeStruct((N, bit), jnp.float32),
            jax.ShapeDtypeStruct((N, n_class), jnp.float32),
        ),
    )(feature, w2, b2, w3, b3, wc)


# ----------------------------------------------------------------------------
# Parameter construction (deterministic, synthetic).  BatchNorm (eval mode,
# running stats) is folded into the conv weight/bias; large weights in bf16.
# ----------------------------------------------------------------------------
def init_params(key, bit=64, n_class=10):
    params = {"convs": []}
    conv_cfg = [(3, 128), (128, 128), (128, 256), (256, 256)]
    eps = 1e-5
    for li, (cin, cout) in enumerate(conv_cfg):
        key, kw, kb, kg, kbt, km, kv = jax.random.split(key, 7)
        w = jax.random.normal(kw, (3, 3, cin, cout), jnp.float32) * jnp.sqrt(
            2.0 / (9.0 * cin))
        b = 0.01 * jax.random.normal(kb, (cout,), jnp.float32)
        gamma = 1.0 + 0.1 * jax.random.normal(kg, (cout,), jnp.float32)
        beta = 0.1 * jax.random.normal(kbt, (cout,), jnp.float32)
        rmean = 0.1 * jax.random.normal(km, (cout,), jnp.float32)
        rvar = jax.random.uniform(kv, (cout,), jnp.float32, 0.5, 1.5)
        scale = gamma / jnp.sqrt(rvar + eps)
        w_f = w * scale                                   # fold BN scale
        b_f = ((b - rmean) * scale + beta).reshape(1, cout).astype(jnp.float32)
        if li == 0:
            # im2col layout: index (ky*3 + kx)*3 + ci  ==  (3,3,3,C).reshape(27,C)
            w_k = w_f.reshape(9 * cin, cout).astype(jnp.bfloat16)
        else:
            # per-ky blocks of K = 3*Cin: index kx*Cin + ci
            w_k = w_f.reshape(3, 3 * cin, cout).astype(jnp.bfloat16)
        params["convs"].append((w_k, b_f))

    key, k1, k1b, k2, k2b, k3, k3b, kc = jax.random.split(key, 8)
    fin = 8 * 8 * 256
    params["fc1_w"] = (jax.random.normal(k1, (fin, 1024), jnp.float32)
                       / jnp.sqrt(fin)).astype(jnp.bfloat16)
    params["fc1_b"] = 0.01 * jax.random.normal(k1b, (1, 1024), jnp.float32)
    params["fc2_w"] = jax.random.normal(k2, (1024, bit), jnp.float32) / jnp.sqrt(1024.0)
    params["fc2_b"] = 0.01 * jax.random.normal(k2b, (1, bit), jnp.float32)
    params["fc3_w"] = jax.random.normal(k3, (bit, bit), jnp.float32) / jnp.sqrt(bit)
    params["fc3_b"] = 0.01 * jax.random.normal(k3b, (1, bit), jnp.float32)
    params["fcc_w"] = jax.random.normal(kc, (bit, n_class), jnp.float32) / jnp.sqrt(bit)
    return params


# ----------------------------------------------------------------------------
# Full forward pass.
# ----------------------------------------------------------------------------
def pcdhnet_forward(params, x_nchw, istraining=False):
    x = jnp.transpose(x_nchw, (0, 2, 3, 1)).astype(jnp.bfloat16)   # NCHW -> NHWC
    N, H, W, _ = x.shape

    # Layer 1 as im2col (Cin=3 would otherwise lane-pad its VMEM tile ~42x).
    xp = jnp.pad(x, ((0, 0), (1, 1), (1, 1), (0, 0)))
    patches = jnp.concatenate(
        [xp[:, dy:dy + H, dx:dx + W, :] for dy in range(3) for dx in range(3)],
        axis=-1)                                                   # (N,H,W,27)
    w1, b1 = params["convs"][0]
    x = conv1_bn_relu_pool(patches, w1, b1)                        # (N,H/2,W/2,128)

    # Layers 2-4: fused conv+BN+ReLU+pool.
    for (wk, bk) in params["convs"][1:]:
        x = conv3x3_bn_relu_pool(x, wk, bk)

    # Match PyTorch x.view(N, -1) on NCHW: transpose back, then flatten.
    n = x.shape[0]
    x_flat = jnp.transpose(x, (0, 3, 1, 2)).reshape(n, -1)         # (N, 8*8*256) bf16

    feature = feature_linear(x_flat, params["fc1_w"], params["fc1_b"])
    h, b_code, y_pre = head(feature, params["fc2_w"], params["fc2_b"],
                            params["fc3_w"], params["fc3_b"], params["fcc_w"])
    if istraining:
        return feature, h, y_pre
    return b_code


if __name__ == "__main__":
    key = jax.random.PRNGKey(0)
    kx, kp = jax.random.split(key)
    # Input spatial 128x128 is implied by the hardcoded 8*8*256 flatten
    # (four 2x2 max-pools: 128 -> 64 -> 32 -> 16 -> 8).
    x = jax.random.normal(kx, (2, 3, 128, 128), jnp.float32)       # NCHW, like torch
    params = init_params(kp, bit=64, n_class=10)

    b_code = pcdhnet_forward(params, x, istraining=False)
    b_code = jax.block_until_ready(b_code)
    assert b_code.shape == (2, 64)
    assert bool(jnp.all(jnp.isfinite(b_code)))
    assert bool(jnp.all(jnp.abs(b_code) == 1.0))
    print("KERNEL_OK")
</pallas_src>

<mosaic_0001>
module attributes {stable_mosaic.version = 11 : i64} {
  func.func @_conv1_im2col_kernel(%arg0: i32, %arg1: i32, %arg2: memref<1x8x128x27xbf16, #tpu.memory_space<vmem>>, %arg3: memref<27x128xbf16, #tpu.memory_space<vmem>>, %arg4: memref<1x128xf32, #tpu.memory_space<vmem>>, %arg5: memref<1x4x64x128xbf16, #tpu.memory_space<vmem>>) attributes {dimension_semantics = [#tpu.dimension_semantics<parallel>, #tpu.dimension_semantics<parallel>], iteration_bounds = array<i64: 2, 16>, scalar_prefetch = 0 : i64, scratch_operands = 0 : i64, tpu.core_type = #tpu.core_type<tc>, window_params = [{transform_indices = @transform_0, window_bounds = array<i64: 1, 8, 128, 27>}, {pipeline_mode = #tpu.pipeline_mode<synchronous>, transform_indices = @transform_1, window_bounds = array<i64: 27, 128>}, {pipeline_mode = #tpu.pipeline_mode<synchronous>, transform_indices = @transform_2, window_bounds = array<i64: 1, 128>}, {transform_indices = @transform_3, window_bounds = array<i64: 1, 4, 64, 128>}]} {
    %c0 = arith.constant 0 : index
    %c0_0 = arith.constant 0 : index
    %c0_1 = arith.constant 0 : index
    %c0_2 = arith.constant 0 : index
    %0 = vector.load %arg2[%c0, %c0_0, %c0_1, %c0_2] : memref<1x8x128x27xbf16, #tpu.memory_space<vmem>>, vector<1x8x128x27xbf16>
    %1 = vector.shape_cast %0 : vector<1x8x128x27xbf16> to vector<8x128x27xbf16>
    %2 = vector.shape_cast %1 : vector<8x128x27xbf16> to vector<1024x27xbf16>
    %c0_3 = arith.constant 0 : index
    %c0_4 = arith.constant 0 : index
    %3 = vector.load %arg3[%c0_3, %c0_4] : memref<27x128xbf16, #tpu.memory_space<vmem>>, vector<27x128xbf16>
    %cst = arith.constant dense<0.000000e+00> : vector<1024x128xf32>
    %4 = tpu.matmul %2, %3, %cst {dimension_numbers = #tpu.dot_dimension_numbers<[1], [0], [0], [1], [0, 0, 1, 1], [], []>} : vector<1024x27xbf16>, vector<27x128xbf16>, vector<1024x128xf32> -> vector<1024x128xf32>
    %c0_5 = arith.constant 0 : index
    %c0_6 = arith.constant 0 : index
    %5 = vector.load %arg4[%c0_5, %c0_6] : memref<1x128xf32, #tpu.memory_space<vmem>>, vector<1x128xf32>
    %6 = vector.shape_cast %5 : vector<1x128xf32> to vector<128xf32>
    %7 = vector.shape_cast %6 : vector<128xf32> to vector<1x128xf32>
    %8 = vector.broadcast %7 : vector<1x128xf32> to vector<1024x128xf32>
    %9 = arith.addf %4, %8 : vector<1024x128xf32>
    %cst_7 = arith.constant 0.000000e+00 : f32
    %10 = vector.broadcast %cst_7 : f32 to vector<1024x128xf32>
    %11 = arith.maximumf %9, %10 : vector<1024x128xf32>
    %12 = vector.shape_cast %11 : vector<1024x128xf32> to vector<4x2x128x128xf32>
    %cst_8 = arith.constant dense<0xFF800000> : vector<4x128x128xf32>
    %13 = vector.multi_reduction <maximumf>, %12, %cst_8 [1] : vector<4x2x128x128xf32> to vector<4x128x128xf32>
    %14 = vector.shape_cast %13 : vector<4x128x128xf32> to vector<4x64x2x128xf32>
    %cst_9 = arith.constant dense<0xFF800000> : vector<4x64x128xf32>
    %15 = vector.multi_reduction <maximumf>, %14, %cst_9 [2] : vector<4x64x2x128xf32> to vector<4x64x128xf32>
    %16 = arith.truncf %15 : vector<4x64x128xf32> to vector<4x64x128xbf16>
    %c0_10 = arith.constant 0 : index
    %c0_11 = arith.constant 0 : index
    %c0_12 = arith.constant 0 : index
    %c0_13 = arith.constant 0 : index
    %17 = vector.load %arg5[%c0_10, %c0_11, %c0_12, %c0_13] : memref<1x4x64x128xbf16, #tpu.memory_space<vmem>>, vector<1x4x64x128xbf16>
    %18 = vector.shape_cast %17 : vector<1x4x64x128xbf16> to vector<4x64x128xbf16>
    %19 = vector.shape_cast %16 : vector<4x64x128xbf16> to vector<1x4x64x128xbf16>
    tpu.vector_store %arg5[%c0_10, %c0_11, %c0_12, %c0_13], %19 {strides = array<i32>} : memref<1x4x64x128xbf16, #tpu.memory_space<vmem>>, vector<1x4x64x128xbf16>,
    return
  }
  func.func @transform_0(%arg0: i32, %arg1: i32) -> (i32, i32, i32, i32) {
    %c0_i32 = arith.constant 0 : i32
    %c0_i32_0 = arith.constant 0 : i32
    %c0_i32_1 = arith.constant 0 : i32
    return %arg0, %arg1, %c0_i32, %c0_i32_0 : i32, i32, i32, i32
  }
  func.func @transform_1(%arg0: i32, %arg1: i32) -> (i32, i32) {
    %c0_i32 = arith.constant 0 : i32
    %c0_i32_0 = arith.constant 0 : i32
    %c0_i32_1 = arith.constant 0 : i32
    return %c0_i32, %c0_i32_0 : i32, i32
  }
  func.func @transform_2(%arg0: i32, %arg1: i32) -> (i32, i32) {
    %c0_i32 = arith.constant 0 : i32
    %c0_i32_0 = arith.constant 0 : i32
    %c0_i32_1 = arith.constant 0 : i32
    return %c0_i32, %c0_i32_0 : i32, i32
  }
  func.func @transform_3(%arg0: i32, %arg1: i32) -> (i32, i32, i32, i32) {
    %c0_i32 = arith.constant 0 : i32
    %c0_i32_0 = arith.constant 0 : i32
    %c0_i32_1 = arith.constant 0 : i32
    return %arg0, %arg1, %c0_i32, %c0_i32_0 : i32, i32, i32, i32
  }
}

</mosaic_0001>

<llo_original>
// kernel: tpu_custom_call.1
$region0: #{tpu_custom_call.1}
  #allocation0 [shape = 'u32[]', space=smem, size = 0x4, offset = 0x4, fixed_abs, tag = 'smem constant byte address 0x4 - core index']
  #allocation1 [shape = 'u32[144,128]{1,0:T(1,128)}', space=vmem, size = 0x12000, scoped, tag = 'internal scratch']
  %s0 = inlined_call_operand.vmem [shape: bf16[2,128,128,27], index: 0, kind: input, shape index: {}]
  %s1 = inlined_call_operand.vmem [shape: bf16[27,128], index: 1, kind: input, shape index: {}]
  %s2 = inlined_call_operand.vmem [shape: f32[1,128], index: 2, kind: input, shape index: {}]
  %s3 = inlined_call_operand.hbm [shape: bf16[2,64,64,128], index: 3, kind: output, shape index: {}]
  %s4 = sld [smem:[#allocation0]]
  $region45: #{tpu_custom_call.1} parent=0
    _
  %s6 = ssub.s32 1, %s4
  %s7 = scalar_select 0, %s6, %s4
  $region1: #{tpu_custom_call.1} parent=0
    #allocation2 [shape = 'u8[131072]{0}', space=vmem, size = 0x20000, scoped, tag = 'output window, operand 0']
    #allocation3 [shape = 's32[2]{0}', space=sflag, size = 0x8, scoped, tag = 'scoped memory for tpu_custom_call.1']
    %8 = vsyncpa [#allocation3], 0
    %s9 = scalar_lea.sflag [#allocation3], 1
    %10 = vsyncpa %s9, 0
    loop: start=0, step=1, limit=34
    $region2: #{tpu_custom_call.1} parent=1 // loop_pre_header
      _
    $region3: #{tpu_custom_call.1} parent=1 // loop_header
      %s12 = sphi 0, %s16
      %p13 = scmp.ge.s32.totalorder %s12, 34
      %s19 = sphi 0, %s31
      %s20 = sphi 0, %s27
      %s21 = sphi 0, %s19
      %s22 = sphi 0, %s20
      %s23 = sphi 0, %s21
      %s24 = sphi 0, %s22
      %s36 = sphi 0, %s38
      %s39 = sphi 0, %s36
      %s40 = sphi 0, %s39
      %s56 = sphi 0, %s40
      %s60 = sphi 0, %s60
      %s62 = sphi 0, %s60
      %s63 = sphi 0, %s62
      %s77 = sphi 0, %s63
      %s81 = sphi 0, %s81
      %s83 = sphi 0, %s81
      %s84 = sphi 0, %s83
      %s98 = sphi 0, %s84
      %s106 = sphi 0, %s108
      %s109 = sphi 0, %s106
      %s110 = sphi 0, %s109
      %s126 = sphi 0, %s110
    $region4: #{tpu_custom_call.1} parent=1 // loop_header_branch
      %15 = sbr.rel (%p13) target = $region8
    $region5: #{tpu_custom_call.1} parent=1 // loop_body
      %s17 = ssub.s32 %s12, 1
      %s18 = ssub.s32 %s12, 2
      %s25 = sadd.s32 1, %s20
      %p26 = scmp.ge.s32.totalorder %s25, 16
      %s27 = scalar_select %p26, 0, %s25
      %s28 = sadd.s32 1, %s19
      %s29 = scalar_select %p26, %s28, %s19
      %p30 = scmp.ge.s32.totalorder %s29, 2
      %s31 = scalar_select %p30, 0, %s29
      %s32 = ssub.s32 %s19, %s31
      %s33 = ssub.s32 %s20, %s27
      %s34 = sor.u32 %s32, %s33
      %p35 = scmp.eq.s32.totalorder %s34, 0
      %s37 = sadd.s32 %s36, 1
      %s38 = scalar_select %p35, %s36, %s37
      %p41 = pneg %p35
      %p42 = scmp.eq.s32.totalorder %s12, 31
      %p43 = por %p41, %p42
      %p44 = scmp.ne.s32.totalorder %s36, %s39
      %p45 = scmp.eq.s32.totalorder %s12, 0
      %p46 = por %p44, %p45
      %p47 = scmp.ne.s32.totalorder %s36, %s39
      %p48 = scmp.eq.s32.totalorder %s17, 31
      %p49 = por %p47, %p48
      %p50 = scmp.ne.s32.totalorder %s39, %s40
      %p51 = scmp.eq.s32.totalorder %s17, 0
      %p52 = por %p50, %p51
      %p53 = scmp.ne.s32.totalorder %s39, %s40
      %p54 = scmp.eq.s32.totalorder %s18, 31
      %p55 = por %p53, %p54
      %p57 = scmp.ne.s32.totalorder %s40, %s56
      %p58 = scmp.eq.s32.totalorder %s18, 0
      %p59 = por %p57, %p58
      %s61 = sadd.s32 %s60, 1
      %p64 = scmp.eq.s32.totalorder %s12, 31
      %p65 = scmp.ne.s32.totalorder %s60, %s62
      %p66 = scmp.eq.s32.totalorder %s12, 0
      %p67 = por %p65, %p66
      %p68 = scmp.ne.s32.totalorder %s60, %s62
      %p69 = scmp.eq.s32.totalorder %s17, 31
      %p70 = por %p68, %p69
      %p71 = scmp.ne.s32.totalorder %s62, %s63
      %p72 = scmp.eq.s32.totalorder %s17, 0
      %p73 = por %p71, %p72
      %p74 = scmp.ne.s32.totalorder %s62, %s63
      %p75 = scmp.eq.s32.totalorder %s18, 31
      %p76 = por %p74, %p75
      %p78 = scmp.ne.s32.totalorder %s63, %s77
      %p79 = scmp.eq.s32.totalorder %s18, 0
      %p80 = por %p78, %p79
      %s82 = sadd.s32 %s81, 1
      %p85 = scmp.eq.s32.totalorder %s12, 31
      %p86 = scmp.ne.s32.totalorder %s81, %s83
      %p87 = scmp.eq.s32.totalorder %s12, 0
      %p88 = por %p86, %p87
      %p89 = scmp.ne.s32.totalorder %s81, %s83
      %p90 = scmp.eq.s32.totalorder %s17, 31
      %p91 = por %p89, %p90
      %p92 = scmp.ne.s32.totalorder %s83, %s84
      %p93 = scmp.eq.s32.totalorder %s17, 0
      %p94 = por %p92, %p93
      %p95 = scmp.ne.s32.totalorder %s83, %s84
      %p96 = scmp.eq.s32.totalorder %s18, 31
      %p97 = por %p95, %p96
      %p99 = scmp.ne.s32.totalorder %s84, %s98
      %p100 = scmp.eq.s32.totalorder %s18, 0
      %p101 = por %p99, %p100
      %s102 = ssub.s32 %s19, %s31
      %s103 = ssub.s32 %s20, %s27
      %s104 = sor.u32 %s102, %s103
      %p105 = scmp.eq.s32.totalorder %s104, 0
      %s107 = sadd.s32 %s106, 1
      %s108 = scalar_select %p105, %s106, %s107
      %p111 = pneg %p105
      %p112 = scmp.eq.s32.totalorder %s12, 31
      %p113 = por %p111, %p112
      %p114 = scmp.ne.s32.totalorder %s106, %s109
      %p115 = scmp.eq.s32.totalorder %s12, 0
      %p116 = por %p114, %p115
      %p117 = scmp.ne.s32.totalorder %s106, %s109
      %p118 = scmp.eq.s32.totalorder %s17, 31
      %p119 = por %p117, %p118
      %p120 = scmp.ne.s32.totalorder %s109, %s110
      %p121 = scmp.eq.s32.totalorder %s17, 0
      %p122 = por %p120, %p121
      %p123 = scmp.ne.s32.totalorder %s109, %s110
      %p124 = scmp.eq.s32.totalorder %s18, 31
      %p125 = por %p123, %p124
      %p127 = scmp.ne.s32.totalorder %s110, %s126
      %p128 = scmp.eq.s32.totalorder %s18, 0
      %p129 = por %p127, %p128
      %p130 = scmp.le.s32.totalorder 1, %s12
      %p131 = scmp.lt.s32.totalorder %s12, 33
      %p132 = pnand %p130, %p131
      %p133 = pneg %p132
      // Predicated region
      $region9: #{tpu_custom_call.1} parent=5 // pred_check
        _
      $region10: #{tpu_custom_call.1} parent=5 // pred_check_branch
        %135 = sbr.rel (%p132) target = $region12
      $region11: #{tpu_custom_call.1} parent=5 // pred_region
        %s136 = ssub.s32 %s12, 1
        // Predicated region
        $region13: #{tpu_custom_call.1} parent=11 // pred_check
          %p137 = pneg %p73
        $region14: #{tpu_custom_call.1} parent=11 // pred_check_branch
          %139 = sbr.rel (%p137) target = $region16
        $region15: #{tpu_custom_call.1} parent=11 // pred_region
          _
        $region16: #{tpu_custom_call.1} parent=11 // pred_fallthru
          _
        // Predicated region
        $region17: #{tpu_custom_call.1} parent=11 // pred_check
          %p140 = pneg %p94
        $region18: #{tpu_custom_call.1} parent=11 // pred_check_branch
          %142 = sbr.rel (%p140) target = $region20
        $region19: #{tpu_custom_call.1} parent=11 // pred_region
          _
        $region20: #{tpu_custom_call.1} parent=11 // pred_fallthru
          _
      $region12: #{tpu_custom_call.1} parent=5 // pred_fallthru
        _
      %p143 = scmp.lt.s32.totalorder %s12, 32
      // Predicated region
      $region21: #{tpu_custom_call.1} parent=5 // pred_check
        %p144 = pneg %p143
      $region22: #{tpu_custom_call.1} parent=5 // pred_check_branch
        %146 = sbr.rel (%p144) target = $region24
      $region23: #{tpu_custom_call.1} parent=5 // pred_region
        // Predicated region
        $region25: #{tpu_custom_call.1} parent=23 // pred_check
          %p147 = pneg %p46
        $region26: #{tpu_custom_call.1} parent=23 // pred_check_branch
          %149 = sbr.rel (%p147) target = $region28
        $region27: #{tpu_custom_call.1} parent=23 // pred_region
          %s150 = smul.u32 8, %s20
          %p151 = scmp.lt.s32.totalorder %s19, 1
          %s152 = scalar_select %p151, %s19, 1
          %p153 = scmp.lt.s32.totalorder %s150, 127
          %s154 = scalar_select %p153, %s150, 127
          %s155 = smul.addr %s154, 16
          %s156 = smul.addr %s152, 2048
          %s157 = sadd.s32 %s155, %s156
          %s158 = smul.addr %s157, 4
          %s159 = scalar_lea.vmem %s0, %s158
          %s160 = smul.u32 8, %s20
        $region28: #{tpu_custom_call.1} parent=23 // pred_fallthru
          _
      $region24: #{tpu_custom_call.1} parent=5 // pred_fallthru
        _
      %p161 = scmp.le.s32.totalorder 1, %s12
      %p162 = scmp.lt.s32.totalorder %s12, 33
      %p163 = pnand %p161, %p162
      %p164 = pneg %p163
      // Predicated region
      $region29: #{tpu_custom_call.1} parent=5 // pred_check
        _
      $region30: #{tpu_custom_call.1} parent=5 // pred_check_branch
        %166 = sbr.rel (%p163) target = $region32
      $region31: #{tpu_custom_call.1} parent=5 // pred_region
        %s167 = ssub.s32 %s12, 1
        %s168 = smul.u32 8, %s22
        %p169 = scmp.lt.s32.totalorder %s21, 1
        %s170 = scalar_select %p169, %s21, 1
        %p171 = scmp.lt.s32.totalorder %s168, 127
        %s172 = scalar_select %p171, %s168, 127
        %s173 = smul.addr %s172, 16
        %s174 = smul.addr %s170, 2048
        %s175 = sadd.s32 %s173, %s174
        %s176 = smul.addr %s175, 4
        %s177 = scalar_lea.vmem %s0, %s176
        %p178 = pneg %p52
        %p179 = pneg %p49
        %p180 = pneg %p73
        %p181 = pneg %p70
        %p182 = pneg %p94
        %p183 = pneg %p91
        %p184 = pneg %p122
        %p185 = pneg %p119
        %s186 = sand.u32 %s109, 1
        %s187 = scalar_lea.sflag [#allocation3], %s186
        %s188 = sand.u32 %s109, 1
        %s189 = smul.addr %s188, 128
        %s190 = scalar_lea.vmem [#allocation2], %s189
        %s191 = smul.u32 8, %s22
        %p192 = scmp.lt.s32.totalorder %s21, 1
        %s193 = scalar_select %p192, %s21, 1
        %p194 = scmp.lt.s32.totalorder %s191, 127
        %s195 = scalar_select %p194, %s191, 127
        %s196 = smul.addr %s195, 16
        %s197 = smul.addr %s193, 2048
        %s198 = sadd.s32 %s196, %s197
        %s199 = smul.addr %s198, 4
        %s200 = scalar_lea.vmem %s0, %s199
        %s201 = smul.u32 8, %s22
        %s202 = smul.u32 4, %s22
        %v204 = vld [vmem:[%s200] sm:$0xf]
        %v205 = vld [vmem:[%s200 + $0x4] sm:$0xf]
        %v206 = vld [vmem:[%s200 + $0x8] sm:$0xf]
        %v207 = vld [vmem:[%s200 + $0xc] sm:$0xf]
        %v208 = vld [vmem:[%s200 + $0x10] sm:$0xf]
        %v209 = vld [vmem:[%s200 + $0x14] sm:$0xf]
        %v210 = vld [vmem:[%s200 + $0x18] sm:$0xf]
        %v211 = vld [vmem:[%s200 + $0x1c] sm:$0xf]
        %v212 = vld [vmem:[%s200 + $0x20] sm:$0xf]
        %v213 = vld [vmem:[%s200 + $0x24] sm:$0xf]
        %v214 = vld [vmem:[%s200 + $0x28] sm:$0xf]
        %v215 = vld [vmem:[%s200 + $0x2c] sm:$0xf]
        %v216 = vld [vmem:[%s200 + $0x30] sm:$0xf]
        %v217 = vld [vmem:[%s200 + $0x34] sm:$0xf]
        %v218 = vld [vmem:[%s200 + $0x38] sm:$0xf]
        %v219 = vld [vmem:[%s200 + $0x3c] sm:$0xf]
        %v220 = vld [vmem:[%s200 + $0x40] sm:$0xf]
        %v221 = vld [vmem:[%s200 + $0x44] sm:$0xf]
        %v222 = vld [vmem:[%s200 + $0x48] sm:$0xf]
        %v223 = vld [vmem:[%s200 + $0x4c] sm:$0xf]
        %v224 = vld [vmem:[%s200 + $0x50] sm:$0xf]
        %v225 = vld [vmem:[%s200 + $0x54] sm:$0xf]
        %v226 = vld [vmem:[%s200 + $0x58] sm:$0xf]
        %v227 = vld [vmem:[%s200 + $0x5c] sm:$0xf]
        %v228 = vld [vmem:[%s200 + $0x60] sm:$0xf]
        %v229 = vld [vmem:[%s200 + $0x64] sm:$0xf]
        %v230 = vld [vmem:[%s200 + $0x68] sm:$0xf]
        %v231 = vld [vmem:[%s200 + $0x6c] sm:$0xf]
        %v232 = vld [vmem:[%s200 + $0x70] sm:$0xf]
        %v233 = vld [vmem:[%s200 + $0x74] sm:$0xf]
        %v234 = vld [vmem:[%s200 + $0x78] sm:$0xf]
        %v235 = vld [vmem:[%s200 + $0x7c] sm:$0xf]
        %v236 = vld [vmem:[%s200 + $0x80] sm:$0xf]
        %v237 = vld [vmem:[%s200 + $0x84] sm:$0xf]
        %v238 = vld [vmem:[%s200 + $0x88] sm:$0xf]
        %v239 = vld [vmem:[%s200 + $0x8c] sm:$0xf]
        %v240 = vld [vmem:[%s200 + $0x90] sm:$0xf]
        %v241 = vld [vmem:[%s200 + $0x94] sm:$0xf]
        %v242 = vld [vmem:[%s200 + $0x98] sm:$0xf]
        %v243 = vld [vmem:[%s200 + $0x9c] sm:$0xf]
        %v244 = vld [vmem:[%s200 + $0xa0] sm:$0xf]
        %v245 = vld [vmem:[%s200 + $0xa4] sm:$0xf]
        %v246 = vld [vmem:[%s200 + $0xa8] sm:$0xf]
        %v247 = vld [vmem:[%s200 + $0xac] sm:$0xf]
        %v248 = vld [vmem:[%s200 + $0xb0] sm:$0xf]
        %v249 = vld [vmem:[%s200 + $0xb4] sm:$0xf]
        %v250 = vld [vmem:[%s200 + $0xb8] sm:$0xf]
        %v251 = vld [vmem:[%s200 + $0xbc] sm:$0xf]
        %v252 = vld [vmem:[%s200 + $0xc0] sm:$0xf]
        %v253 = vld [vmem:[%s200 + $0xc4] sm:$0xf]
        %v254 = vld [vmem:[%s200 + $0xc8] sm:$0xf]
        %v255 = vld [vmem:[%s200 + $0xcc] sm:$0xf]
        %v256 = vld [vmem:[%s200 + $0xd0] sm:$0xf]
        %v257 = vld [vmem:[%s200 + $0xd4] sm:$0xf]
        %v258 = vld [vmem:[%s200 + $0xd8] sm:$0xf]
        %v259 = vld [vmem:[%s200 + $0xdc] sm:$0xf]
        %v260 = vld [vmem:[%s200 + $0xe0] sm:$0xf]
        %v261 = vld [vmem:[%s200 + $0xe4] sm:$0xf]
        %v262 = vld [vmem:[%s200 + $0xe8] sm:$0xf]
        %v263 = vld [vmem:[%s200 + $0xec] sm:$0xf]
        %v264 = vld [vmem:[%s200 + $0xf0] sm:$0xf]
        %v265 = vld [vmem:[%s200 + $0xf4] sm:$0xf]
        %v266 = vld [vmem:[%s200 + $0xf8] sm:$0xf]
        %v267 = vld [vmem:[%s200 + $0xfc] sm:$0xf]
        %v268 = vld [vmem:[%s200 + $0x100] sm:$0xf]
        %v269 = vld [vmem:[%s200 + $0x104] sm:$0xf]
        %v270 = vld [vmem:[%s200 + $0x108] sm:$0xf]
        %v271 = vld [vmem:[%s200 + $0x10c] sm:$0xf]
        %v272 = vld [vmem:[%s200 + $0x110] sm:$0xf]
        %v273 = vld [vmem:[%s200 + $0x114] sm:$0xf]
        %v274 = vld [vmem:[%s200 + $0x118] sm:$0xf]
        %v275 = vld [vmem:[%s200 + $0x11c] sm:$0xf]
        %v276 = vld [vmem:[%s200 + $0x120] sm:$0xf]
        %v277 = vld [vmem:[%s200 + $0x124] sm:$0xf]
        %v278 = vld [vmem:[%s200 + $0x128] sm:$0xf]
        %v279 = vld [vmem:[%s200 + $0x12c] sm:$0xf]
        %v280 = vld [vmem:[%s200 + $0x130] sm:$0xf]
        %v281 = vld [vmem:[%s200 + $0x134] sm:$0xf]
        %v282 = vld [vmem:[%s200 + $0x138] sm:$0xf]
        %v283 = vld [vmem:[%s200 + $0x13c] sm:$0xf]
        %v284 = vld [vmem:[%s200 + $0x140] sm:$0xf]
        %v285 = vld [vmem:[%s200 + $0x144] sm:$0xf]
        %v286 = vld [vmem:[%s200 + $0x148] sm:$0xf]
        %v287 = vld [vmem:[%s200 + $0x14c] sm:$0xf]
        %v288 = vld [vmem:[%s200 + $0x150] sm:$0xf]
        %v289 = vld [vmem:[%s200 + $0x154] sm:$0xf]
        %v290 = vld [vmem:[%s200 + $0x158] sm:$0xf]
        %v291 = vld [vmem:[%s200 + $0x15c] sm:$0xf]
        %v292 = vld [vmem:[%s200 + $0x160] sm:$0xf]
        %v293 = vld [vmem:[%s200 + $0x164] sm:$0xf]
        %v294 = vld [vmem:[%s200 + $0x168] sm:$0xf]
        %v295 = vld [vmem:[%s200 + $0x16c] sm:$0xf]
        %v296 = vld [vmem:[%s200 + $0x170] sm:$0xf]
        %v297 = vld [vmem:[%s200 + $0x174] sm:$0xf]
        %v298 = vld [vmem:[%s200 + $0x178] sm:$0xf]
        %v299 = vld [vmem:[%s200 + $0x17c] sm:$0xf]
        %v300 = vld [vmem:[%s200 + $0x180] sm:$0xf]
        %v301 = vld [vmem:[%s200 + $0x184] sm:$0xf]
        %v302 = vld [vmem:[%s200 + $0x188] sm:$0xf]
        %v303 = vld [vmem:[%s200 + $0x18c] sm:$0xf]
        %v304 = vld [vmem:[%s200 + $0x190] sm:$0xf]
        %v305 = vld [vmem:[%s200 + $0x194] sm:$0xf]
        %v306 = vld [vmem:[%s200 + $0x198] sm:$0xf]
        %v307 = vld [vmem:[%s200 + $0x19c] sm:$0xf]
        %v308 = vld [vmem:[%s200 + $0x1a0] sm:$0xf]
        %v309 = vld [vmem:[%s200 + $0x1a4] sm:$0xf]
        %v310 = vld [vmem:[%s200 + $0x1a8] sm:$0xf]
        %v311 = vld [vmem:[%s200 + $0x1ac] sm:$0xf]
        %v312 = vld [vmem:[%s200 + $0x1b0] sm:$0xf]
        %v313 = vld [vmem:[%s200 + $0x1b4] sm:$0xf]
        %v314 = vld [vmem:[%s200 + $0x1b8] sm:$0xf]
        %v315 = vld [vmem:[%s200 + $0x1bc] sm:$0xf]
        %v316 = vld [vmem:[%s200 + $0x1c0] sm:$0xf]
        %v317 = vld [vmem:[%s200 + $0x1c4] sm:$0xf]
        %v318 = vld [vmem:[%s200 + $0x1c8] sm:$0xf]
        %v319 = vld [vmem:[%s200 + $0x1cc] sm:$0xf]
        %v320 = vld [vmem:[%s200 + $0x1d0] sm:$0xf]
        %v321 = vld [vmem:[%s200 + $0x1d4] sm:$0xf]
        %v322 = vld [vmem:[%s200 + $0x1d8] sm:$0xf]
        %v323 = vld [vmem:[%s200 + $0x1dc] sm:$0xf]
        %v324 = vld [vmem:[%s200 + $0x1e0] sm:$0xf]
        %v325 = vld [vmem:[%s200 + $0x1e4] sm:$0xf]
        %v326 = vld [vmem:[%s200 + $0x1e8] sm:$0xf]
        %v327 = vld [vmem:[%s200 + $0x1ec] sm:$0xf]
        %v328 = vld [vmem:[%s200 + $0x1f0] sm:$0xf]
        %v329 = vld [vmem:[%s200 + $0x1f4] sm:$0xf]
        %v330 = vld [vmem:[%s200 + $0x1f8] sm:$0xf]
        %v331 = vld [vmem:[%s200 + $0x1fc] sm:$0xf]
        %v332 = vld [vmem:[%s1] sm:$0xf]
        %v333 = vld [vmem:[%s1 + $0x4] sm:$0xf]
        %v334 = vld [vmem:[%s1 + $0x8] sm:$0xf]
        %v335 = vld [vmem:[%s1 + $0xc] sm:$0x3]
        %v336 = vld [vmem:[%s2] sm:$0x1]
        %v338 = vlaneseq
        %v339 = vshrl.u32 %v338, 7
        %v340 = vsub.s32 0, %v339
        %v341 = vrot.slane %v336, %v340
        %v471 = vunpack.c.l.b16 %v204
        %v472 = vunpack.c.l.b16 %v205
        %v473 = vunpack.c.l.b16 %v206
        %v474 = vunpack.c.l.b16 %v207
        %v475 = vunpack.c.l.b16 %v208
        %v476 = vunpack.c.l.b16 %v209
        %v477 = vunpack.c.l.b16 %v210
        %v478 = vunpack.c.l.b16 %v211
        %v479 = vunpack.c.l.b16 %v212
        %v480 = vunpack.c.l.b16 %v213
        %v481 = vunpack.c.l.b16 %v214
        %v482 = vunpack.c.l.b16 %v215
        %v483 = vunpack.c.l.b16 %v216
        %v484 = vunpack.c.l.b16 %v217
        %v485 = vunpack.c.l.b16 %v218
        %v486 = vunpack.c.l.b16 %v219
        %v487 = vunpack.c.l.b16 %v220
        %v488 = vunpack.c.l.b16 %v221
        %v489 = vunpack.c.l.b16 %v222
        %v490 = vunpack.c.l.b16 %v223
        %v491 = vunpack.c.l.b16 %v224
        %v492 = vunpack.c.l.b16 %v225
        %v493 = vunpack.c.l.b16 %v226
        %v494 = vunpack.c.l.b16 %v227
        %v495 = vunpack.c.l.b16 %v228
        %v496 = vunpack.c.l.b16 %v229
        %v497 = vunpack.c.l.b16 %v230
        %v498 = vunpack.c.l.b16 %v231
        %v499 = vunpack.c.l.b16 %v232
        %v500 = vunpack.c.l.b16 %v233
        %v501 = vunpack.c.l.b16 %v234
        %v502 = vunpack.c.l.b16 %v235
        %v503 = vunpack.c.l.b16 %v236
        %v504 = vunpack.c.l.b16 %v237
        %v505 = vunpack.c.l.b16 %v238
        %v506 = vunpack.c.l.b16 %v239
        %v507 = vunpack.c.l.b16 %v240
        %v508 = vunpack.c.l.b16 %v241
        %v509 = vunpack.c.l.b16 %v242
        %v510 = vunpack.c.l.b16 %v243
        %v511 = vunpack.c.l.b16 %v244
        %v512 = vunpack.c.l.b16 %v245
        %v513 = vunpack.c.l.b16 %v246
        %v514 = vunpack.c.l.b16 %v247
        %v515 = vunpack.c.l.b16 %v248
        %v516 = vunpack.c.l.b16 %v249
        %v517 = vunpack.c.l.b16 %v250
        %v518 = vunpack.c.l.b16 %v251
        %v519 = vunpack.c.l.b16 %v252
        %v520 = vunpack.c.l.b16 %v253
        %v521 = vunpack.c.l.b16 %v254
        %v522 = vunpack.c.l.b16 %v255
        %v523 = vunpack.c.l.b16 %v256
        %v524 = vunpack.c.l.b16 %v257
        %v525 = vunpack.c.l.b16 %v258
        %v526 = vunpack.c.l.b16 %v259
        %v527 = vunpack.c.l.b16 %v260
        %v528 = vunpack.c.l.b16 %v261
        %v529 = vunpack.c.l.b16 %v262
        %v530 = vunpack.c.l.b16 %v263
        %v531 = vunpack.c.l.b16 %v264
        %v532 = vunpack.c.l.b16 %v265
        %v533 = vunpack.c.l.b16 %v266
        %v534 = vunpack.c.l.b16 %v267
        %v535 = vunpack.c.l.b16 %v268
        %v536 = vunpack.c.l.b16 %v269
        %v537 = vunpack.c.l.b16 %v270
        %v538 = vunpack.c.l.b16 %v271
        %v539 = vunpack.c.l.b16 %v272
        %v540 = vunpack.c.l.b16 %v273
        %v541 = vunpack.c.l.b16 %v274
        %v542 = vunpack.c.l.b16 %v275
        %v543 = vunpack.c.l.b16 %v276
        %v544 = vunpack.c.l.b16 %v277
        %v545 = vunpack.c.l.b16 %v278
        %v546 = vunpack.c.l.b16 %v279
        %v547 = vunpack.c.l.b16 %v280
        %v548 = vunpack.c.l.b16 %v281
        %v549 = vunpack.c.l.b16 %v282
        %v550 = vunpack.c.l.b16 %v283
        %v551 = vunpack.c.l.b16 %v284
        %v552 = vunpack.c.l.b16 %v285
        %v553 = vunpack.c.l.b16 %v286
        %v554 = vunpack.c.l.b16 %v287
        %v555 = vunpack.c.l.b16 %v288
        %v556 = vunpack.c.l.b16 %v289
        %v557 = vunpack.c.l.b16 %v290
        %v558 = vunpack.c.l.b16 %v291
        %v559 = vunpack.c.l.b16 %v292
        %v560 = vunpack.c.l.b16 %v293
        %v561 = vunpack.c.l.b16 %v294
        %v562 = vunpack.c.l.b16 %v295
        %v563 = vunpack.c.l.b16 %v296
        %v564 = vunpack.c.l.b16 %v297
        %v565 = vunpack.c.l.b16 %v298
        %v566 = vunpack.c.l.b16 %v299
        %v567 = vunpack.c.l.b16 %v300
        %v568 = vunpack.c.l.b16 %v301
        %v569 = vunpack.c.l.b16 %v302
        %v570 = vunpack.c.l.b16 %v303
        %v571 = vunpack.c.l.b16 %v304
        %v572 = vunpack.c.l.b16 %v305
        %v573 = vunpack.c.l.b16 %v306
        %v574 = vunpack.c.l.b16 %v307
        %v575 = vunpack.c.l.b16 %v308
        %v576 = vunpack.c.l.b16 %v309
        %v577 = vunpack.c.l.b16 %v310
        %v578 = vunpack.c.l.b16 %v311
        %v579 = vunpack.c.l.b16 %v312
        %v580 = vunpack.c.l.b16 %v313
        %v581 = vunpack.c.l.b16 %v314
        %v582 = vunpack.c.l.b16 %v315
        %v583 = vunpack.c.l.b16 %v316
        %v584 = vunpack.c.l.b16 %v317
        %v585 = vunpack.c.l.b16 %v318
        %v586 = vunpack.c.l.b16 %v319
        %v587 = vunpack.c.l.b16 %v320
        %v588 = vunpack.c.l.b16 %v321
        %v589 = vunpack.c.l.b16 %v322
        %v590 = vunpack.c.l.b16 %v323
        %v591 = vunpack.c.l.b16 %v324
        %v592 = vunpack.c.l.b16 %v325
        %v593 = vunpack.c.l.b16 %v326
        %v594 = vunpack.c.l.b16 %v327
        %v595 = vunpack.c.l.b16 %v328
        %v596 = vunpack.c.l.b16 %v329
        %v597 = vunpack.c.l.b16 %v330
        %v598 = vunpack.c.l.b16 %v331
        %v599 = vpack.c.b16 %v472, %v471
        %v600 = vpack.c.b16 %v474, %v473
        %v601 = vpack.c.b16 %v476, %v475
        %v602 = vpack.c.b16 %v478, %v477
        %v603 = vpack.c.b16 %v480, %v479
        %v604 = vpack.c.b16 %v482, %v481
        %v605 = vpack.c.b16 %v484, %v483
        %v606 = vpack.c.b16 %v486, %v485
        %v607 = vpack.c.b16 %v488, %v487
        %v608 = vpack.c.b16 %v490, %v489
        %v609 = vpack.c.b16 %v492, %v491
        %v610 = vpack.c.b16 %v494, %v493
        %v611 = vpack.c.b16 %v496, %v495
        %v612 = vpack.c.b16 %v498, %v497
        %v613 = vpack.c.b16 %v500, %v499
        %v614 = vpack.c.b16 %v502, %v501
        %v615 = vpack.c.b16 %v504, %v503
        %v616 = vpack.c.b16 %v506, %v505
        %v617 = vpack.c.b16 %v508, %v507
        %v618 = vpack.c.b16 %v510, %v509
        %v619 = vpack.c.b16 %v512, %v511
        %v620 = vpack.c.b16 %v514, %v513
        %v621 = vpack.c.b16 %v516, %v515
        %v622 = vpack.c.b16 %v518, %v517
        %v623 = vpack.c.b16 %v520, %v519
        %v624 = vpack.c.b16 %v522, %v521
        %v625 = vpack.c.b16 %v524, %v523
        %v626 = vpack.c.b16 %v526, %v525
        %v627 = vpack.c.b16 %v528, %v527
        %v628 = vpack.c.b16 %v530, %v529
        %v629 = vpack.c.b16 %v532, %v531
        %v630 = vpack.c.b16 %v534, %v533
        %v631 = vpack.c.b16 %v536, %v535
        %v632 = vpack.c.b16 %v538, %v537
        %v633 = vpack.c.b16 %v540, %v539
        %v634 = vpack.c.b16 %v542, %v541
        %v635 = vpack.c.b16 %v544, %v543
        %v636 = vpack.c.b16 %v546, %v545
        %v637 = vpack.c.b16 %v548, %v547
        %v638 = vpack.c.b16 %v550, %v549
        %v639 = vpack.c.b16 %v552, %v551
        %v640 = vpack.c.b16 %v554, %v553
        %v641 = vpack.c.b16 %v556, %v555
        %v642 = vpack.c.b16 %v558, %v557
        %v643 = vpack.c.b16 %v560, %v559
        %v644 = vpack.c.b16 %v562, %v561
        %v645 = vpack.c.b16 %v564, %v563
        %v646 = vpack.c.b16 %v566, %v565
        %v647 = vpack.c.b16 %v568, %v567
        %v648 = vpack.c.b16 %v570, %v569
        %v649 = vpack.c.b16 %v572, %v571
        %v650 = vpack.c.b16 %v574, %v573
        %v651 = vpack.c.b16 %v576, %v575
        %v652 = vpack.c.b16 %v578, %v577
        %v653 = vpack.c.b16 %v580, %v579
        %v654 = vpack.c.b16 %v582, %v581
        %v655 = vpack.c.b16 %v584, %v583
        %v656 = vpack.c.b16 %v586, %v585
        %v657 = vpack.c.b16 %v588, %v587
        %v658 = vpack.c.b16 %v590, %v589
        %v659 = vpack.c.b16 %v592, %v591
        %v660 = vpack.c.b16 %v594, %v593
        %v661 = vpack.c.b16 %v596, %v595
        %v662 = vpack.c.b16 %v598, %v597
        %v667 = vunpack.c.l.b16 %v332
        %v668 = vunpack.c.l.b16 %v333
        %v669 = vunpack.c.l.b16 %v334
        %v670 = vunpack.c.l.b16 %v335
        %v671 = vpack.c.b16 %v668, %v667
        %v672 = vpack.c.b16 %v670, %v669
        %vm674 = vcmask 220160
        %v676 = vsel %vm674, %v599, 0
        %v679 = vsel %vm674, %v600, 0
        %v682 = vsel %vm674, %v601, 0
        %v685 = vsel %vm674, %v602, 0
        %v688 = vsel %vm674, %v603, 0
        %v691 = vsel %vm674, %v604, 0
        %v694 = vsel %vm674, %v605, 0
        %v697 = vsel %vm674, %v606, 0
        %v700 = vsel %vm674, %v607, 0
        %v703 = vsel %vm674, %v608, 0
        %v706 = vsel %vm674, %v609, 0
        %v709 = vsel %vm674, %v610, 0
        %v712 = vsel %vm674, %v611, 0
        %v715 = vsel %vm674, %v612, 0
        %v718 = vsel %vm674, %v613, 0
        %v721 = vsel %vm674, %v614, 0
        %v724 = vsel %vm674, %v615, 0
        %v727 = vsel %vm674, %v616, 0
        %v730 = vsel %vm674, %v617, 0
        %v733 = vsel %vm674, %v618, 0
        %v736 = vsel %vm674, %v619, 0
        %v739 = vsel %vm674, %v620, 0
        %v742 = vsel %vm674, %v621, 0
        %v745 = vsel %vm674, %v622, 0
        %v748 = vsel %vm674, %v623, 0
        %v751 = vsel %vm674, %v624, 0
        %v754 = vsel %vm674, %v625, 0
        %v757 = vsel %vm674, %v626, 0
        %v760 = vsel %vm674, %v627, 0
        %v763 = vsel %vm674, %v628, 0
        %v766 = vsel %vm674, %v629, 0
        %v769 = vsel %vm674, %v630, 0
        %v772 = vsel %vm674, %v631, 0
        %v775 = vsel %vm674, %v632, 0
        %v778 = vsel %vm674, %v633, 0
        %v781 = vsel %vm674, %v634, 0
        %v784 = vsel %vm674, %v635, 0
        %v787 = vsel %vm674, %v636, 0
        %v790 = vsel %vm674, %v637, 0
        %v793 = vsel %vm674, %v638, 0
        %v796 = vsel %vm674, %v639, 0
        %v799 = vsel %vm674, %v640, 0
        %v802 = vsel %vm674, %v641, 0
        %v805 = vsel %vm674, %v642, 0
        %v808 = vsel %vm674, %v643, 0
        %v811 = vsel %vm674, %v644, 0
        %v814 = vsel %vm674, %v645, 0
        %v817 = vsel %vm674, %v646, 0
        %v820 = vsel %vm674, %v647, 0
        %v823 = vsel %vm674, %v648, 0
        %v826 = vsel %vm674, %v649, 0
        %v829 = vsel %vm674, %v650, 0
        %v832 = vsel %vm674, %v651, 0
        %v835 = vsel %vm674, %v652, 0
        %v838 = vsel %vm674, %v653, 0
        %v841 = vsel %vm674, %v654, 0
        %v844 = vsel %vm674, %v655, 0
        %v847 = vsel %vm674, %v656, 0
        %v850 = vsel %vm674, %v657, 0
        %v853 = vsel %vm674, %v658, 0
        %v856 = vsel %vm674, %v659, 0
        %v859 = vsel %vm674, %v660, 0
        %v862 = vsel %vm674, %v661, 0
        %v865 = vsel %vm674, %v662, 0
        %vm867 = vcmask 1044480
        %vm868 = vcmask 1045504
        %v869 = vsel %vm867, 4294967295, 65535
        %v870 = vsel %vm868, %v869, 0
        %v872 = vand.u32 %v672, %v870
        %874 = vmatprep.subr.bf16.mxu0 0
        %875 = vmatpush1.bf16.msra.mxu0 %v671
        %876 = vmatprep.subr.bf16.mxu0 0
        %877 = vmatpush1.bf16.msra.mxu0 %v872
        %878 = vmatprep.subr.bf16.mxu0 0
        %879 = vmatpush1.bf16.msra.mxu0 0
        %880 = vmatprep.subr.bf16.mxu0 0
        %881 = vmatpush1.bf16.msra.mxu0 0
        %882 = vmatprep.subr.bf16.mxu0 0
        %883 = vmatpush1.bf16.msra.mxu0 0
        %884 = vmatprep.subr.bf16.mxu0 0
        %885 = vmatpush1.bf16.msra.mxu0 0
        %886 = vmatprep.subr.bf16.mxu0 0
        %887 = vmatpush1.bf16.msra.mxu0 0
        %888 = vmatprep.subr.bf16.mxu0 0
        %889 = vmatpush1.bf16.msra.mxu0 0
        %890 = vmatprep.subr.bf16.mxu0 0
        %891 = vmatpush1.bf16.msra.mxu0 0
        %892 = vmatprep.subr.bf16.mxu0 0
        %893 = vmatpush1.bf16.msra.mxu0 0
        %894 = vmatprep.subr.bf16.mxu0 0
        %895 = vmatpush1.bf16.msra.mxu0 0
        %896 = vmatprep.subr.bf16.mxu0 0
        %897 = vmatpush1.bf16.msra.mxu0 0
        %898 = vmatprep.subr.bf16.mxu0 0
        %899 = vmatpush1.bf16.msra.mxu0 0
        %900 = vmatprep.subr.bf16.mxu0 0
        %901 = vmatpush1.bf16.msra.mxu0 0
        %902 = vmatprep.subr.bf16.mxu0 0
        %903 = vmatpush1.bf16.msra.mxu0 0
        %904 = vmatprep.subr.bf16.mxu0 0
        %905 = vmatpush1.bf16.msra.mxu0 0
        %906 = vmatprep.mubr.bf16.mxu0 0
        %907 = vmatmul.mubr.bf16.gmra.mrb[0].mxu0 %v676
        %v908 = vpop.f32.mrb[0].mxu0
        %v909 = vadd.f32 %v341, %v908
        %v910 = vpop.f32.mrb[0].mxu0
        %v911 = vpop.f32.mrb[0].mxu0
        %v912 = vadd.f32 %v341, %v911
        %v913 = vpop.f32.mrb[0].mxu0
        %914 = vmatprep.mubr.bf16.mxu0 0
        %915 = vmatmul.mubr.bf16.gmra.mrb[0].mxu0 %v679
        %v916 = vpop.f32.mrb[0].mxu0
        %v917 = vadd.f32 %v341, %v916
        %v918 = vpop.f32.mrb[0].mxu0
        %v919 = vpop.f32.mrb[0].mxu0
        %v920 = vadd.f32 %v341, %v919
        %v921 = vpop.f32.mrb[0].mxu0
        %922 = vmatprep.mubr.bf16.mxu0 0
        %923 = vmatmul.mubr.bf16.gmra.mrb[0].mxu0 %v682
        %v924 = vpop.f32.mrb[0].mxu0
        %v925 = vadd.f32 %v341, %v924
        %v926 = vpop.f32.mrb[0].mxu0
        %v927 = vpop.f32.mrb[0].mxu0
        %v928 = vadd.f32 %v341, %v927
        %v929 = vpop.f32.mrb[0].mxu0
        %930 = vmatprep.mubr.bf16.mxu0 0
        %931 = vmatmul.mubr.bf16.gmra.mrb[0].mxu0 %v685
        %v932 = vpop.f32.mrb[0].mxu0
        %v933 = vadd.f32 %v341, %v932
        %v934 = vpop.f32.mrb[0].mxu0
        %v935 = vpop.f32.mrb[0].mxu0
        %v936 = vadd.f32 %v341, %v935
        %v937 = vpop.f32.mrb[0].mxu0
        %938 = vmatprep.mubr.bf16.mxu0 0
        %939 = vmatmul.mubr.bf16.gmra.mrb[0].mxu0 %v688
        %v940 = vpop.f32.mrb[0].mxu0
        %v941 = vadd.f32 %v341, %v940
        %v942 = vpop.f32.mrb[0].mxu0
        %v943 = vpop.f32.mrb[0].mxu0
        %v944 = vadd.f32 %v341, %v943
        %v945 = vpop.f32.mrb[0].mxu0
        %946 = vmatprep.mubr.bf16.mxu0 0
        %947 = vmatmul.mubr.bf16.gmra.mrb[0].mxu0 %v691
        %v948 = vpop.f32.mrb[0].mxu0
        %v949 = vadd.f32 %v341, %v948
        %v950 = vpop.f32.mrb[0].mxu0
        %v951 = vpop.f32.mrb[0].mxu0
        %v952 = vadd.f32 %v341, %v951
        %v953 = vpop.f32.mrb[0].mxu0
        %954 = vmatprep.mubr.bf16.mxu0 0
        %955 = vmatmul.mubr.bf16.gmra.mrb[0].mxu0 %v694
        %v956 = vpop.f32.mrb[0].mxu0
        %v957 = vadd.f32 %v341, %v956
        %v958 = vpop.f32.mrb[0].mxu0
        %v959 = vpop.f32.mrb[0].mxu0
        %v960 = vadd.f32 %v341, %v959
        %v961 = vpop.f32.mrb[0].mxu0
        %962 = vmatprep.mubr.bf16.mxu0 0
        %963 = vmatmul.mubr.bf16.gmra.mrb[0].mxu0 %v697
        %v964 = vpop.f32.mrb[0].mxu0
        %v965 = vadd.f32 %v341, %v964
        %v966 = vpop.f32.mrb[0].mxu0
        %v967 = vpop.f32.mrb[0].mxu0
        %v968 = vadd.f32 %v341, %v967
        %v969 = vpop.f32.mrb[0].mxu0
        %970 = vmatprep.mubr.bf16.mxu0 0
        %971 = vmatmul.mubr.bf16.gmra.mrb[0].mxu0 %v700
        %v972 = vpop.f32.mrb[0].mxu0
        %v973 = vadd.f32 %v341, %v972
        %v974 = vpop.f32.mrb[0].mxu0
        %v975 = vpop.f32.mrb[0].mxu0
        %v976 = vadd.f32 %v341, %v975
        %v977 = vpop.f32.mrb[0].mxu0
        %978 = vmatprep.mubr.bf16.mxu0 0
        %979 = vmatmul.mubr.bf16.gmra.mrb[0].mxu0 %v703
        %v980 = vpop.f32.mrb[0].mxu0
        %v981 = vadd.f32 %v341, %v980
        %v982 = vpop.f32.mrb[0].mxu0
        %v983 = vpop.f32.mrb[0].mxu0
        %v984 = vadd.f32 %v341, %v983
        %v985 = vpop.f32.mrb[0].mxu0
        %986 = vmatprep.mubr.bf16.mxu0 0
        %987 = vmatmul.mubr.bf16.gmra.mrb[0].mxu0 %v706
        %v988 = vpop.f32.mrb[0].mxu0
        %v989 = vadd.f32 %v341, %v988
        %v990 = vpop.f32.mrb[0].mxu0
        %v991 = vpop.f32.mrb[0].mxu0
        %v992 = vadd.f32 %v341, %v991
        %v993 = vpop.f32.mrb[0].mxu0
        %994 = vmatprep.mubr.bf16.mxu0 0
        %995 = vmatmul.mubr.bf16.gmra.mrb[0].mxu0 %v709
        %v996 = vpop.f32.mrb[0].mxu0
        %v997 = vadd.f32 %v341, %v996
        %v998 = vpop.f32.mrb[0].mxu0
        %v999 = vpop.f32.mrb[0].mxu0
        %v1000 = vadd.f32 %v341, %v999
        %v1001 = vpop.f32.mrb[0].mxu0
        %1002 = vmatprep.mubr.bf16.mxu0 0
        %1003 = vmatmul.mubr.bf16.gmra.mrb[0].mxu0 %v712
        %v1004 = vpop.f32.mrb[0].mxu0
        %v1005 = vadd.f32 %v341, %v1004
        %v1006 = vpop.f32.mrb[0].mxu0
        %v1007 = vpop.f32.mrb[0].mxu0
        %v1008 = vadd.f32 %v341, %v1007
        %v1009 = vpop.f32.mrb[0].mxu0
        %1010 = vmatprep.mubr.bf16.mxu0 0
        %1011 = vmatmul.mubr.bf16.gmra.mrb[0].mxu0 %v715
        %v1012 = vpop.f32.mrb[0].mxu0
        %v1013 = vadd.f32 %v341, %v1012
        %v1014 = vpop.f32.mrb[0].mxu0
        %v1015 = vpop.f32.mrb[0].mxu0
        %v1016 = vadd.f32 %v341, %v1015
        %v1017 = vpop.f32.mrb[0].mxu0
        %1018 = vmatprep.mubr.bf16.mxu0 0
        %1019 = vmatmul.mubr.bf16.gmra.mrb[0].mxu0 %v718
        %v1020 = vpop.f32.mrb[0].mxu0
        %v1021 = vadd.f32 %v341, %v1020
        %v1022 = vpop.f32.mrb[0].mxu0
        %v1023 = vpop.f32.mrb[0].mxu0
        %v1024 = vadd.f32 %v341, %v1023
        %v1025 = vpop.f32.mrb[0].mxu0
        %1026 = vmatprep.mubr.bf16.mxu0 0
        %1027 = vmatmul.mubr.bf16.gmra.mrb[0].mxu0 %v721
        %v1028 = vpop.f32.mrb[0].mxu0
        %v1029 = vadd.f32 %v341, %v1028
        %v1030 = vpop.f32.mrb[0].mxu0
        %v1031 = vpop.f32.mrb[0].mxu0
        %v1032 = vadd.f32 %v341, %v1031
        %v1033 = vpop.f32.mrb[0].mxu0
        %1034 = vmatprep.mubr.bf16.mxu0 0
        %1035 = vmatmul.mubr.bf16.gmra.mrb[0].mxu0 %v724
        %v1036 = vpop.f32.mrb[0].mxu0
        %v1037 = vadd.f32 %v341, %v1036
        %v1038 = vpop.f32.mrb[0].mxu0
        %v1039 = vpop.f32.mrb[0].mxu0
        %v1040 = vadd.f32 %v341, %v1039
        %v1041 = vpop.f32.mrb[0].mxu0
        %1042 = vmatprep.mubr.bf16.mxu0 0
        %1043 = vmatmul.mubr.bf16.gmra.mrb[0].mxu0 %v727
        %v1044 = vpop.f32.mrb[0].mxu0
        %v1045 = vadd.f32 %v341, %v1044
        %v1046 = vpop.f32.mrb[0].mxu0
        %v1047 = vpop.f32.mrb[0].mxu0
        %v1048 = vadd.f32 %v341, %v1047
        %v1049 = vpop.f32.mrb[0].mxu0
        %1050 = vmatprep.mubr.bf16.mxu0 0
        %1051 = vmatmul.mubr.bf16.gmra.mrb[0].mxu0 %v730
        %v1052 = vpop.f32.mrb[0].mxu0
        %v1053 = vadd.f32 %v341, %v1052
        %v1054 = vpop.f32.mrb[0].mxu0
        %v1055 = vpop.f32.mrb[0].mxu0
        %v1056 = vadd.f32 %v341, %v1055
        %v1057 = vpop.f32.mrb[0].mxu0
        %1058 = vmatprep.mubr.bf16.mxu0 0
        %1059 = vmatmul.mubr.bf16.gmra.mrb[0].mxu0 %v733
        %v1060 = vpop.f32.mrb[0].mxu0
        %v1061 = vadd.f32 %v341, %v1060
        %v1062 = vpop.f32.mrb[0].mxu0
        %v1063 = vpop.f32.mrb[0].mxu0
        %v1064 = vadd.f32 %v341, %v1063
        %v1065 = vpop.f32.mrb[0].mxu0
        %1066 = vmatprep.mubr.bf16.mxu0 0
        %1067 = vmatmul.mubr.bf16.gmra.mrb[0].mxu0 %v736
        %v1068 = vpop.f32.mrb[0].mxu0
        %v1069 = vadd.f32 %v341, %v1068
        %v1070 = vpop.f32.mrb[0].mxu0
        %v1071 = vpop.f32.mrb[0].mxu0
        %v1072 = vadd.f32 %v341, %v1071
        %v1073 = vpop.f32.mrb[0].mxu0
        %1074 = vmatprep.mubr.bf16.mxu0 0
        %1075 = vmatmul.mubr.bf16.gmra.mrb[0].mxu0 %v739
        %v1076 = vpop.f32.mrb[0].mxu0
        %v1077 = vadd.f32 %v341, %v1076
        %v1078 = vpop.f32.mrb[0].mxu0
        %v1079 = vpop.f32.mrb[0].mxu0
        %v1080 = vadd.f32 %v341, %v1079
        %v1081 = vpop.f32.mrb[0].mxu0
        %1082 = vmatprep.mubr.bf16.mxu0 0
        %1083 = vmatmul.mubr.bf16.gmra.mrb[0].mxu0 %v742
        %v1084 = vpop.f32.mrb[0].mxu0
        %v1085 = vadd.f32 %v341, %v1084
        %v1086 = vpop.f32.mrb[0].mxu0
        %v1087 = vpop.f32.mrb[0].mxu0
        %v1088 = vadd.f32 %v341, %v1087
        %v1089 = vpop.f32.mrb[0].mxu0
        %1090 = vmatprep.mubr.bf16.mxu0 0
        %1091 = vmatmul.mubr.bf16.gmra.mrb[0].mxu0 %v745
        %v1092 = vpop.f32.mrb[0].mxu0
        %v1093 = vadd.f32 %v341, %v1092
        %v1094 = vpop.f32.mrb[0].mxu0
        %v1095 = vpop.f32.mrb[0].mxu0
        %v1096 = vadd.f32 %v341, %v1095
        %v1097 = vpop.f32.mrb[0].mxu0
        %1098 = vmatprep.mubr.bf16.mxu0 0
        %1099 = vmatmul.mubr.bf16.gmra.mrb[0].mxu0 %v748
        %v1100 = vpop.f32.mrb[0].mxu0
        %v1101 = vadd.f32 %v341, %v1100
        %v1102 = vpop.f32.mrb[0].mxu0
        %v1103 = vpop.f32.mrb[0].mxu0
        %v1104 = vadd.f32 %v341, %v1103
        %v1105 = vpop.f32.mrb[0].mxu0
        %1106 = vmatprep.mubr.bf16.mxu0 0
        %1107 = vmatmul.mubr.bf16.gmra.mrb[0].mxu0 %v751
        %v1108 = vpop.f32.mrb[0].mxu0
        %v1109 = vadd.f32 %v341, %v1108
        %v1110 = vpop.f32.mrb[0].mxu0
        %v1111 = vpop.f32.mrb[0].mxu0
        %v1112 = vadd.f32 %v341, %v1111
        %v1113 = vpop.f32.mrb[0].mxu0
        %1114 = vmatprep.mubr.bf16.mxu0 0
        %1115 = vmatmul.mubr.bf16.gmra.mrb[0].mxu0 %v754
        %v1116 = vpop.f32.mrb[0].mxu0
        %v1117 = vadd.f32 %v341, %v1116
        %v1118 = vpop.f32.mrb[0].mxu0
        %v1119 = vpop.f32.mrb[0].mxu0
        %v1120 = vadd.f32 %v341, %v1119
        %v1121 = vpop.f32.mrb[0].mxu0
        %1122 = vmatprep.mubr.bf16.mxu0 0
        %1123 = vmatmul.mubr.bf16.gmra.mrb[0].mxu0 %v757
        %v1124 = vpop.f32.mrb[0].mxu0
        %v1125 = vadd.f32 %v341, %v1124
        %v1126 = vpop.f32.mrb[0].mxu0
        %v1127 = vpop.f32.mrb[0].mxu0
        %v1128 = vadd.f32 %v341, %v1127
        %v1129 = vpop.f32.mrb[0].mxu0
        %1130 = vmatprep.mubr.bf16.mxu0 0
        %1131 = vmatmul.mubr.bf16.gmra.mrb[0].mxu0 %v760
        %v1132 = vpop.f32.mrb[0].mxu0
        %v1133 = vadd.f32 %v341, %v1132
        %v1134 = vpop.f32.mrb[0].mxu0
        %v1135 = vpop.f32.mrb[0].mxu0
        %v1136 = vadd.f32 %v341, %v1135
        %v1137 = vpop.f32.mrb[0].mxu0
        %1138 = vmatprep.mubr.bf16.mxu0 0
        %1139 = vmatmul.mubr.bf16.gmra.mrb[0].mxu0 %v763
        %v1140 = vpop.f32.mrb[0].mxu0
        %v1141 = vadd.f32 %v341, %v1140
        %v1142 = vpop.f32.mrb[0].mxu0
        %v1143 = vpop.f32.mrb[0].mxu0
        %v1144 = vadd.f32 %v341, %v1143
        %v1145 = vpop.f32.mrb[0].mxu0
        %1146 = vmatprep.mubr.bf16.mxu0 0
        %1147 = vmatmul.mubr.bf16.gmra.mrb[0].mxu0 %v766
        %v1148 = vpop.f32.mrb[0].mxu0
        %v1149 = vadd.f32 %v341, %v1148
        %v1150 = vpop.f32.mrb[0].mxu0
        %v1151 = vpop.f32.mrb[0].mxu0
        %v1152 = vadd.f32 %v341, %v1151
        %v1153 = vpop.f32.mrb[0].mxu0
        %1154 = vmatprep.mubr.bf16.mxu0 0
        %1155 = vmatmul.mubr.bf16.gmra.mrb[0].mxu0 %v769
        %v1156 = vpop.f32.mrb[0].mxu0
        %v1157 = vadd.f32 %v341, %v1156
        %v1158 = vpop.f32.mrb[0].mxu0
        %v1159 = vpop.f32.mrb[0].mxu0
        %v1160 = vadd.f32 %v341, %v1159
        %v1161 = vpop.f32.mrb[0].mxu0
        %1162 = vmatprep.mubr.bf16.mxu0 0
        %1163 = vmatmul.mubr.bf16.gmra.mrb[0].mxu0 %v772
        %v1164 = vpop.f32.mrb[0].mxu0
        %v1165 = vadd.f32 %v341, %v1164
        %v1166 = vpop.f32.mrb[0].mxu0
        %v1167 = vpop.f32.mrb[0].mxu0
        %v1168 = vadd.f32 %v341, %v1167
        %v1169 = vpop.f32.mrb[0].mxu0
        %1170 = vmatprep.mubr.bf16.mxu0 0
        %1171 = vmatmul.mubr.bf16.gmra.mrb[0].mxu0 %v775
        %v1172 = vpop.f32.mrb[0].mxu0
        %v1173 = vadd.f32 %v341, %v1172
        %v1174 = vpop.f32.mrb[0].mxu0
        %v1175 = vpop.f32.mrb[0].mxu0
        %v1176 = vadd.f32 %v341, %v1175
        %v1177 = vpop.f32.mrb[0].mxu0
        %1178 = vmatprep.mubr.bf16.mxu0 0
        %1179 = vmatmul.mubr.bf16.gmra.mrb[0].mxu0 %v778
        %v1180 = vpop.f32.mrb[0].mxu0
        %v1181 = vadd.f32 %v341, %v1180
        %v1182 = vpop.f32.mrb[0].mxu0
        %v1183 = vpop.f32.mrb[0].mxu0
        %v1184 = vadd.f32 %v341, %v1183
        %v1185 = vpop.f32.mrb[0].mxu0
        %1186 = vmatprep.mubr.bf16.mxu0 0
        %1187 = vmatmul.mubr.bf16.gmra.mrb[0].mxu0 %v781
        %v1188 = vpop.f32.mrb[0].mxu0
        %v1189 = vadd.f32 %v341, %v1188
        %v1190 = vpop.f32.mrb[0].mxu0
        %v1191 = vpop.f32.mrb[0].mxu0
        %v1192 = vadd.f32 %v341, %v1191
        %v1193 = vpop.f32.mrb[0].mxu0
        %1194 = vmatprep.mubr.bf16.mxu0 0
        %1195 = vmatmul.mubr.bf16.gmra.mrb[0].mxu0 %v784
        %v1196 = vpop.f32.mrb[0].mxu0
        %v1197 = vadd.f32 %v341, %v1196
        %v1198 = vpop.f32.mrb[0].mxu0
        %v1199 = vpop.f32.mrb[0].mxu0
        %v1200 = vadd.f32 %v341, %v1199
        %v1201 = vpop.f32.mrb[0].mxu0
        %1202 = vmatprep.mubr.bf16.mxu0 0
        %1203 = vmatmul.mubr.bf16.gmra.mrb[0].mxu0 %v787
        %v1204 = vpop.f32.mrb[0].mxu0
        %v1205 = vadd.f32 %v341, %v1204
        %v1206 = vpop.f32.mrb[0].mxu0
        %v1207 = vpop.f32.mrb[0].mxu0
        %v1208 = vadd.f32 %v341, %v1207
        %v1209 = vpop.f32.mrb[0].mxu0
        %1210 = vmatprep.mubr.bf16.mxu0 0
        %1211 = vmatmul.mubr.bf16.gmra.mrb[0].mxu0 %v790
        %v1212 = vpop.f32.mrb[0].mxu0
        %v1213 = vadd.f32 %v341, %v1212
        %v1214 = vpop.f32.mrb[0].mxu0
        %v1215 = vpop.f32.mrb[0].mxu0
        %v1216 = vadd.f32 %v341, %v1215
        %v1217 = vpop.f32.mrb[0].mxu0
        %1218 = vmatprep.mubr.bf16.mxu0 0
        %1219 = vmatmul.mubr.bf16.gmra.mrb[0].mxu0 %v793
        %v1220 = vpop.f32.mrb[0].mxu0
        %v1221 = vadd.f32 %v341, %v1220
        %v1222 = vpop.f32.mrb[0].mxu0
        %v1223 = vpop.f32.mrb[0].mxu0
        %v1224 = vadd.f32 %v341, %v1223
        %v1225 = vpop.f32.mrb[0].mxu0
        %1226 = vmatprep.mubr.bf16.mxu0 0
        %1227 = vmatmul.mubr.bf16.gmra.mrb[0].mxu0 %v796
        %v1228 = vpop.f32.mrb[0].mxu0
        %v1229 = vadd.f32 %v341, %v1228
        %v1230 = vpop.f32.mrb[0].mxu0
        %v1231 = vpop.f32.mrb[0].mxu0
        %v1232 = vadd.f32 %v341, %v1231
        %v1233 = vpop.f32.mrb[0].mxu0
        %1234 = vmatprep.mubr.bf16.mxu0 0
        %1235 = vmatmul.mubr.bf16.gmra.mrb[0].mxu0 %v799
        %v1236 = vpop.f32.mrb[0].mxu0
        %v1237 = vadd.f32 %v341, %v1236
        %v1238 = vpop.f32.mrb[0].mxu0
        %v1239 = vpop.f32.mrb[0].mxu0
        %v1240 = vadd.f32 %v341, %v1239
        %v1241 = vpop.f32.mrb[0].mxu0
        %1242 = vmatprep.mubr.bf16.mxu0 0
        %1243 = vmatmul.mubr.bf16.gmra.mrb[0].mxu0 %v802
        %v1244 = vpop.f32.mrb[0].mxu0
        %v1245 = vadd.f32 %v341, %v1244
        %v1246 = vpop.f32.mrb[0].mxu0
        %v1247 = vpop.f32.mrb[0].mxu0
        %v1248 = vadd.f32 %v341, %v1247
        %v1249 = vpop.f32.mrb[0].mxu0
        %1250 = vmatprep.mubr.bf16.mxu0 0
        %1251 = vmatmul.mubr.bf16.gmra.mrb[0].mxu0 %v805
        %v1252 = vpop.f32.mrb[0].mxu0
        %v1253 = vadd.f32 %v341, %v1252
        %v1254 = vpop.f32.mrb[0].mxu0
        %v1255 = vpop.f32.mrb[0].mxu0
        %v1256 = vadd.f32 %v341, %v1255
        %v1257 = vpop.f32.mrb[0].mxu0
        %1258 = vmatprep.mubr.bf16.mxu0 0
        %1259 = vmatmul.mubr.bf16.gmra.mrb[0].mxu0 %v808
        %v1260 = vpop.f32.mrb[0].mxu0
        %v1261 = vadd.f32 %v341, %v1260
        %v1262 = vpop.f32.mrb[0].mxu0
        %v1263 = vpop.f32.mrb[0].mxu0
        %v1264 = vadd.f32 %v341, %v1263
        %v1265 = vpop.f32.mrb[0].mxu0
        %1266 = vmatprep.mubr.bf16.mxu0 0
        %1267 = vmatmul.mubr.bf16.gmra.mrb[0].mxu0 %v811
        %v1268 = vpop.f32.mrb[0].mxu0
        %v1269 = vadd.f32 %v341, %v1268
        %v1270 = vpop.f32.mrb[0].mxu0
        %v1271 = vpop.f32.mrb[0].mxu0
        %v1272 = vadd.f32 %v341, %v1271
        %v1273 = vpop.f32.mrb[0].mxu0
        %1274 = vmatprep.mubr.bf16.mxu0 0
        %1275 = vmatmul.mubr.bf16.gmra.mrb[0].mxu0 %v814
        %v1276 = vpop.f32.mrb[0].mxu0
        %v1277 = vadd.f32 %v341, %v1276
        %v1278 = vpop.f32.mrb[0].mxu0
        %v1279 = vpop.f32.mrb[0].mxu0
        %v1280 = vadd.f32 %v341, %v1279
        %v1281 = vpop.f32.mrb[0].mxu0
        %1282 = vmatprep.mubr.bf16.mxu0 0
        %1283 = vmatmul.mubr.bf16.gmra.mrb[0].mxu0 %v817
        %v1284 = vpop.f32.mrb[0].mxu0
        %v1285 = vadd.f32 %v341, %v1284
        %v1286 = vpop.f32.mrb[0].mxu0
        %v1287 = vpop.f32.mrb[0].mxu0
        %v1288 = vadd.f32 %v341, %v1287
        %v1289 = vpop.f32.mrb[0].mxu0
        %1290 = vmatprep.mubr.bf16.mxu0 0
        %1291 = vmatmul.mubr.bf16.gmra.mrb[0].mxu0 %v820
        %v1292 = vpop.f32.mrb[0].mxu0
        %v1293 = vadd.f32 %v341, %v1292
        %v1294 = vpop.f32.mrb[0].mxu0
        %v1295 = vpop.f32.mrb[0].mxu0
        %v1296 = vadd.f32 %v341, %v1295
        %v1297 = vpop.f32.mrb[0].mxu0
        %1298 = vmatprep.mubr.bf16.mxu0 0
        %1299 = vmatmul.mubr.bf16.gmra.mrb[0].mxu0 %v823
        %v1300 = vpop.f32.mrb[0].mxu0
        %v1301 = vadd.f32 %v341, %v1300
        %v1302 = vpop.f32.mrb[0].mxu0
        %v1303 = vpop.f32.mrb[0].mxu0
        %v1304 = vadd.f32 %v341, %v1303
        %v1305 = vpop.f32.mrb[0].mxu0
        %1306 = vmatprep.mubr.bf16.mxu0 0
        %1307 = vmatmul.mubr.bf16.gmra.mrb[0].mxu0 %v826
        %v1308 = vpop.f32.mrb[0].mxu0
        %v1309 = vadd.f32 %v341, %v1308
        %v1310 = vpop.f32.mrb[0].mxu0
        %v1311 = vpop.f32.mrb[0].mxu0
        %v1312 = vadd.f32 %v341, %v1311
        %v1313 = vpop.f32.mrb[0].mxu0
        %1314 = vmatprep.mubr.bf16.mxu0 0
        %1315 = vmatmul.mubr.bf16.gmra.mrb[0].mxu0 %v829
        %v1316 = vpop.f32.mrb[0].mxu0
        %v1317 = vadd.f32 %v341, %v1316
        %v1318 = vpop.f32.mrb[0].mxu0
        %v1319 = vpop.f32.mrb[0].mxu0
        %v1320 = vadd.f32 %v341, %v1319
        %v1321 = vpop.f32.mrb[0].mxu0
        %1322 = vmatprep.mubr.bf16.mxu0 0
        %1323 = vmatmul.mubr.bf16.gmra.mrb[0].mxu0 %v832
        %v1324 = vpop.f32.mrb[0].mxu0
        %v1325 = vadd.f32 %v341, %v1324
        %v1326 = vpop.f32.mrb[0].mxu0
        %v1327 = vpop.f32.mrb[0].mxu0
        %v1328 = vadd.f32 %v341, %v1327
        %v1329 = vpop.f32.mrb[0].mxu0
        %1330 = vmatprep.mubr.bf16.mxu0 0
        %1331 = vmatmul.mubr.bf16.gmra.mrb[0].mxu0 %v835
        %v1332 = vpop.f32.mrb[0].mxu0
        %v1333 = vadd.f32 %v341, %v1332
        %v1334 = vpop.f32.mrb[0].mxu0
        %v1335 = vpop.f32.mrb[0].mxu0
        %v1336 = vadd.f32 %v341, %v1335
        %v1337 = vpop.f32.mrb[0].mxu0
        %1338 = vmatprep.mubr.bf16.mxu0 0
        %1339 = vmatmul.mubr.bf16.gmra.mrb[0].mxu0 %v838
        %v1340 = vpop.f32.mrb[0].mxu0
        %v1341 = vadd.f32 %v341, %v1340
        %v1342 = vpop.f32.mrb[0].mxu0
        %v1343 = vpop.f32.mrb[0].mxu0
        %v1344 = vadd.f32 %v341, %v1343
        %v1345 = vpop.f32.mrb[0].mxu0
        %1346 = vmatprep.mubr.bf16.mxu0 0
        %1347 = vmatmul.mubr.bf16.gmra.mrb[0].mxu0 %v841
        %v1348 = vpop.f32.mrb[0].mxu0
        %v1349 = vadd.f32 %v341, %v1348
        %v1350 = vpop.f32.mrb[0].mxu0
        %v1351 = vpop.f32.mrb[0].mxu0
        %v1352 = vadd.f32 %v341, %v1351
        %v1353 = vpop.f32.mrb[0].mxu0
        %1354 = vmatprep.mubr.bf16.mxu0 0
        %1355 = vmatmul.mubr.bf16.gmra.mrb[0].mxu0 %v844
        %v1356 = vpop.f32.mrb[0].mxu0
        %v1357 = vadd.f32 %v341, %v1356
        %v1358 = vpop.f32.mrb[0].mxu0
        %v1359 = vpop.f32.mrb[0].mxu0
        %v1360 = vadd.f32 %v341, %v1359
        %v1361 = vpop.f32.mrb[0].mxu0
        %1362 = vmatprep.mubr.bf16.mxu0 0
        %1363 = vmatmul.mubr.bf16.gmra.mrb[0].mxu0 %v847
        %v1364 = vpop.f32.mrb[0].mxu0
        %v1365 = vadd.f32 %v341, %v1364
        %v1366 = vpop.f32.mrb[0].mxu0
        %v1367 = vpop.f32.mrb[0].mxu0
        %v1368 = vadd.f32 %v341, %v1367
        %v1369 = vpop.f32.mrb[0].mxu0
        %1370 = vmatprep.mubr.bf16.mxu0 0
        %1371 = vmatmul.mubr.bf16.gmra.mrb[0].mxu0 %v850
        %v1372 = vpop.f32.mrb[0].mxu0
        %v1373 = vadd.f32 %v341, %v1372
        %v1374 = vpop.f32.mrb[0].mxu0
        %v1375 = vpop.f32.mrb[0].mxu0
        %v1376 = vadd.f32 %v341, %v1375
        %v1377 = vpop.f32.mrb[0].mxu0
        %1378 = vmatprep.mubr.bf16.mxu0 0
        %1379 = vmatmul.mubr.bf16.gmra.mrb[0].mxu0 %v853
        %v1380 = vpop.f32.mrb[0].mxu0
        %v1381 = vadd.f32 %v341, %v1380
        %v1382 = vpop.f32.mrb[0].mxu0
        %v1383 = vpop.f32.mrb[0].mxu0
        %v1384 = vadd.f32 %v341, %v1383
        %v1385 = vpop.f32.mrb[0].mxu0
        %1386 = vmatprep.mubr.bf16.mxu0 0
        %1387 = vmatmul.mubr.bf16.gmra.mrb[0].mxu0 %v856
        %v1388 = vpop.f32.mrb[0].mxu0
        %v1389 = vadd.f32 %v341, %v1388
        %v1390 = vpop.f32.mrb[0].mxu0
        %v1391 = vpop.f32.mrb[0].mxu0
        %v1392 = vadd.f32 %v341, %v1391
        %v1393 = vpop.f32.mrb[0].mxu0
        %1394 = vmatprep.mubr.bf16.mxu0 0
        %1395 = vmatmul.mubr.bf16.gmra.mrb[0].mxu0 %v859
        %v1396 = vpop.f32.mrb[0].mxu0
        %v1397 = vadd.f32 %v341, %v1396
        %v1398 = vpop.f32.mrb[0].mxu0
        %v1399 = vpop.f32.mrb[0].mxu0
        %v1400 = vadd.f32 %v341, %v1399
        %v1401 = vpop.f32.mrb[0].mxu0
        %1402 = vmatprep.mubr.bf16.mxu0 0
        %1403 = vmatmul.mubr.bf16.gmra.mrb[0].mxu0 %v862
        %v1404 = vpop.f32.mrb[0].mxu0
        %v1405 = vadd.f32 %v341, %v1404
        %v1406 = vpop.f32.mrb[0].mxu0
        %v1407 = vpop.f32.mrb[0].mxu0
        %v1408 = vadd.f32 %v341, %v1407
        %v1409 = vpop.f32.mrb[0].mxu0
        %1410 = vmatprep.mubr.bf16.mxu0 0
        %1411 = vmatmul.mubr.bf16.gmra.mrb[0].mxu0 %v865
        %v1412 = vpop.f32.mrb[0].mxu0
        %v1413 = vadd.f32 %v341, %v1412
        %v1414 = vpop.f32.mrb[0].mxu0
        %v1415 = vpop.f32.mrb[0].mxu0
        %v1416 = vadd.f32 %v341, %v1415
        %v1417 = vpop.f32.mrb[0].mxu0
        %1418 = vdwg.mxu0
        %v1419 = vmax.f32 %v909, 0.0
        %v1420 = vmax.f32 %v912, 0.0
        %v1421 = vmax.f32 %v917, 0.0
        %v1422 = vmax.f32 %v920, 0.0
        %v1423 = vmax.f32 %v925, 0.0
        %v1424 = vmax.f32 %v928, 0.0
        %v1425 = vmax.f32 %v933, 0.0
        %v1426 = vmax.f32 %v936, 0.0
        %v1427 = vmax.f32 %v941, 0.0
        %v1428 = vmax.f32 %v944, 0.0
        %v1429 = vmax.f32 %v949, 0.0
        %v1430 = vmax.f32 %v952, 0.0
        %v1431 = vmax.f32 %v957, 0.0
        %v1432 = vmax.f32 %v960, 0.0
        %v1433 = vmax.f32 %v965, 0.0
        %v1434 = vmax.f32 %v968, 0.0
        %v1435 = vmax.f32 %v973, 0.0
        %v1436 = vmax.f32 %v976, 0.0
        %v1437 = vmax.f32 %v981, 0.0
        %v1438 = vmax.f32 %v984, 0.0
        %v1439 = vmax.f32 %v989, 0.0
        %v1440 = vmax.f32 %v992, 0.0
        %v1441 = vmax.f32 %v997, 0.0
        %v1442 = vmax.f32 %v1000, 0.0
        %v1443 = vmax.f32 %v1005, 0.0
        %v1444 = vmax.f32 %v1008, 0.0
        %v1445 = vmax.f32 %v1013, 0.0
        %v1446 = vmax.f32 %v1016, 0.0
        %v1447 = vmax.f32 %v1021, 0.0
        %v1448 = vmax.f32 %v1024, 0.0
        %v1449 = vmax.f32 %v1029, 0.0
        %v1450 = vmax.f32 %v1032, 0.0
        %v1451 = vmax.f32 %v1037, 0.0
        %v1452 = vmax.f32 %v1040, 0.0
        %v1453 = vmax.f32 %v1045, 0.0
        %v1454 = vmax.f32 %v1048, 0.0
        %v1455 = vmax.f32 %v1053, 0.0
        %v1456 = vmax.f32 %v1056, 0.0
        %v1457 = vmax.f32 %v1061, 0.0
        %v1458 = vmax.f32 %v1064, 0.0
        %v1459 = vmax.f32 %v1069, 0.0
        %v1460 = vmax.f32 %v1072, 0.0
        %v1461 = vmax.f32 %v1077, 0.0
        %v1462 = vmax.f32 %v1080, 0.0
        %v1463 = vmax.f32 %v1085, 0.0
        %v1464 = vmax.f32 %v1088, 0.0
        %v1465 = vmax.f32 %v1093, 0.0
        %v1466 = vmax.f32 %v1096, 0.0
        %v1467 = vmax.f32 %v1101, 0.0
        %v1468 = vmax.f32 %v1104, 0.0
        %v1469 = vmax.f32 %v1109, 0.0
        %v1470 = vmax.f32 %v1112, 0.0
        %v1471 = vmax.f32 %v1117, 0.0
        %v1472 = vmax.f32 %v1120, 0.0
        %v1473 = vmax.f32 %v1125, 0.0
        %v1474 = vmax.f32 %v1128, 0.0
        %v1475 = vmax.f32 %v1133, 0.0
        %v1476 = vmax.f32 %v1136, 0.0
        %v1477 = vmax.f32 %v1141, 0.0
        %v1478 = vmax.f32 %v1144, 0.0
        %v1479 = vmax.f32 %v1149, 0.0
        %v1480 = vmax.f32 %v1152, 0.0
        %v1481 = vmax.f32 %v1157, 0.0
        %v1482 = vmax.f32 %v1160, 0.0
        %v1483 = vmax.f32 %v1165, 0.0
        %v1484 = vmax.f32 %v1168, 0.0
        %v1485 = vmax.f32 %v1173, 0.0
        %v1486 = vmax.f32 %v1176, 0.0
        %v1487 = vmax.f32 %v1181, 0.0
        %v1488 = vmax.f32 %v1184, 0.0
        %v1489 = vmax.f32 %v1189, 0.0
        %v1490 = vmax.f32 %v1192, 0.0
        %v1491 = vmax.f32 %v1197, 0.0
        %v1492 = vmax.f32 %v1200, 0.0
        %v1493 = vmax.f32 %v1205, 0.0
        %v1494 = vmax.f32 %v1208, 0.0
        %v1495 = vmax.f32 %v1213, 0.0
        %v1496 = vmax.f32 %v1216, 0.0
        %v1497 = vmax.f32 %v1221, 0.0
        %v1498 = vmax.f32 %v1224, 0.0
        %v1499 = vmax.f32 %v1229, 0.0
        %v1500 = vmax.f32 %v1232, 0.0
        %v1501 = vmax.f32 %v1237, 0.0
        %v1502 = vmax.f32 %v1240, 0.0
        %v1503 = vmax.f32 %v1245, 0.0
        %v1504 = vmax.f32 %v1248, 0.0
        %v1505 = vmax.f32 %v1253, 0.0
        %v1506 = vmax.f32 %v1256, 0.0
        %v1507 = vmax.f32 %v1261, 0.0
        %v1508 = vmax.f32 %v1264, 0.0
        %v1509 = vmax.f32 %v1269, 0.0
        %v1510 = vmax.f32 %v1272, 0.0
        %v1511 = vmax.f32 %v1277, 0.0
        %v1512 = vmax.f32 %v1280, 0.0
        %v1513 = vmax.f32 %v1285, 0.0
        %v1514 = vmax.f32 %v1288, 0.0
        %v1515 = vmax.f32 %v1293, 0.0
        %v1516 = vmax.f32 %v1296, 0.0
        %v1517 = vmax.f32 %v1301, 0.0
        %v1518 = vmax.f32 %v1304, 0.0
        %v1519 = vmax.f32 %v1309, 0.0
        %v1520 = vmax.f32 %v1312, 0.0
        %v1521 = vmax.f32 %v1317, 0.0
        %v1522 = vmax.f32 %v1320, 0.0
        %v1523 = vmax.f32 %v1325, 0.0
        %v1524 = vmax.f32 %v1328, 0.0
        %v1525 = vmax.f32 %v1333, 0.0
        %v1526 = vmax.f32 %v1336, 0.0
        %v1527 = vmax.f32 %v1341, 0.0
        %v1528 = vmax.f32 %v1344, 0.0
        %v1529 = vmax.f32 %v1349, 0.0
        %v1530 = vmax.f32 %v1352, 0.0
        %v1531 = vmax.f32 %v1357, 0.0
        %v1532 = vmax.f32 %v1360, 0.0
        %v1533 = vmax.f32 %v1365, 0.0
        %v1534 = vmax.f32 %v1368, 0.0
        %v1535 = vmax.f32 %v1373, 0.0
        %v1536 = vmax.f32 %v1376, 0.0
        %v1537 = vmax.f32 %v1381, 0.0
        %v1538 = vmax.f32 %v1384, 0.0
        %v1539 = vmax.f32 %v1389, 0.0
        %v1540 = vmax.f32 %v1392, 0.0
        %v1541 = vmax.f32 %v1397, 0.0
        %v1542 = vmax.f32 %v1400, 0.0
        %v1543 = vmax.f32 %v1405, 0.0
        %v1544 = vmax.f32 %v1408, 0.0
        %v1545 = vmax.f32 %v1413, 0.0
        %v1546 = vmax.f32 %v1416, 0.0
        %v1547 = vmax.f32 %v1419, %v1435
        %v1548 = vmax.f32 %v1420, %v1436
        %v1549 = vmax.f32 %v1421, %v1437
        %v1550 = vmax.f32 %v1422, %v1438
        %v1551 = vmax.f32 %v1423, %v1439
        %v1552 = vmax.f32 %v1424, %v1440
        %v1553 = vmax.f32 %v1425, %v1441
        %v1554 = vmax.f32 %v1426, %v1442
        %v1555 = vmax.f32 %v1427, %v1443
        %v1556 = vmax.f32 %v1428, %v1444
        %v1557 = vmax.f32 %v1429, %v1445
        %v1558 = vmax.f32 %v1430, %v1446
        %v1559 = vmax.f32 %v1431, %v1447
        %v1560 = vmax.f32 %v1432, %v1448
        %v1561 = vmax.f32 %v1433, %v1449
        %v1562 = vmax.f32 %v1434, %v1450
        %v1563 = vmax.f32 %v1451, %v1467
        %v1564 = vmax.f32 %v1452, %v1468
        %v1565 = vmax.f32 %v1453, %v1469
        %v1566 = vmax.f32 %v1454, %v1470
        %v1567 = vmax.f32 %v1455, %v1471
        %v1568 = vmax.f32 %v1456, %v1472
        %v1569 = vmax.f32 %v1457, %v1473
        %v1570 = vmax.f32 %v1458, %v1474
        %v1571 = vmax.f32 %v1459, %v1475
        %v1572 = vmax.f32 %v1460, %v1476
        %v1573 = vmax.f32 %v1461, %v1477
        %v1574 = vmax.f32 %v1462, %v1478
        %v1575 = vmax.f32 %v1463, %v1479
        %v1576 = vmax.f32 %v1464, %v1480
        %v1577 = vmax.f32 %v1465, %v1481
        %v1578 = vmax.f32 %v1466, %v1482
        %v1579 = vmax.f32 %v1483, %v1499
        %v1580 = vmax.f32 %v1484, %v1500
        %v1581 = vmax.f32 %v1485, %v1501
        %v1582 = vmax.f32 %v1486, %v1502
        %v1583 = vmax.f32 %v1487, %v1503
        %v1584 = vmax.f32 %v1488, %v1504
        %v1585 = vmax.f32 %v1489, %v1505
        %v1586 = vmax.f32 %v1490, %v1506
        %v1587 = vmax.f32 %v1491, %v1507
        %v1588 = vmax.f32 %v1492, %v1508
        %v1589 = vmax.f32 %v1493, %v1509
        %v1590 = vmax.f32 %v1494, %v1510
        %v1591 = vmax.f32 %v1495, %v1511
        %v1592 = vmax.f32 %v1496, %v1512
        %v1593 = vmax.f32 %v1497, %v1513
        %v1594 = vmax.f32 %v1498, %v1514
        %v1595 = vmax.f32 %v1515, %v1531
        %v1596 = vmax.f32 %v1516, %v1532
        %v1597 = vmax.f32 %v1517, %v1533
        %v1598 = vmax.f32 %v1518, %v1534
        %v1599 = vmax.f32 %v1519, %v1535
        %v1600 = vmax.f32 %v1520, %v1536
        %v1601 = vmax.f32 %v1521, %v1537
        %v1602 = vmax.f32 %v1522, %v1538
        %v1603 = vmax.f32 %v1523, %v1539
        %v1604 = vmax.f32 %v1524, %v1540
        %v1605 = vmax.f32 %v1525, %v1541
        %v1606 = vmax.f32 %v1526, %v1542
        %v1607 = vmax.f32 %v1527, %v1543
        %v1608 = vmax.f32 %v1528, %v1544
        %v1609 = vmax.f32 %v1529, %v1545
        %v1610 = vmax.f32 %v1530, %v1546
        %v1675 = vcombine.high %v1547, %v1547
        %v1677 = vunpack.c.l.s4 1983009808
        %v1678 = vunpack.c.0.s8 %v1677
        %v1679 = vlaneseq
        %v1680 = vshrl.u32 %v1679, 7
        %v1681 = vsub.s32 %v1678, %v1680
        %v1682 = vrot.slane %v1547, %v1681
        %v1684 = vunpack.c.l.s4 1983009808
        %v1685 = vunpack.c.0.s8 %v1684
        %v1686 = vlaneseq
        %v1687 = vshrl.u32 %v1686, 7
        %v1688 = vsub.s32 %v1685, %v1687
        %v1689 = vrot.slane %v1675, %v1688
        %v1690 = vcombine.high %v1682, %v1682
        %v1691 = vcombine.high %v1689, %v1689
        %v1692 = vcombine.high %v1548, %v1548
        %v1694 = vunpack.c.l.s4 1983009808
        %v1695 = vunpack.c.0.s8 %v1694
        %v1696 = vlaneseq
        %v1697 = vshrl.u32 %v1696, 7
        %v1698 = vsub.s32 %v1695, %v1697
        %v1699 = vrot.slane %v1548, %v1698
        %v1701 = vunpack.c.l.s4 1983009808
        %v1702 = vunpack.c.0.s8 %v1701
        %v1703 = vlaneseq
        %v1704 = vshrl.u32 %v1703, 7
        %v1705 = vsub.s32 %v1702, %v1704
        %v1706 = vrot.slane %v1692, %v1705
        %v1707 = vcombine.high %v1699, %v1699
        %v1708 = vcombine.high %v1706, %v1706
        %v1709 = vcombine.high %v1549, %v1549
        %v1711 = vunpack.c.l.s4 1983009808
        %v1712 = vunpack.c.0.s8 %v1711
        %v1713 = vlaneseq
        %v1714 = vshrl.u32 %v1713, 7
        %v1715 = vsub.s32 %v1712, %v1714
        %v1716 = vrot.slane %v1549, %v1715
        %v1718 = vunpack.c.l.s4 1983009808
        %v1719 = vunpack.c.0.s8 %v1718
        %v1720 = vlaneseq
        %v1721 = vshrl.u32 %v1720, 7
        %v1722 = vsub.s32 %v1719, %v1721
        %v1723 = vrot.slane %v1709, %v1722
        %v1724 = vcombine.high %v1716, %v1716
        %v1725 = vcombine.high %v1723, %v1723
        %v1726 = vcombine.high %v1550, %v1550
        %v1728 = vunpack.c.l.s4 1983009808
        %v1729 = vunpack.c.0.s8 %v1728
        %v1730 = vlaneseq
        %v1731 = vshrl.u32 %v1730, 7
        %v1732 = vsub.s32 %v1729, %v1731
        %v1733 = vrot.slane %v1550, %v1732
        %v1735 = vunpack.c.l.s4 1983009808
        %v1736 = vunpack.c.0.s8 %v1735
        %v1737 = vlaneseq
        %v1738 = vshrl.u32 %v1737, 7
        %v1739 = vsub.s32 %v1736, %v1738
        %v1740 = vrot.slane %v1726, %v1739
        %v1741 = vcombine.high %v1733, %v1733
        %v1742 = vcombine.high %v1740, %v1740
        %v1743 = vcombine.high %v1551, %v1551
        %v1745 = vunpack.c.l.s4 1983009808
        %v1746 = vunpack.c.0.s8 %v1745
        %v1747 = vlaneseq
        %v1748 = vshrl.u32 %v1747, 7
        %v1749 = vsub.s32 %v1746, %v1748
        %v1750 = vrot.slane %v1551, %v1749
        %v1752 = vunpack.c.l.s4 1983009808
        %v1753 = vunpack.c.0.s8 %v1752
        %v1754 = vlaneseq
        %v1755 = vshrl.u32 %v1754, 7
        %v1756 = vsub.s32 %v1753, %v1755
        %v1757 = vrot.slane %v1743, %v1756
        %v1758 = vcombine.high %v1750, %v1750
        %v1759 = vcombine.high %v1757, %v1757
        %v1760 = vcombine.high %v1552, %v1552
        %v1762 = vunpack.c.l.s4 1983009808
        %v1763 = vunpack.c.0.s8 %v1762
        %v1764 = vlaneseq
        %v1765 = vshrl.u32 %v1764, 7
        %v1766 = vsub.s32 %v1763, %v1765
        %v1767 = vrot.slane %v1552, %v1766
        %v1769 = vunpack.c.l.s4 1983009808
        %v1770 = vunpack.c.0.s8 %v1769
        %v1771 = vlaneseq
        %v1772 = vshrl.u32 %v1771, 7
        %v1773 = vsub.s32 %v1770, %v1772
        %v1774 = vrot.slane %v1760, %v1773
        %v1775 = vcombine.high %v1767, %v1767
        %v1776 = vcombine.high %v1774, %v1774
        %v1777 = vcombine.high %v1553, %v1553
        %v1779 = vunpack.c.l.s4 1983009808
        %v1780 = vunpack.c.0.s8 %v1779
        %v1781 = vlaneseq
        %v1782 = vshrl.u32 %v1781, 7
        %v1783 = vsub.s32 %v1780, %v1782
        %v1784 = vrot.slane %v1553, %v1783
        %v1786 = vunpack.c.l.s4 1983009808
        %v1787 = vunpack.c.0.s8 %v1786
        %v1788 = vlaneseq
        %v1789 = vshrl.u32 %v1788, 7
        %v1790 = vsub.s32 %v1787, %v1789
        %v1791 = vrot.slane %v1777, %v1790
        %v1792 = vcombine.high %v1784, %v1784
        %v1793 = vcombine.high %v1791, %v1791
        %v1794 = vcombine.high %v1554, %v1554
        %v1796 = vunpack.c.l.s4 1983009808
        %v1797 = vunpack.c.0.s8 %v1796
        %v1798 = vlaneseq
        %v1799 = vshrl.u32 %v1798, 7
        %v1800 = vsub.s32 %v1797, %v1799
        %v1801 = vrot.slane %v1554, %v1800
        %v1803 = vunpack.c.l.s4 1983009808
        %v1804 = vunpack.c.0.s8 %v1803
        %v1805 = vlaneseq
        %v1806 = vshrl.u32 %v1805, 7
        %v1807 = vsub.s32 %v1804, %v1806
        %v1808 = vrot.slane %v1794, %v1807
        %v1809 = vcombine.high %v1801, %v1801
        %v1810 = vcombine.high %v1808, %v1808
        %v1811 = vcombine.high %v1555, %v1555
        %v1813 = vunpack.c.l.s4 1983009808
        %v1814 = vunpack.c.0.s8 %v1813
        %v1815 = vlaneseq
        %v1816 = vshrl.u32 %v1815, 7
        %v1817 = vsub.s32 %v1814, %v1816
        %v1818 = vrot.slane %v1555, %v1817
        %v1820 = vunpack.c.l.s4 1983009808
        %v1821 = vunpack.c.0.s8 %v1820
        %v1822 = vlaneseq
        %v1823 = vshrl.u32 %v1822, 7
        %v1824 = vsub.s32 %v1821, %v1823
        %v1825 = vrot.slane %v1811, %v1824
        %v1826 = vcombine.high %v1818, %v1818
        %v1827 = vcombine.high %v1825, %v1825
        %v1828 = vcombine.high %v1556, %v1556
        %v1830 = vunpack.c.l.s4 1983009808
        %v1831 = vunpack.c.0.s8 %v1830
        %v1832 = vlaneseq
        %v1833 = vshrl.u32 %v1832, 7
        %v1834 = vsub.s32 %v1831, %v1833
        %v1835 = vrot.slane %v1556, %v1834
        %v1837 = vunpack.c.l.s4 1983009808
        %v1838 = vunpack.c.0.s8 %v1837
        %v1839 = vlaneseq
        %v1840 = vshrl.u32 %v1839, 7
        %v1841 = vsub.s32 %v1838, %v1840
        %v1842 = vrot.slane %v1828, %v1841
        %v1843 = vcombine.high %v1835, %v1835
        %v1844 = vcombine.high %v1842, %v1842
        %v1845 = vcombine.high %v1557, %v1557
        %v1847 = vunpack.c.l.s4 1983009808
        %v1848 = vunpack.c.0.s8 %v1847
        %v1849 = vlaneseq
        %v1850 = vshrl.u32 %v1849, 7
        %v1851 = vsub.s32 %v1848, %v1850
        %v1852 = vrot.slane %v1557, %v1851
        %v1854 = vunpack.c.l.s4 1983009808
        %v1855 = vunpack.c.0.s8 %v1854
        %v1856 = vlaneseq
        %v1857 = vshrl.u32 %v1856, 7
        %v1858 = vsub.s32 %v1855, %v1857
        %v1859 = vrot.slane %v1845, %v1858
        %v1860 = vcombine.high %v1852, %v1852
        %v1861 = vcombine.high %v1859, %v1859
        %v1862 = vcombine.high %v1558, %v1558
        %v1864 = vunpack.c.l.s4 1983009808
        %v1865 = vunpack.c.0.s8 %v1864
        %v1866 = vlaneseq
        %v1867 = vshrl.u32 %v1866, 7
        %v1868 = vsub.s32 %v1865, %v1867
        %v1869 = vrot.slane %v1558, %v1868
        %v1871 = vunpack.c.l.s4 1983009808
        %v1872 = vunpack.c.0.s8 %v1871
        %v1873 = vlaneseq
        %v1874 = vshrl.u32 %v1873, 7
        %v1875 = vsub.s32 %v1872, %v1874
        %v1876 = vrot.slane %v1862, %v1875
        %v1877 = vcombine.high %v1869, %v1869
        %v1878 = vcombine.high %v1876, %v1876
        %v1879 = vcombine.high %v1559, %v1559
        %v1881 = vunpack.c.l.s4 1983009808
        %v1882 = vunpack.c.0.s8 %v1881
        %v1883 = vlaneseq
        %v1884 = vshrl.u32 %v1883, 7
        %v1885 = vsub.s32 %v1882, %v1884
        %v1886 = vrot.slane %v1559, %v1885
        %v1888 = vunpack.c.l.s4 1983009808
        %v1889 = vunpack.c.0.s8 %v1888
        %v1890 = vlaneseq
        %v1891 = vshrl.u32 %v1890, 7
        %v1892 = vsub.s32 %v1889, %v1891
        %v1893 = vrot.slane %v1879, %v1892
        %v1894 = vcombine.high %v1886, %v1886
        %v1895 = vcombine.high %v1893, %v1893
        %v1896 = vcombine.high %v1560, %v1560
        %v1898 = vunpack.c.l.s4 1983009808
        %v1899 = vunpack.c.0.s8 %v1898
        %v1900 = vlaneseq
        %v1901 = vshrl.u32 %v1900, 7
        %v1902 = vsub.s32 %v1899, %v1901
        %v1903 = vrot.slane %v1560, %v1902
        %v1905 = vunpack.c.l.s4 1983009808
        %v1906 = vunpack.c.0.s8 %v1905
        %v1907 = vlaneseq
        %v1908 = vshrl.u32 %v1907, 7
        %v1909 = vsub.s32 %v1906, %v1908
        %v1910 = vrot.slane %v1896, %v1909
        %v1911 = vcombine.high %v1903, %v1903
        %v1912 = vcombine.high %v1910, %v1910
        %v1913 = vcombine.high %v1561, %v1561
        %v1915 = vunpack.c.l.s4 1983009808
        %v1916 = vunpack.c.0.s8 %v1915
        %v1917 = vlaneseq
        %v1918 = vshrl.u32 %v1917, 7
        %v1919 = vsub.s32 %v1916, %v1918
        %v1920 = vrot.slane %v1561, %v1919
        %v1922 = vunpack.c.l.s4 1983009808
        %v1923 = vunpack.c.0.s8 %v1922
        %v1924 = vlaneseq
        %v1925 = vshrl.u32 %v1924, 7
        %v1926 = vsub.s32 %v1923, %v1925
        %v1927 = vrot.slane %v1913, %v1926
        %v1928 = vcombine.high %v1920, %v1920
        %v1929 = vcombine.high %v1927, %v1927
        %v1930 = vcombine.high %v1562, %v1562
        %v1932 = vunpack.c.l.s4 1983009808
        %v1933 = vunpack.c.0.s8 %v1932
        %v1934 = vlaneseq
        %v1935 = vshrl.u32 %v1934, 7
        %v1936 = vsub.s32 %v1933, %v1935
        %v1937 = vrot.slane %v1562, %v1936
        %v1939 = vunpack.c.l.s4 1983009808
        %v1940 = vunpack.c.0.s8 %v1939
        %v1941 = vlaneseq
        %v1942 = vshrl.u32 %v1941, 7
        %v1943 = vsub.s32 %v1940, %v1942
        %v1944 = vrot.slane %v1930, %v1943
        %v1945 = vcombine.high %v1937, %v1937
        %v1946 = vcombine.high %v1944, %v1944
        %v1947 = vcombine.high %v1563, %v1563
        %v1949 = vunpack.c.l.s4 1983009808
        %v1950 = vunpack.c.0.s8 %v1949
        %v1951 = vlaneseq
        %v1952 = vshrl.u32 %v1951, 7
        %v1953 = vsub.s32 %v1950, %v1952
        %v1954 = vrot.slane %v1563, %v1953
        %v1956 = vunpack.c.l.s4 1983009808
        %v1957 = vunpack.c.0.s8 %v1956
        %v1958 = vlaneseq
        %v1959 = vshrl.u32 %v1958, 7
        %v1960 = vsub.s32 %v1957, %v1959
        %v1961 = vrot.slane %v1947, %v1960
        %v1962 = vcombine.high %v1954, %v1954
        %v1963 = vcombine.high %v1961, %v1961
        %v1964 = vcombine.high %v1564, %v1564
        %v1966 = vunpack.c.l.s4 1983009808
        %v1967 = vunpack.c.0.s8 %v1966
        %v1968 = vlaneseq
        %v1969 = vshrl.u32 %v1968, 7
        %v1970 = vsub.s32 %v1967, %v1969
        %v1971 = vrot.slane %v1564, %v1970
        %v1973 = vunpack.c.l.s4 1983009808
        %v1974 = vunpack.c.0.s8 %v1973
        %v1975 = vlaneseq
        %v1976 = vshrl.u32 %v1975, 7
        %v1977 = vsub.s32 %v1974, %v1976
        %v1978 = vrot.slane %v1964, %v1977
        %v1979 = vcombine.high %v1971, %v1971
        %v1980 = vcombine.high %v1978, %v1978
        %v1981 = vcombine.high %v1565, %v1565
        %v1983 = vunpack.c.l.s4 1983009808
        %v1984 = vunpack.c.0.s8 %v1983
        %v1985 = vlaneseq
        %v1986 = vshrl.u32 %v1985, 7
        %v1987 = vsub.s32 %v1984, %v1986
        %v1988 = vrot.slane %v1565, %v1987
        %v1990 = vunpack.c.l.s4 1983009808
        %v1991 = vunpack.c.0.s8 %v1990
        %v1992 = vlaneseq
        %v1993 = vshrl.u32 %v1992, 7
        %v1994 = vsub.s32 %v1991, %v1993
        %v1995 = vrot.slane %v1981, %v1994
        %v1996 = vcombine.high %v1988, %v1988
        %v1997 = vcombine.high %v1995, %v1995
        %v1998 = vcombine.high %v1566, %v1566
        %v2000 = vunpack.c.l.s4 1983009808
        %v2001 = vunpack.c.0.s8 %v2000
        %v2002 = vlaneseq
        %v2003 = vshrl.u32 %v2002, 7
        %v2004 = vsub.s32 %v2001, %v2003
        %v2005 = vrot.slane %v1566, %v2004
        %v2007 = vunpack.c.l.s4 1983009808
        %v2008 = vunpack.c.0.s8 %v2007
        %v2009 = vlaneseq
        %v2010 = vshrl.u32 %v2009, 7
        %v2011 = vsub.s32 %v2008, %v2010
        %v2012 = vrot.slane %v1998, %v2011
        %v2013 = vcombine.high %v2005, %v2005
        %v2014 = vcombine.high %v2012, %v2012
        %v2015 = vcombine.high %v1567, %v1567
        %v2017 = vunpack.c.l.s4 1983009808
        %v2018 = vunpack.c.0.s8 %v2017
        %v2019 = vlaneseq
        %v2020 = vshrl.u32 %v2019, 7
        %v2021 = vsub.s32 %v2018, %v2020
        %v2022 = vrot.slane %v1567, %v2021
        %v2024 = vunpack.c.l.s4 1983009808
        %v2025 = vunpack.c.0.s8 %v2024
        %v2026 = vlaneseq
        %v2027 = vshrl.u32 %v2026, 7
        %v2028 = vsub.s32 %v2025, %v2027
        %v2029 = vrot.slane %v2015, %v2028
        %v2030 = vcombine.high %v2022, %v2022
        %v2031 = vcombine.high %v2029, %v2029
        %v2032 = vcombine.high %v1568, %v1568
        %v2034 = vunpack.c.l.s4 1983009808
        %v2035 = vunpack.c.0.s8 %v2034
        %v2036 = vlaneseq
        %v2037 = vshrl.u32 %v2036, 7
        %v2038 = vsub.s32 %v2035, %v2037
        %v2039 = vrot.slane %v1568, %v2038
        %v2041 = vunpack.c.l.s4 1983009808
        %v2042 = vunpack.c.0.s8 %v2041
        %v2043 = vlaneseq
        %v2044 = vshrl.u32 %v2043, 7
        %v2045 = vsub.s32 %v2042, %v2044
        %v2046 = vrot.slane %v2032, %v2045
        %v2047 = vcombine.high %v2039, %v2039
        %v2048 = vcombine.high %v2046, %v2046
        %v2049 = vcombine.high %v1569, %v1569
        %v2051 = vunpack.c.l.s4 1983009808
        %v2052 = vunpack.c.0.s8 %v2051
        %v2053 = vlaneseq
        %v2054 = vshrl.u32 %v2053, 7
        %v2055 = vsub.s32 %v2052, %v2054
        %v2056 = vrot.slane %v1569, %v2055
        %v2058 = vunpack.c.l.s4 1983009808
        %v2059 = vunpack.c.0.s8 %v2058
        %v2060 = vlaneseq
        %v2061 = vshrl.u32 %v2060, 7
        %v2062 = vsub.s32 %v2059, %v2061
        %v2063 = vrot.slane %v2049, %v2062
        %v2064 = vcombine.high %v2056, %v2056
        %v2065 = vcombine.high %v2063, %v2063
        %v2066 = vcombine.high %v1570, %v1570
        %v2068 = vunpack.c.l.s4 1983009808
        %v2069 = vunpack.c.0.s8 %v2068
        %v2070 = vlaneseq
        %v2071 = vshrl.u32 %v2070, 7
        %v2072 = vsub.s32 %v2069, %v2071
        %v2073 = vrot.slane %v1570, %v2072
        %v2075 = vunpack.c.l.s4 1983009808
        %v2076 = vunpack.c.0.s8 %v2075
        %v2077 = vlaneseq
        %v2078 = vshrl.u32 %v2077, 7
        %v2079 = vsub.s32 %v2076, %v2078
        %v2080 = vrot.slane %v2066, %v2079
        %v2081 = vcombine.high %v2073, %v2073
        %v2082 = vcombine.high %v2080, %v2080
        %v2083 = vcombine.high %v1571, %v1571
        %v2085 = vunpack.c.l.s4 1983009808
        %v2086 = vunpack.c.0.s8 %v2085
        %v2087 = vlaneseq
        %v2088 = vshrl.u32 %v2087, 7
        %v2089 = vsub.s32 %v2086, %v2088
        %v2090 = vrot.slane %v1571, %v2089
        %v2092 = vunpack.c.l.s4 1983009808
        %v2093 = vunpack.c.0.s8 %v2092
        %v2094 = vlaneseq
        %v2095 = vshrl.u32 %v2094, 7
        %v2096 = vsub.s32 %v2093, %v2095
        %v2097 = vrot.slane %v2083, %v2096
        %v2098 = vcombine.high %v2090, %v2090
        %v2099 = vcombine.high %v2097, %v2097
        %v2100 = vcombine.high %v1572, %v1572
        %v2102 = vunpack.c.l.s4 1983009808
        %v2103 = vunpack.c.0.s8 %v2102
        %v2104 = vlaneseq
        %v2105 = vshrl.u32 %v2104, 7
        %v2106 = vsub.s32 %v2103, %v2105
        %v2107 = vrot.slane %v1572, %v2106
        %v2109 = vunpack.c.l.s4 1983009808
        %v2110 = vunpack.c.0.s8 %v2109
        %v2111 = vlaneseq
        %v2112 = vshrl.u32 %v2111, 7
        %v2113 = vsub.s32 %v2110, %v2112
        %v2114 = vrot.slane %v2100, %v2113
        %v2115 = vcombine.high %v2107, %v2107
        %v2116 = vcombine.high %v2114, %v2114
        %v2117 = vcombine.high %v1573, %v1573
        %v2119 = vunpack.c.l.s4 1983009808
        %v2120 = vunpack.c.0.s8 %v2119
        %v2121 = vlaneseq
        %v2122 = vshrl.u32 %v2121, 7
        %v2123 = vsub.s32 %v2120, %v2122
        %v2124 = vrot.slane %v1573, %v2123
        %v2126 = vunpack.c.l.s4 1983009808
        %v2127 = vunpack.c.0.s8 %v2126
        %v2128 = vlaneseq
        %v2129 = vshrl.u32 %v2128, 7
        %v2130 = vsub.s32 %v2127, %v2129
        %v2131 = vrot.slane %v2117, %v2130
        %v2132 = vcombine.high %v2124, %v2124
        %v2133 = vcombine.high %v2131, %v2131
        %v2134 = vcombine.high %v1574, %v1574
        %v2136 = vunpack.c.l.s4 1983009808
        %v2137 = vunpack.c.0.s8 %v2136
        %v2138 = vlaneseq
        %v2139 = vshrl.u32 %v2138, 7
        %v2140 = vsub.s32 %v2137, %v2139
        %v2141 = vrot.slane %v1574, %v2140
        %v2143 = vunpack.c.l.s4 1983009808
        %v2144 = vunpack.c.0.s8 %v2143
        %v2145 = vlaneseq
        %v2146 = vshrl.u32 %v2145, 7
        %v2147 = vsub.s32 %v2144, %v2146
        %v2148 = vrot.slane %v2134, %v2147
        %v2149 = vcombine.high %v2141, %v2141
        %v2150 = vcombine.high %v2148, %v2148
        %v2151 = vcombine.high %v1575, %v1575
        %v2153 = vunpack.c.l.s4 1983009808
        %v2154 = vunpack.c.0.s8 %v2153
        %v2155 = vlaneseq
        %v2156 = vshrl.u32 %v2155, 7
        %v2157 = vsub.s32 %v2154, %v2156
        %v2158 = vrot.slane %v1575, %v2157
        %v2160 = vunpack.c.l.s4 1983009808
        %v2161 = vunpack.c.0.s8 %v2160
        %v2162 = vlaneseq
        %v2163 = vshrl.u32 %v2162, 7
        %v2164 = vsub.s32 %v2161, %v2163
        %v2165 = vrot.slane %v2151, %v2164
        %v2166 = vcombine.high %v2158, %v2158
        %v2167 = vcombine.high %v2165, %v2165
        %v2168 = vcombine.high %v1576, %v1576
        %v2170 = vunpack.c.l.s4 1983009808
        %v2171 = vunpack.c.0.s8 %v2170
        %v2172 = vlaneseq
        %v2173 = vshrl.u32 %v2172, 7
        %v2174 = vsub.s32 %v2171, %v2173
        %v2175 = vrot.slane %v1576, %v2174
        %v2177 = vunpack.c.l.s4 1983009808
        %v2178 = vunpack.c.0.s8 %v2177
        %v2179 = vlaneseq
        %v2180 = vshrl.u32 %v2179, 7
        %v2181 = vsub.s32 %v2178, %v2180
        %v2182 = vrot.slane %v2168, %v2181
        %v2183 = vcombine.high %v2175, %v2175
        %v2184 = vcombine.high %v2182, %v2182
        %v2185 = vcombine.high %v1577, %v1577
        %v2187 = vunpack.c.l.s4 1983009808
        %v2188 = vunpack.c.0.s8 %v2187
        %v2189 = vlaneseq
        %v2190 = vshrl.u32 %v2189, 7
        %v2191 = vsub.s32 %v2188, %v2190
        %v2192 = vrot.slane %v1577, %v2191
        %v2194 = vunpack.c.l.s4 1983009808
        %v2195 = vunpack.c.0.s8 %v2194
        %v2196 = vlaneseq
        %v2197 = vshrl.u32 %v2196, 7
        %v2198 = vsub.s32 %v2195, %v2197
        %v2199 = vrot.slane %v2185, %v2198
        %v2200 = vcombine.high %v2192, %v2192
        %v2201 = vcombine.high %v2199, %v2199
        %v2202 = vcombine.high %v1578, %v1578
        %v2204 = vunpack.c.l.s4 1983009808
        %v2205 = vunpack.c.0.s8 %v2204
        %v2206 = vlaneseq
        %v2207 = vshrl.u32 %v2206, 7
        %v2208 = vsub.s32 %v2205, %v2207
        %v2209 = vrot.slane %v1578, %v2208
        %v2211 = vunpack.c.l.s4 1983009808
        %v2212 = vunpack.c.0.s8 %v2211
        %v2213 = vlaneseq
        %v2214 = vshrl.u32 %v2213, 7
        %v2215 = vsub.s32 %v2212, %v2214
        %v2216 = vrot.slane %v2202, %v2215
        %v2217 = vcombine.high %v2209, %v2209
        %v2218 = vcombine.high %v2216, %v2216
        %v2219 = vcombine.high %v1579, %v1579
        %v2221 = vunpack.c.l.s4 1983009808
        %v2222 = vunpack.c.0.s8 %v2221
        %v2223 = vlaneseq
        %v2224 = vshrl.u32 %v2223, 7
        %v2225 = vsub.s32 %v2222, %v2224
        %v2226 = vrot.slane %v1579, %v2225
        %v2228 = vunpack.c.l.s4 1983009808
        %v2229 = vunpack.c.0.s8 %v2228
        %v2230 = vlaneseq
        %v2231 = vshrl.u32 %v2230, 7
        %v2232 = vsub.s32 %v2229, %v2231
        %v2233 = vrot.slane %v2219, %v2232
        %v2234 = vcombine.high %v2226, %v2226
        %v2235 = vcombine.high %v2233, %v2233
        %v2236 = vcombine.high %v1580, %v1580
        %v2238 = vunpack.c.l.s4 1983009808
        %v2239 = vunpack.c.0.s8 %v2238
        %v2240 = vlaneseq
        %v2241 = vshrl.u32 %v2240, 7
        %v2242 = vsub.s32 %v2239, %v2241
        %v2243 = vrot.slane %v1580, %v2242
        %v2245 = vunpack.c.l.s4 1983009808
        %v2246 = vunpack.c.0.s8 %v2245
        %v2247 = vlaneseq
        %v2248 = vshrl.u32 %v2247, 7
        %v2249 = vsub.s32 %v2246, %v2248
        %v2250 = vrot.slane %v2236, %v2249
        %v2251 = vcombine.high %v2243, %v2243
        %v2252 = vcombine.high %v2250, %v2250
        %v2253 = vcombine.high %v1581, %v1581
        %v2255 = vunpack.c.l.s4 1983009808
        %v2256 = vunpack.c.0.s8 %v2255
        %v2257 = vlaneseq
        %v2258 = vshrl.u32 %v2257, 7
        %v2259 = vsub.s32 %v2256, %v2258
        %v2260 = vrot.slane %v1581, %v2259
        %v2262 = vunpack.c.l.s4 1983009808
        %v2263 = vunpack.c.0.s8 %v2262
        %v2264 = vlaneseq
        %v2265 = vshrl.u32 %v2264, 7
        %v2266 = vsub.s32 %v2263, %v2265
        %v2267 = vrot.slane %v2253, %v2266
        %v2268 = vcombine.high %v2260, %v2260
        %v2269 = vcombine.high %v2267, %v2267
        %v2270 = vcombine.high %v1582, %v1582
        %v2272 = vunpack.c.l.s4 1983009808
        %v2273 = vunpack.c.0.s8 %v2272
        %v2274 = vlaneseq
        %v2275 = vshrl.u32 %v2274, 7
        %v2276 = vsub.s32 %v2273, %v2275
        %v2277 = vrot.slane %v1582, %v2276
        %v2279 = vunpack.c.l.s4 1983009808
        %v2280 = vunpack.c.0.s8 %v2279
        %v2281 = vlaneseq
        %v2282 = vshrl.u32 %v2281, 7
        %v2283 = vsub.s32 %v2280, %v2282
        %v2284 = vrot.slane %v2270, %v2283
        %v2285 = vcombine.high %v2277, %v2277
        %v2286 = vcombine.high %v2284, %v2284
        %v2287 = vcombine.high %v1583, %v1583
        %v2289 = vunpack.c.l.s4 1983009808
        %v2290 = vunpack.c.0.s8 %v2289
        %v2291 = vlaneseq
        %v2292 = vshrl.u32 %v2291, 7
        %v2293 = vsub.s32 %v2290, %v2292
        %v2294 = vrot.slane %v1583, %v2293
        %v2296 = vunpack.c.l.s4 1983009808
        %v2297 = vunpack.c.0.s8 %v2296
        %v2298 = vlaneseq
        %v2299 = vshrl.u32 %v2298, 7
        %v2300 = vsub.s32 %v2297, %v2299
        %v2301 = vrot.slane %v2287, %v2300
        %v2302 = vcombine.high %v2294, %v2294
        %v2303 = vcombine.high %v2301, %v2301
        %v2304 = vcombine.high %v1584, %v1584
        %v2306 = vunpack.c.l.s4 1983009808
        %v2307 = vunpack.c.0.s8 %v2306
        %v2308 = vlaneseq
        %v2309 = vshrl.u32 %v2308, 7
        %v2310 = vsub.s32 %v2307, %v2309
        %v2311 = vrot.slane %v1584, %v2310
        %v2313 = vunpack.c.l.s4 1983009808
        %v2314 = vunpack.c.0.s8 %v2313
        %v2315 = vlaneseq
        %v2316 = vshrl.u32 %v2315, 7
        %v2317 = vsub.s32 %v2314, %v2316
        %v2318 = vrot.slane %v2304, %v2317
        %v2319 = vcombine.high %v2311, %v2311
        %v2320 = vcombine.high %v2318, %v2318
        %v2321 = vcombine.high %v1585, %v1585
        %v2323 = vunpack.c.l.s4 1983009808
        %v2324 = vunpack.c.0.s8 %v2323
        %v2325 = vlaneseq
        %v2326 = vshrl.u32 %v2325, 7
        %v2327 = vsub.s32 %v2324, %v2326
        %v2328 = vrot.slane %v1585, %v2327
        %v2330 = vunpack.c.l.s4 1983009808
        %v2331 = vunpack.c.0.s8 %v2330
        %v2332 = vlaneseq
        %v2333 = vshrl.u32 %v2332, 7
        %v2334 = vsub.s32 %v2331, %v2333
        %v2335 = vrot.slane %v2321, %v2334
        %v2336 = vcombine.high %v2328, %v2328
        %v2337 = vcombine.high %v2335, %v2335
        %v2338 = vcombine.high %v1586, %v1586
        %v2340 = vunpack.c.l.s4 1983009808
        %v2341 = vunpack.c.0.s8 %v2340
        %v2342 = vlaneseq
        %v2343 = vshrl.u32 %v2342, 7
        %v2344 = vsub.s32 %v2341, %v2343
        %v2345 = vrot.slane %v1586, %v2344
        %v2347 = vunpack.c.l.s4 1983009808
        %v2348 = vunpack.c.0.s8 %v2347
        %v2349 = vlaneseq
        %v2350 = vshrl.u32 %v2349, 7
        %v2351 = vsub.s32 %v2348, %v2350
        %v2352 = vrot.slane %v2338, %v2351
        %v2353 = vcombine.high %v2345, %v2345
        %v2354 = vcombine.high %v2352, %v2352
        %v2355 = vcombine.high %v1587, %v1587
        %v2357 = vunpack.c.l.s4 1983009808
        %v2358 = vunpack.c.0.s8 %v2357
        %v2359 = vlaneseq
        %v2360 = vshrl.u32 %v2359, 7
        %v2361 = vsub.s32 %v2358, %v2360
        %v2362 = vrot.slane %v1587, %v2361
        %v2364 = vunpack.c.l.s4 1983009808
        %v2365 = vunpack.c.0.s8 %v2364
        %v2366 = vlaneseq
        %v2367 = vshrl.u32 %v2366, 7
        %v2368 = vsub.s32 %v2365, %v2367
        %v2369 = vrot.slane %v2355, %v2368
        %v2370 = vcombine.high %v2362, %v2362
        %v2371 = vcombine.high %v2369, %v2369
        %v2372 = vcombine.high %v1588, %v1588
        %v2374 = vunpack.c.l.s4 1983009808
        %v2375 = vunpack.c.0.s8 %v2374
        %v2376 = vlaneseq
        %v2377 = vshrl.u32 %v2376, 7
        %v2378 = vsub.s32 %v2375, %v2377
        %v2379 = vrot.slane %v1588, %v2378
        %v2381 = vunpack.c.l.s4 1983009808
        %v2382 = vunpack.c.0.s8 %v2381
        %v2383 = vlaneseq
        %v2384 = vshrl.u32 %v2383, 7
        %v2385 = vsub.s32 %v2382, %v2384
        %v2386 = vrot.slane %v2372, %v2385
        %v2387 = vcombine.high %v2379, %v2379
        %v2388 = vcombine.high %v2386, %v2386
        %v2389 = vcombine.high %v1589, %v1589
        %v2391 = vunpack.c.l.s4 1983009808
        %v2392 = vunpack.c.0.s8 %v2391
        %v2393 = vlaneseq
        %v2394 = vshrl.u32 %v2393, 7
        %v2395 = vsub.s32 %v2392, %v2394
        %v2396 = vrot.slane %v1589, %v2395
        %v2398 = vunpack.c.l.s4 1983009808
        %v2399 = vunpack.c.0.s8 %v2398
        %v2400 = vlaneseq
        %v2401 = vshrl.u32 %v2400, 7
        %v2402 = vsub.s32 %v2399, %v2401
        %v2403 = vrot.slane %v2389, %v2402
        %v2404 = vcombine.high %v2396, %v2396
        %v2405 = vcombine.high %v2403, %v2403
        %v2406 = vcombine.high %v1590, %v1590
        %v2408 = vunpack.c.l.s4 1983009808
        %v2409 = vunpack.c.0.s8 %v2408
        %v2410 = vlaneseq
        %v2411 = vshrl.u32 %v2410, 7
        %v2412 = vsub.s32 %v2409, %v2411
        %v2413 = vrot.slane %v1590, %v2412
        %v2415 = vunpack.c.l.s4 1983009808
        %v2416 = vunpack.c.0.s8 %v2415
        %v2417 = vlaneseq
        %v2418 = vshrl.u32 %v2417, 7
        %v2419 = vsub.s32 %v2416, %v2418
        %v2420 = vrot.slane %v2406, %v2419
        %v2421 = vcombine.high %v2413, %v2413
        %v2422 = vcombine.high %v2420, %v2420
        %v2423 = vcombine.high %v1591, %v1591
        %v2425 = vunpack.c.l.s4 1983009808
        %v2426 = vunpack.c.0.s8 %v2425
        %v2427 = vlaneseq
        %v2428 = vshrl.u32 %v2427, 7
        %v2429 = vsub.s32 %v2426, %v2428
        %v2430 = vrot.slane %v1591, %v2429
        %v2432 = vunpack.c.l.s4 1983009808
        %v2433 = vunpack.c.0.s8 %v2432
        %v2434 = vlaneseq
        %v2435 = vshrl.u32 %v2434, 7
        %v2436 = vsub.s32 %v2433, %v2435
        %v2437 = vrot.slane %v2423, %v2436
        %v2438 = vcombine.high %v2430, %v2430
        %v2439 = vcombine.high %v2437, %v2437
        %v2440 = vcombine.high %v1592, %v1592
        %v2442 = vunpack.c.l.s4 1983009808
        %v2443 = vunpack.c.0.s8 %v2442
        %v2444 = vlaneseq
        %v2445 = vshrl.u32 %v2444, 7
        %v2446 = vsub.s32 %v2443, %v2445
        %v2447 = vrot.slane %v1592, %v2446
        %v2449 = vunpack.c.l.s4 1983009808
        %v2450 = vunpack.c.0.s8 %v2449
        %v2451 = vlaneseq
        %v2452 = vshrl.u32 %v2451, 7
        %v2453 = vsub.s32 %v2450, %v2452
        %v2454 = vrot.slane %v2440, %v2453
        %v2455 = vcombine.high %v2447, %v2447
        %v2456 = vcombine.high %v2454, %v2454
        %v2457 = vcombine.high %v1593, %v1593
        %v2459 = vunpack.c.l.s4 1983009808
        %v2460 = vunpack.c.0.s8 %v2459
        %v2461 = vlaneseq
        %v2462 = vshrl.u32 %v2461, 7
        %v2463 = vsub.s32 %v2460, %v2462
        %v2464 = vrot.slane %v1593, %v2463
        %v2466 = vunpack.c.l.s4 1983009808
        %v2467 = vunpack.c.0.s8 %v2466
        %v2468 = vlaneseq
        %v2469 = vshrl.u32 %v2468, 7
        %v2470 = vsub.s32 %v2467, %v2469
        %v2471 = vrot.slane %v2457, %v2470
        %v2472 = vcombine.high %v2464, %v2464
        %v2473 = vcombine.high %v2471, %v2471
        %v2474 = vcombine.high %v1594, %v1594
        %v2476 = vunpack.c.l.s4 1983009808
        %v2477 = vunpack.c.0.s8 %v2476
        %v2478 = vlaneseq
        %v2479 = vshrl.u32 %v2478, 7
        %v2480 = vsub.s32 %v2477, %v2479
        %v2481 = vrot.slane %v1594, %v2480
        %v2483 = vunpack.c.l.s4 1983009808
        %v2484 = vunpack.c.0.s8 %v2483
        %v2485 = vlaneseq
        %v2486 = vshrl.u32 %v2485, 7
        %v2487 = vsub.s32 %v2484, %v2486
        %v2488 = vrot.slane %v2474, %v2487
        %v2489 = vcombine.high %v2481, %v2481
        %v2490 = vcombine.high %v2488, %v2488
        %v2491 = vcombine.high %v1595, %v1595
        %v2493 = vunpack.c.l.s4 1983009808
        %v2494 = vunpack.c.0.s8 %v2493
        %v2495 = vlaneseq
        %v2496 = vshrl.u32 %v2495, 7
        %v2497 = vsub.s32 %v2494, %v2496
        %v2498 = vrot.slane %v1595, %v2497
        %v2500 = vunpack.c.l.s4 1983009808
        %v2501 = vunpack.c.0.s8 %v2500
        %v2502 = vlaneseq
        %v2503 = vshrl.u32 %v2502, 7
        %v2504 = vsub.s32 %v2501, %v2503
        %v2505 = vrot.slane %v2491, %v2504
        %v2506 = vcombine.high %v2498, %v2498
        %v2507 = vcombine.high %v2505, %v2505
        %v2508 = vcombine.high %v1596, %v1596
        %v2510 = vunpack.c.l.s4 1983009808
        %v2511 = vunpack.c.0.s8 %v2510
        %v2512 = vlaneseq
        %v2513 = vshrl.u32 %v2512, 7
        %v2514 = vsub.s32 %v2511, %v2513
        %v2515 = vrot.slane %v1596, %v2514
        %v2517 = vunpack.c.l.s4 1983009808
        %v2518 = vunpack.c.0.s8 %v2517
        %v2519 = vlaneseq
        %v2520 = vshrl.u32 %v2519, 7
        %v2521 = vsub.s32 %v2518, %v2520
        %v2522 = vrot.slane %v2508, %v2521
        %v2523 = vcombine.high %v2515, %v2515
        %v2524 = vcombine.high %v2522, %v2522
        %v2525 = vcombine.high %v1597, %v1597
        %v2527 = vunpack.c.l.s4 1983009808
        %v2528 = vunpack.c.0.s8 %v2527
        %v2529 = vlaneseq
        %v2530 = vshrl.u32 %v2529, 7
        %v2531 = vsub.s32 %v2528, %v2530
        %v2532 = vrot.slane %v1597, %v2531
        %v2534 = vunpack.c.l.s4 1983009808
        %v2535 = vunpack.c.0.s8 %v2534
        %v2536 = vlaneseq
        %v2537 = vshrl.u32 %v2536, 7
        %v2538 = vsub.s32 %v2535, %v2537
        %v2539 = vrot.slane %v2525, %v2538
        %v2540 = vcombine.high %v2532, %v2532
        %v2541 = vcombine.high %v2539, %v2539
        %v2542 = vcombine.high %v1598, %v1598
        %v2544 = vunpack.c.l.s4 1983009808
        %v2545 = vunpack.c.0.s8 %v2544
        %v2546 = vlaneseq
        %v2547 = vshrl.u32 %v2546, 7
        %v2548 = vsub.s32 %v2545, %v2547
        %v2549 = vrot.slane %v1598, %v2548
        %v2551 = vunpack.c.l.s4 1983009808
        %v2552 = vunpack.c.0.s8 %v2551
        %v2553 = vlaneseq
        %v2554 = vshrl.u32 %v2553, 7
        %v2555 = vsub.s32 %v2552, %v2554
        %v2556 = vrot.slane %v2542, %v2555
        %v2557 = vcombine.high %v2549, %v2549
        %v2558 = vcombine.high %v2556, %v2556
        %v2559 = vcombine.high %v1599, %v1599
        %v2561 = vunpack.c.l.s4 1983009808
        %v2562 = vunpack.c.0.s8 %v2561
        %v2563 = vlaneseq
        %v2564 = vshrl.u32 %v2563, 7
        %v2565 = vsub.s32 %v2562, %v2564
        %v2566 = vrot.slane %v1599, %v2565
        %v2568 = vunpack.c.l.s4 1983009808
        %v2569 = vunpack.c.0.s8 %v2568
        %v2570 = vlaneseq
        %v2571 = vshrl.u32 %v2570, 7
        %v2572 = vsub.s32 %v2569, %v2571
        %v2573 = vrot.slane %v2559, %v2572
        %v2574 = vcombine.high %v2566, %v2566
        %v2575 = vcombine.high %v2573, %v2573
        %v2576 = vcombine.high %v1600, %v1600
        %v2578 = vunpack.c.l.s4 1983009808
        %v2579 = vunpack.c.0.s8 %v2578
        %v2580 = vlaneseq
        %v2581 = vshrl.u32 %v2580, 7
        %v2582 = vsub.s32 %v2579, %v2581
        %v2583 = vrot.slane %v1600, %v2582
        %v2585 = vunpack.c.l.s4 1983009808
        %v2586 = vunpack.c.0.s8 %v2585
        %v2587 = vlaneseq
        %v2588 = vshrl.u32 %v2587, 7
        %v2589 = vsub.s32 %v2586, %v2588
        %v2590 = vrot.slane %v2576, %v2589
        %v2591 = vcombine.high %v2583, %v2583
        %v2592 = vcombine.high %v2590, %v2590
        %v2593 = vcombine.high %v1601, %v1601
        %v2595 = vunpack.c.l.s4 1983009808
        %v2596 = vunpack.c.0.s8 %v2595
        %v2597 = vlaneseq
        %v2598 = vshrl.u32 %v2597, 7
        %v2599 = vsub.s32 %v2596, %v2598
        %v2600 = vrot.slane %v1601, %v2599
        %v2602 = vunpack.c.l.s4 1983009808
        %v2603 = vunpack.c.0.s8 %v2602
        %v2604 = vlaneseq
        %v2605 = vshrl.u32 %v2604, 7
        %v2606 = vsub.s32 %v2603, %v2605
        %v2607 = vrot.slane %v2593, %v2606
        %v2608 = vcombine.high %v2600, %v2600
        %v2609 = vcombine.high %v2607, %v2607
        %v2610 = vcombine.high %v1602, %v1602
        %v2612 = vunpack.c.l.s4 1983009808
        %v2613 = vunpack.c.0.s8 %v2612
        %v2614 = vlaneseq
        %v2615 = vshrl.u32 %v2614, 7
        %v2616 = vsub.s32 %v2613, %v2615
        %v2617 = vrot.slane %v1602, %v2616
        %v2619 = vunpack.c.l.s4 1983009808
        %v2620 = vunpack.c.0.s8 %v2619
        %v2621 = vlaneseq
        %v2622 = vshrl.u32 %v2621, 7
        %v2623 = vsub.s32 %v2620, %v2622
        %v2624 = vrot.slane %v2610, %v2623
        %v2625 = vcombine.high %v2617, %v2617
        %v2626 = vcombine.high %v2624, %v2624
        %v2627 = vcombine.high %v1603, %v1603
        %v2629 = vunpack.c.l.s4 1983009808
        %v2630 = vunpack.c.0.s8 %v2629
        %v2631 = vlaneseq
        %v2632 = vshrl.u32 %v2631, 7
        %v2633 = vsub.s32 %v2630, %v2632
        %v2634 = vrot.slane %v1603, %v2633
        %v2636 = vunpack.c.l.s4 1983009808
        %v2637 = vunpack.c.0.s8 %v2636
        %v2638 = vlaneseq
        %v2639 = vshrl.u32 %v2638, 7
        %v2640 = vsub.s32 %v2637, %v2639
        %v2641 = vrot.slane %v2627, %v2640
        %v2642 = vcombine.high %v2634, %v2634
        %v2643 = vcombine.high %v2641, %v2641
        %v2644 = vcombine.high %v1604, %v1604
        %v2646 = vunpack.c.l.s4 1983009808
        %v2647 = vunpack.c.0.s8 %v2646
        %v2648 = vlaneseq
        %v2649 = vshrl.u32 %v2648, 7
        %v2650 = vsub.s32 %v2647, %v2649
        %v2651 = vrot.slane %v1604, %v2650
        %v2653 = vunpack.c.l.s4 1983009808
        %v2654 = vunpack.c.0.s8 %v2653
        %v2655 = vlaneseq
        %v2656 = vshrl.u32 %v2655, 7
        %v2657 = vsub.s32 %v2654, %v2656
        %v2658 = vrot.slane %v2644, %v2657
        %v2659 = vcombine.high %v2651, %v2651
        %v2660 = vcombine.high %v2658, %v2658
        %v2661 = vcombine.high %v1605, %v1605
        %v2663 = vunpack.c.l.s4 1983009808
        %v2664 = vunpack.c.0.s8 %v2663
        %v2665 = vlaneseq
        %v2666 = vshrl.u32 %v2665, 7
        %v2667 = vsub.s32 %v2664, %v2666
        %v2668 = vrot.slane %v1605, %v2667
        %v2670 = vunpack.c.l.s4 1983009808
        %v2671 = vunpack.c.0.s8 %v2670
        %v2672 = vlaneseq
        %v2673 = vshrl.u32 %v2672, 7
        %v2674 = vsub.s32 %v2671, %v2673
        %v2675 = vrot.slane %v2661, %v2674
        %v2676 = vcombine.high %v2668, %v2668
        %v2677 = vcombine.high %v2675, %v2675
        %v2678 = vcombine.high %v1606, %v1606
        %v2680 = vunpack.c.l.s4 1983009808
        %v2681 = vunpack.c.0.s8 %v2680
        %v2682 = vlaneseq
        %v2683 = vshrl.u32 %v2682, 7
        %v2684 = vsub.s32 %v2681, %v2683
        %v2685 = vrot.slane %v1606, %v2684
        %v2687 = vunpack.c.l.s4 1983009808
        %v2688 = vunpack.c.0.s8 %v2687
        %v2689 = vlaneseq
        %v2690 = vshrl.u32 %v2689, 7
        %v2691 = vsub.s32 %v2688, %v2690
        %v2692 = vrot.slane %v2678, %v2691
        %v2693 = vcombine.high %v2685, %v2685
        %v2694 = vcombine.high %v2692, %v2692
        %v2695 = vcombine.high %v1607, %v1607
        %v2697 = vunpack.c.l.s4 1983009808
        %v2698 = vunpack.c.0.s8 %v2697
        %v2699 = vlaneseq
        %v2700 = vshrl.u32 %v2699, 7
        %v2701 = vsub.s32 %v2698, %v2700
        %v2702 = vrot.slane %v1607, %v2701
        %v2704 = vunpack.c.l.s4 1983009808
        %v2705 = vunpack.c.0.s8 %v2704
        %v2706 = vlaneseq
        %v2707 = vshrl.u32 %v2706, 7
        %v2708 = vsub.s32 %v2705, %v2707
        %v2709 = vrot.slane %v2695, %v2708
        %v2710 = vcombine.high %v2702, %v2702
        %v2711 = vcombine.high %v2709, %v2709
        %v2712 = vcombine.high %v1608, %v1608
        %v2714 = vunpack.c.l.s4 1983009808
        %v2715 = vunpack.c.0.s8 %v2714
        %v2716 = vlaneseq
        %v2717 = vshrl.u32 %v2716, 7
        %v2718 = vsub.s32 %v2715, %v2717
        %v2719 = vrot.slane %v1608, %v2718
        %v2721 = vunpack.c.l.s4 1983009808
        %v2722 = vunpack.c.0.s8 %v2721
        %v2723 = vlaneseq
        %v2724 = vshrl.u32 %v2723, 7
        %v2725 = vsub.s32 %v2722, %v2724
        %v2726 = vrot.slane %v2712, %v2725
        %v2727 = vcombine.high %v2719, %v2719
        %v2728 = vcombine.high %v2726, %v2726
        %v2729 = vcombine.high %v1609, %v1609
        %v2731 = vunpack.c.l.s4 1983009808
        %v2732 = vunpack.c.0.s8 %v2731
        %v2733 = vlaneseq
        %v2734 = vshrl.u32 %v2733, 7
        %v2735 = vsub.s32 %v2732, %v2734
        %v2736 = vrot.slane %v1609, %v2735
        %v2738 = vunpack.c.l.s4 1983009808
        %v2739 = vunpack.c.0.s8 %v2738
        %v2740 = vlaneseq
        %v2741 = vshrl.u32 %v2740, 7
        %v2742 = vsub.s32 %v2739, %v2741
        %v2743 = vrot.slane %v2729, %v2742
        %v2744 = vcombine.high %v2736, %v2736
        %v2745 = vcombine.high %v2743, %v2743
        %v2746 = vcombine.high %v1610, %v1610
        %v2748 = vunpack.c.l.s4 1983009808
        %v2749 = vunpack.c.0.s8 %v2748
        %v2750 = vlaneseq
        %v2751 = vshrl.u32 %v2750, 7
        %v2752 = vsub.s32 %v2749, %v2751
        %v2753 = vrot.slane %v1610, %v2752
        %v2755 = vunpack.c.l.s4 1983009808
        %v2756 = vunpack.c.0.s8 %v2755
        %v2757 = vlaneseq
        %v2758 = vshrl.u32 %v2757, 7
        %v2759 = vsub.s32 %v2756, %v2758
        %v2760 = vrot.slane %v2746, %v2759
        %v2761 = vcombine.high %v2753, %v2753
        %v2762 = vcombine.high %v2760, %v2760
        %vm3019 = vcmask 1041408
        %v3020 = vsel %vm3019, %v1682, -inf
        %v3021 = vrot.slane %v3020, 4
        %v3022 = vmax.f32 %v3020, %v3021
        %v3023 = vrot.slane %v3022, 2
        %v3024 = vmax.f32 %v3022, %v3023
        %v3025 = vrot.slane %v3024, 1
        %v3026 = vmax.f32 %v3024, %v3025
        %v3027 = vsel %vm3019, %v1690, -inf
        %v3028 = vrot.slane %v3027, 4
        %v3029 = vmax.f32 %v3027, %v3028
        %v3030 = vrot.slane %v3029, 2
        %v3031 = vmax.f32 %v3029, %v3030
        %v3032 = vrot.slane %v3031, 1
        %v3033 = vmax.f32 %v3031, %v3032
        %v3034 = vsel %vm3019, %v1689, -inf
        %v3035 = vrot.slane %v3034, 4
        %v3036 = vmax.f32 %v3034, %v3035
        %v3037 = vrot.slane %v3036, 2
        %v3038 = vmax.f32 %v3036, %v3037
        %v3039 = vrot.slane %v3038, 1
        %v3040 = vmax.f32 %v3038, %v3039
        %v3041 = vsel %vm3019, %v1691, -inf
        %v3042 = vrot.slane %v3041, 4
        %v3043 = vmax.f32 %v3041, %v3042
        %v3044 = vrot.slane %v3043, 2
        %v3045 = vmax.f32 %v3043, %v3044
        %v3046 = vrot.slane %v3045, 1
        %v3047 = vmax.f32 %v3045, %v3046
        %v3048 = vsel %vm3019, %v1699, -inf
        %v3049 = vrot.slane %v3048, 4
        %v3050 = vmax.f32 %v3048, %v3049
        %v3051 = vrot.slane %v3050, 2
        %v3052 = vmax.f32 %v3050, %v3051
        %v3053 = vrot.slane %v3052, 1
        %v3054 = vmax.f32 %v3052, %v3053
        %v3055 = vsel %vm3019, %v1707, -inf
        %v3056 = vrot.slane %v3055, 4
        %v3057 = vmax.f32 %v3055, %v3056
        %v3058 = vrot.slane %v3057, 2
        %v3059 = vmax.f32 %v3057, %v3058
        %v3060 = vrot.slane %v3059, 1
        %v3061 = vmax.f32 %v3059, %v3060
        %v3062 = vsel %vm3019, %v1706, -inf
        %v3063 = vrot.slane %v3062, 4
        %v3064 = vmax.f32 %v3062, %v3063
        %v3065 = vrot.slane %v3064, 2
        %v3066 = vmax.f32 %v3064, %v3065
        %v3067 = vrot.slane %v3066, 1
        %v3068 = vmax.f32 %v3066, %v3067
        %v3069 = vsel %vm3019, %v1708, -inf
        %v3070 = vrot.slane %v3069, 4
        %v3071 = vmax.f32 %v3069, %v3070
        %v3072 = vrot.slane %v3071, 2
        %v3073 = vmax.f32 %v3071, %v3072
        %v3074 = vrot.slane %v3073, 1
        %v3075 = vmax.f32 %v3073, %v3074
        %v3076 = vsel %vm3019, %v1716, -inf
        %v3077 = vrot.slane %v3076, 4
        %v3078 = vmax.f32 %v3076, %v3077
        %v3079 = vrot.slane %v3078, 2
        %v3080 = vmax.f32 %v3078, %v3079
        %v3081 = vrot.slane %v3080, 1
        %v3082 = vmax.f32 %v3080, %v3081
        %v3083 = vsel %vm3019, %v1724, -inf
        %v3084 = vrot.slane %v3083, 4
        %v3085 = vmax.f32 %v3083, %v3084
        %v3086 = vrot.slane %v3085, 2
        %v3087 = vmax.f32 %v3085, %v3086
        %v3088 = vrot.slane %v3087, 1
        %v3089 = vmax.f32 %v3087, %v3088
        %v3090 = vsel %vm3019, %v1723, -inf
        %v3091 = vrot.slane %v3090, 4
        %v3092 = vmax.f32 %v3090, %v3091
        %v3093 = vrot.slane %v3092, 2
        %v3094 = vmax.f32 %v3092, %v3093
        %v3095 = vrot.slane %v3094, 1
        %v3096 = vmax.f32 %v3094, %v3095
        %v3097 = vsel %vm3019, %v1725, -inf
        %v3098 = vrot.slane %v3097, 4
        %v3099 = vmax.f32 %v3097, %v3098
        %v3100 = vrot.slane %v3099, 2
        %v3101 = vmax.f32 %v3099, %v3100
        %v3102 = vrot.slane %v3101, 1
        %v3103 = vmax.f32 %v3101, %v3102
        %v3104 = vsel %vm3019, %v1733, -inf
        %v3105 = vrot.slane %v3104, 4
        %v3106 = vmax.f32 %v3104, %v3105
        %v3107 = vrot.slane %v3106, 2
        %v3108 = vmax.f32 %v3106, %v3107
        %v3109 = vrot.slane %v3108, 1
        %v3110 = vmax.f32 %v3108, %v3109
        %v3111 = vsel %vm3019, %v1741, -inf
        %v3112 = vrot.slane %v3111, 4
        %v3113 = vmax.f32 %v3111, %v3112
        %v3114 = vrot.slane %v3113, 2
        %v3115 = vmax.f32 %v3113, %v3114
        %v3116 = vrot.slane %v3115, 1
        %v3117 = vmax.f32 %v3115, %v3116
        %v3118 = vsel %vm3019, %v1740, -inf
        %v3119 = vrot.slane %v3118, 4
        %v3120 = vmax.f32 %v3118, %v3119
        %v3121 = vrot.slane %v3120, 2
        %v3122 = vmax.f32 %v3120, %v3121
        %v3123 = vrot.slane %v3122, 1
        %v3124 = vmax.f32 %v3122, %v3123
        %v3125 = vsel %vm3019, %v1742, -inf
        %v3126 = vrot.slane %v3125, 4
        %v3127 = vmax.f32 %v3125, %v3126
        %v3128 = vrot.slane %v3127, 2
        %v3129 = vmax.f32 %v3127, %v3128
        %v3130 = vrot.slane %v3129, 1
        %v3131 = vmax.f32 %v3129, %v3130
        %v3132 = vsel %vm3019, %v1750, -inf
        %v3133 = vrot.slane %v3132, 4
        %v3134 = vmax.f32 %v3132, %v3133
        %v3135 = vrot.slane %v3134, 2
        %v3136 = vmax.f32 %v3134, %v3135
        %v3137 = vrot.slane %v3136, 1
        %v3138 = vmax.f32 %v3136, %v3137
        %v3139 = vsel %vm3019, %v1758, -inf
        %v3140 = vrot.slane %v3139, 4
        %v3141 = vmax.f32 %v3139, %v3140
        %v3142 = vrot.slane %v3141, 2
        %v3143 = vmax.f32 %v3141, %v3142
        %v3144 = vrot.slane %v3143, 1
        %v3145 = vmax.f32 %v3143, %v3144
        %v3146 = vsel %vm3019, %v1757, -inf
        %v3147 = vrot.slane %v3146, 4
        %v3148 = vmax.f32 %v3146, %v3147
        %v3149 = vrot.slane %v3148, 2
        %v3150 = vmax.f32 %v3148, %v3149
        %v3151 = vrot.slane %v3150, 1
        %v3152 = vmax.f32 %v3150, %v3151
        %v3153 = vsel %vm3019, %v1759, -inf
        %v3154 = vrot.slane %v3153, 4
        %v3155 = vmax.f32 %v3153, %v3154
        %v3156 = vrot.slane %v3155, 2
        %v3157 = vmax.f32 %v3155, %v3156
        %v3158 = vrot.slane %v3157, 1
        %v3159 = vmax.f32 %v3157, %v3158
        %v3160 = vsel %vm3019, %v1767, -inf
        %v3161 = vrot.slane %v3160, 4
        %v3162 = vmax.f32 %v3160, %v3161
        %v3163 = vrot.slane %v3162, 2
        %v3164 = vmax.f32 %v3162, %v3163
        %v3165 = vrot.slane %v3164, 1
        %v3166 = vmax.f32 %v3164, %v3165
        %v3167 = vsel %vm3019, %v1775, -inf
        %v3168 = vrot.slane %v3167, 4
        %v3169 = vmax.f32 %v3167, %v3168
        %v3170 = vrot.slane %v3169, 2
        %v3171 = vmax.f32 %v3169, %v3170
        %v3172 = vrot.slane %v3171, 1
        %v3173 = vmax.f32 %v3171, %v3172
        %v3174 = vsel %vm3019, %v1774, -inf
        %v3175 = vrot.slane %v3174, 4
        %v3176 = vmax.f32 %v3174, %v3175
        %v3177 = vrot.slane %v3176, 2
        %v3178 = vmax.f32 %v3176, %v3177
        %v3179 = vrot.slane %v3178, 1
        %v3180 = vmax.f32 %v3178, %v3179
        %v3181 = vsel %vm3019, %v1776, -inf
        %v3182 = vrot.slane %v3181, 4
        %v3183 = vmax.f32 %v3181, %v3182
        %v3184 = vrot.slane %v3183, 2
        %v3185 = vmax.f32 %v3183, %v3184
        %v3186 = vrot.slane %v3185, 1
        %v3187 = vmax.f32 %v3185, %v3186
        %v3188 = vsel %vm3019, %v1784, -inf
        %v3189 = vrot.slane %v3188, 4
        %v3190 = vmax.f32 %v3188, %v3189
        %v3191 = vrot.slane %v3190, 2
        %v3192 = vmax.f32 %v3190, %v3191
        %v3193 = vrot.slane %v3192, 1
        %v3194 = vmax.f32 %v3192, %v3193
        %v3195 = vsel %vm3019, %v1792, -inf
        %v3196 = vrot.slane %v3195, 4
        %v3197 = vmax.f32 %v3195, %v3196
        %v3198 = vrot.slane %v3197, 2
        %v3199 = vmax.f32 %v3197, %v3198
        %v3200 = vrot.slane %v3199, 1
        %v3201 = vmax.f32 %v3199, %v3200
        %v3202 = vsel %vm3019, %v1791, -inf
        %v3203 = vrot.slane %v3202, 4
        %v3204 = vmax.f32 %v3202, %v3203
        %v3205 = vrot.slane %v3204, 2
        %v3206 = vmax.f32 %v3204, %v3205
        %v3207 = vrot.slane %v3206, 1
        %v3208 = vmax.f32 %v3206, %v3207
        %v3209 = vsel %vm3019, %v1793, -inf
        %v3210 = vrot.slane %v3209, 4
        %v3211 = vmax.f32 %v3209, %v3210
        %v3212 = vrot.slane %v3211, 2
        %v3213 = vmax.f32 %v3211, %v3212
        %v3214 = vrot.slane %v3213, 1
        %v3215 = vmax.f32 %v3213, %v3214
        %v3216 = vsel %vm3019, %v1801, -inf
        %v3217 = vrot.slane %v3216, 4
        %v3218 = vmax.f32 %v3216, %v3217
        %v3219 = vrot.slane %v3218, 2
        %v3220 = vmax.f32 %v3218, %v3219
        %v3221 = vrot.slane %v3220, 1
        %v3222 = vmax.f32 %v3220, %v3221
        %v3223 = vsel %vm3019, %v1809, -inf
        %v3224 = vrot.slane %v3223, 4
        %v3225 = vmax.f32 %v3223, %v3224
        %v3226 = vrot.slane %v3225, 2
        %v3227 = vmax.f32 %v3225, %v3226
        %v3228 = vrot.slane %v3227, 1
        %v3229 = vmax.f32 %v3227, %v3228
        %v3230 = vsel %vm3019, %v1808, -inf
        %v3231 = vrot.slane %v3230, 4
        %v3232 = vmax.f32 %v3230, %v3231
        %v3233 = vrot.slane %v3232, 2
        %v3234 = vmax.f32 %v3232, %v3233
        %v3235 = vrot.slane %v3234, 1
        %v3236 = vmax.f32 %v3234, %v3235
        %v3237 = vsel %vm3019, %v1810, -inf
        %v3238 = vrot.slane %v3237, 4
        %v3239 = vmax.f32 %v3237, %v3238
        %v3240 = vrot.slane %v3239, 2
        %v3241 = vmax.f32 %v3239, %v3240
        %v3242 = vrot.slane %v3241, 1
        %v3243 = vmax.f32 %v3241, %v3242
        %v3244 = vsel %vm3019, %v1818, -inf
        %v3245 = vrot.slane %v3244, 4
        %v3246 = vmax.f32 %v3244, %v3245
        %v3247 = vrot.slane %v3246, 2
        %v3248 = vmax.f32 %v3246, %v3247
        %v3249 = vrot.slane %v3248, 1
        %v3250 = vmax.f32 %v3248, %v3249
        %v3251 = vsel %vm3019, %v1826, -inf
        %v3252 = vrot.slane %v3251, 4
        %v3253 = vmax.f32 %v3251, %v3252
        %v3254 = vrot.slane %v3253, 2
        %v3255 = vmax.f32 %v3253, %v3254
        %v3256 = vrot.slane %v3255, 1
        %v3257 = vmax.f32 %v3255, %v3256
        %v3258 = vsel %vm3019, %v1825, -inf
        %v3259 = vrot.slane %v3258, 4
        %v3260 = vmax.f32 %v3258, %v3259
        %v3261 = vrot.slane %v3260, 2
        %v3262 = vmax.f32 %v3260, %v3261
        %v3263 = vrot.slane %v3262, 1
        %v3264 = vmax.f32 %v3262, %v3263
        %v3265 = vsel %vm3019, %v1827, -inf
        %v3266 = vrot.slane %v3265, 4
        %v3267 = vmax.f32 %v3265, %v3266
        %v3268 = vrot.slane %v3267, 2
        %v3269 = vmax.f32 %v3267, %v3268
        %v3270 = vrot.slane %v3269, 1
        %v3271 = vmax.f32 %v3269, %v3270
        %v3272 = vsel %vm3019, %v1835, -inf
        %v3273 = vrot.slane %v3272, 4
        %v3274 = vmax.f32 %v3272, %v3273
        %v3275 = vrot.slane %v3274, 2
        %v3276 = vmax.f32 %v3274, %v3275
        %v3277 = vrot.slane %v3276, 1
        %v3278 = vmax.f32 %v3276, %v3277
        %v3279 = vsel %vm3019, %v1843, -inf
        %v3280 = vrot.slane %v3279, 4
        %v3281 = vmax.f32 %v3279, %v3280
        %v3282 = vrot.slane %v3281, 2
        %v3283 = vmax.f32 %v3281, %v3282
        %v3284 = vrot.slane %v3283, 1
        %v3285 = vmax.f32 %v3283, %v3284
        %v3286 = vsel %vm3019, %v1842, -inf
        %v3287 = vrot.slane %v3286, 4
        %v3288 = vmax.f32 %v3286, %v3287
        %v3289 = vrot.slane %v3288, 2
        %v3290 = vmax.f32 %v3288, %v3289
        %v3291 = vrot.slane %v3290, 1
        %v3292 = vmax.f32 %v3290, %v3291
        %v3293 = vsel %vm3019, %v1844, -inf
        %v3294 = vrot.slane %v3293, 4
        %v3295 = vmax.f32 %v3293, %v3294
        %v3296 = vrot.slane %v3295, 2
        %v3297 = vmax.f32 %v3295, %v3296
        %v3298 = vrot.slane %v3297, 1
        %v3299 = vmax.f32 %v3297, %v3298
        %v3300 = vsel %vm3019, %v1852, -inf
        %v3301 = vrot.slane %v3300, 4
        %v3302 = vmax.f32 %v3300, %v3301
        %v3303 = vrot.slane %v3302, 2
        %v3304 = vmax.f32 %v3302, %v3303
        %v3305 = vrot.slane %v3304, 1
        %v3306 = vmax.f32 %v3304, %v3305
        %v3307 = vsel %vm3019, %v1860, -inf
        %v3308 = vrot.slane %v3307, 4
        %v3309 = vmax.f32 %v3307, %v3308
        %v3310 = vrot.slane %v3309, 2
        %v3311 = vmax.f32 %v3309, %v3310
        %v3312 = vrot.slane %v3311, 1
        %v3313 = vmax.f32 %v3311, %v3312
        %v3314 = vsel %vm3019, %v1859, -inf
        %v3315 = vrot.slane %v3314, 4
        %v3316 = vmax.f32 %v3314, %v3315
        %v3317 = vrot.slane %v3316, 2
        %v3318 = vmax.f32 %v3316, %v3317
        %v3319 = vrot.slane %v3318, 1
        %v3320 = vmax.f32 %v3318, %v3319
        %v3321 = vsel %vm3019, %v1861, -inf
        %v3322 = vrot.slane %v3321, 4
        %v3323 = vmax.f32 %v3321, %v3322
        %v3324 = vrot.slane %v3323, 2
        %v3325 = vmax.f32 %v3323, %v3324
        %v3326 = vrot.slane %v3325, 1
        %v3327 = vmax.f32 %v3325, %v3326
        %v3328 = vsel %vm3019, %v1869, -inf
        %v3329 = vrot.slane %v3328, 4
        %v3330 = vmax.f32 %v3328, %v3329
        %v3331 = vrot.slane %v3330, 2
        %v3332 = vmax.f32 %v3330, %v3331
        %v3333 = vrot.slane %v3332, 1
        %v3334 = vmax.f32 %v3332, %v3333
        %v3335 = vsel %vm3019, %v1877, -inf
        %v3336 = vrot.slane %v3335, 4
        %v3337 = vmax.f32 %v3335, %v3336
        %v3338 = vrot.slane %v3337, 2
        %v3339 = vmax.f32 %v3337, %v3338
        %v3340 = vrot.slane %v3339, 1
        %v3341 = vmax.f32 %v3339, %v3340
        %v3342 = vsel %vm3019, %v1876, -inf
        %v3343 = vrot.slane %v3342, 4
        %v3344 = vmax.f32 %v3342, %v3343
        %v3345 = vrot.slane %v3344, 2
        %v3346 = vmax.f32 %v3344, %v3345
        %v3347 = vrot.slane %v3346, 1
        %v3348 = vmax.f32 %v3346, %v3347
        %v3349 = vsel %vm3019, %v1878, -inf
        %v3350 = vrot.slane %v3349, 4
        %v3351 = vmax.f32 %v3349, %v3350
        %v3352 = vrot.slane %v3351, 2
        %v3353 = vmax.f32 %v3351, %v3352
        %v3354 = vrot.slane %v3353, 1
        %v3355 = vmax.f32 %v3353, %v3354
        %v3356 = vsel %vm3019, %v1886, -inf
        %v3357 = vrot.slane %v3356, 4
        %v3358 = vmax.f32 %v3356, %v3357
        %v3359 = vrot.slane %v3358, 2
        %v3360 = vmax.f32 %v3358, %v3359
        %v3361 = vrot.slane %v3360, 1
        %v3362 = vmax.f32 %v3360, %v3361
        %v3363 = vsel %vm3019, %v1894, -inf
        %v3364 = vrot.slane %v3363, 4
        %v3365 = vmax.f32 %v3363, %v3364
        %v3366 = vrot.slane %v3365, 2
        %v3367 = vmax.f32 %v3365, %v3366
        %v3368 = vrot.slane %v3367, 1
        %v3369 = vmax.f32 %v3367, %v3368
        %v3370 = vsel %vm3019, %v1893, -inf
        %v3371 = vrot.slane %v3370, 4
        %v3372 = vmax.f32 %v3370, %v3371
        %v3373 = vrot.slane %v3372, 2
        %v3374 = vmax.f32 %v3372, %v3373
        %v3375 = vrot.slane %v3374, 1
        %v3376 = vmax.f32 %v3374, %v3375
        %v3377 = vsel %vm3019, %v1895, -inf
        %v3378 = vrot.slane %v3377, 4
        %v3379 = vmax.f32 %v3377, %v3378
        %v3380 = vrot.slane %v3379, 2
        %v3381 = vmax.f32 %v3379, %v3380
        %v3382 = vrot.slane %v3381, 1
        %v3383 = vmax.f32 %v3381, %v3382
        %v3384 = vsel %vm3019, %v1903, -inf
        %v3385 = vrot.slane %v3384, 4
        %v3386 = vmax.f32 %v3384, %v3385
        %v3387 = vrot.slane %v3386, 2
        %v3388 = vmax.f32 %v3386, %v3387
        %v3389 = vrot.slane %v3388, 1
        %v3390 = vmax.f32 %v3388, %v3389
        %v3391 = vsel %vm3019, %v1911, -inf
        %v3392 = vrot.slane %v3391, 4
        %v3393 = vmax.f32 %v3391, %v3392
        %v3394 = vrot.slane %v3393, 2
        %v3395 = vmax.f32 %v3393, %v3394
        %v3396 = vrot.slane %v3395, 1
        %v3397 = vmax.f32 %v3395, %v3396
        %v3398 = vsel %vm3019, %v1910, -inf
        %v3399 = vrot.slane %v3398, 4
        %v3400 = vmax.f32 %v3398, %v3399
        %v3401 = vrot.slane %v3400, 2
        %v3402 = vmax.f32 %v3400, %v3401
        %v3403 = vrot.slane %v3402, 1
        %v3404 = vmax.f32 %v3402, %v3403
        %v3405 = vsel %vm3019, %v1912, -inf
        %v3406 = vrot.slane %v3405, 4
        %v3407 = vmax.f32 %v3405, %v3406
        %v3408 = vrot.slane %v3407, 2
        %v3409 = vmax.f32 %v3407, %v3408
        %v3410 = vrot.slane %v3409, 1
        %v3411 = vmax.f32 %v3409, %v3410
        %v3412 = vsel %vm3019, %v1920, -inf
        %v3413 = vrot.slane %v3412, 4
        %v3414 = vmax.f32 %v3412, %v3413
        %v3415 = vrot.slane %v3414, 2
        %v3416 = vmax.f32 %v3414, %v3415
        %v3417 = vrot.slane %v3416, 1
        %v3418 = vmax.f32 %v3416, %v3417
        %v3419 = vsel %vm3019, %v1928, -inf
        %v3420 = vrot.slane %v3419, 4
        %v3421 = vmax.f32 %v3419, %v3420
        %v3422 = vrot.slane %v3421, 2
        %v3423 = vmax.f32 %v3421, %v3422
        %v3424 = vrot.slane %v3423, 1
        %v3425 = vmax.f32 %v3423, %v3424
        %v3426 = vsel %vm3019, %v1927, -inf
        %v3427 = vrot.slane %v3426, 4
        %v3428 = vmax.f32 %v3426, %v3427
        %v3429 = vrot.slane %v3428, 2
        %v3430 = vmax.f32 %v3428, %v3429
        %v3431 = vrot.slane %v3430, 1
        %v3432 = vmax.f32 %v3430, %v3431
        %v3433 = vsel %vm3019, %v1929, -inf
        %v3434 = vrot.slane %v3433, 4
        %v3435 = vmax.f32 %v3433, %v3434
        %v3436 = vrot.slane %v3435, 2
        %v3437 = vmax.f32 %v3435, %v3436
        %v3438 = vrot.slane %v3437, 1
        %v3439 = vmax.f32 %v3437, %v3438
        %v3440 = vsel %vm3019, %v1937, -inf
        %v3441 = vrot.slane %v3440, 4
        %v3442 = vmax.f32 %v3440, %v3441
        %v3443 = vrot.slane %v3442, 2
        %v3444 = vmax.f32 %v3442, %v3443
        %v3445 = vrot.slane %v3444, 1
        %v3446 = vmax.f32 %v3444, %v3445
        %v3447 = vsel %vm3019, %v1945, -inf
        %v3448 = vrot.slane %v3447, 4
        %v3449 = vmax.f32 %v3447, %v3448
        %v3450 = vrot.slane %v3449, 2
        %v3451 = vmax.f32 %v3449, %v3450
        %v3452 = vrot.slane %v3451, 1
        %v3453 = vmax.f32 %v3451, %v3452
        %v3454 = vsel %vm3019, %v1944, -inf
        %v3455 = vrot.slane %v3454, 4
        %v3456 = vmax.f32 %v3454, %v3455
        %v3457 = vrot.slane %v3456, 2
        %v3458 = vmax.f32 %v3456, %v3457
        %v3459 = vrot.slane %v3458, 1
        %v3460 = vmax.f32 %v3458, %v3459
        %v3461 = vsel %vm3019, %v1946, -inf
        %v3462 = vrot.slane %v3461, 4
        %v3463 = vmax.f32 %v3461, %v3462
        %v3464 = vrot.slane %v3463, 2
        %v3465 = vmax.f32 %v3463, %v3464
        %v3466 = vrot.slane %v3465, 1
        %v3467 = vmax.f32 %v3465, %v3466
        %v3468 = vsel %vm3019, %v1954, -inf
        %v3469 = vrot.slane %v3468, 4
        %v3470 = vmax.f32 %v3468, %v3469
        %v3471 = vrot.slane %v3470, 2
        %v3472 = vmax.f32 %v3470, %v3471
        %v3473 = vrot.slane %v3472, 1
        %v3474 = vmax.f32 %v3472, %v3473
        %v3475 = vsel %vm3019, %v1962, -inf
        %v3476 = vrot.slane %v3475, 4
        %v3477 = vmax.f32 %v3475, %v3476
        %v3478 = vrot.slane %v3477, 2
        %v3479 = vmax.f32 %v3477, %v3478
        %v3480 = vrot.slane %v3479, 1
        %v3481 = vmax.f32 %v3479, %v3480
        %v3482 = vsel %vm3019, %v1961, -inf
        %v3483 = vrot.slane %v3482, 4
        %v3484 = vmax.f32 %v3482, %v3483
        %v3485 = vrot.slane %v3484, 2
        %v3486 = vmax.f32 %v3484, %v3485
        %v3487 = vrot.slane %v3486, 1
        %v3488 = vmax.f32 %v3486, %v3487
        %v3489 = vsel %vm3019, %v1963, -inf
        %v3490 = vrot.slane %v3489, 4
        %v3491 = vmax.f32 %v3489, %v3490
        %v3492 = vrot.slane %v3491, 2
        %v3493 = vmax.f32 %v3491, %v3492
        %v3494 = vrot.slane %v3493, 1
        %v3495 = vmax.f32 %v3493, %v3494
        %v3496 = vsel %vm3019, %v1971, -inf
        %v3497 = vrot.slane %v3496, 4
        %v3498 = vmax.f32 %v3496, %v3497
        %v3499 = vrot.slane %v3498, 2
        %v3500 = vmax.f32 %v3498, %v3499
        %v3501 = vrot.slane %v3500, 1
        %v3502 = vmax.f32 %v3500, %v3501
        %v3503 = vsel %vm3019, %v1979, -inf
        %v3504 = vrot.slane %v3503, 4
        %v3505 = vmax.f32 %v3503, %v3504
        %v3506 = vrot.slane %v3505, 2
        %v3507 = vmax.f32 %v3505, %v3506
        %v3508 = vrot.slane %v3507, 1
        %v3509 = vmax.f32 %v3507, %v3508
        %v3510 = vsel %vm3019, %v1978, -inf
        %v3511 = vrot.slane %v3510, 4
        %v3512 = vmax.f32 %v3510, %v3511
        %v3513 = vrot.slane %v3512, 2
        %v3514 = vmax.f32 %v3512, %v3513
        %v3515 = vrot.slane %v3514, 1
        %v3516 = vmax.f32 %v3514, %v3515
        %v3517 = vsel %vm3019, %v1980, -inf
        %v3518 = vrot.slane %v3517, 4
        %v3519 = vmax.f32 %v3517, %v3518
        %v3520 = vrot.slane %v3519, 2
        %v3521 = vmax.f32 %v3519, %v3520
        %v3522 = vrot.slane %v3521, 1
        %v3523 = vmax.f32 %v3521, %v3522
        %v3524 = vsel %vm3019, %v1988, -inf
        %v3525 = vrot.slane %v3524, 4
        %v3526 = vmax.f32 %v3524, %v3525
        %v3527 = vrot.slane %v3526, 2
        %v3528 = vmax.f32 %v3526, %v3527
        %v3529 = vrot.slane %v3528, 1
        %v3530 = vmax.f32 %v3528, %v3529
        %v3531 = vsel %vm3019, %v1996, -inf
        %v3532 = vrot.slane %v3531, 4
        %v3533 = vmax.f32 %v3531, %v3532
        %v3534 = vrot.slane %v3533, 2
        %v3535 = vmax.f32 %v3533, %v3534
        %v3536 = vrot.slane %v3535, 1
        %v3537 = vmax.f32 %v3535, %v3536
        %v3538 = vsel %vm3019, %v1995, -inf
        %v3539 = vrot.slane %v3538, 4
        %v3540 = vmax.f32 %v3538, %v3539
        %v3541 = vrot.slane %v3540, 2
        %v3542 = vmax.f32 %v3540, %v3541
        %v3543 = vrot.slane %v3542, 1
        %v3544 = vmax.f32 %v3542, %v3543
        %v3545 = vsel %vm3019, %v1997, -inf
        %v3546 = vrot.slane %v3545, 4
        %v3547 = vmax.f32 %v3545, %v3546
        %v3548 = vrot.slane %v3547, 2
        %v3549 = vmax.f32 %v3547, %v3548
        %v3550 = vrot.slane %v3549, 1
        %v3551 = vmax.f32 %v3549, %v3550
        %v3552 = vsel %vm3019, %v2005, -inf
        %v3553 = vrot.slane %v3552, 4
        %v3554 = vmax.f32 %v3552, %v3553
        %v3555 = vrot.slane %v3554, 2
        %v3556 = vmax.f32 %v3554, %v3555
        %v3557 = vrot.slane %v3556, 1
        %v3558 = vmax.f32 %v3556, %v3557
        %v3559 = vsel %vm3019, %v2013, -inf
        %v3560 = vrot.slane %v3559, 4
        %v3561 = vmax.f32 %v3559, %v3560
        %v3562 = vrot.slane %v3561, 2
        %v3563 = vmax.f32 %v3561, %v3562
        %v3564 = vrot.slane %v3563, 1
        %v3565 = vmax.f32 %v3563, %v3564
        %v3566 = vsel %vm3019, %v2012, -inf
        %v3567 = vrot.slane %v3566, 4
        %v3568 = vmax.f32 %v3566, %v3567
        %v3569 = vrot.slane %v3568, 2
        %v3570 = vmax.f32 %v3568, %v3569
        %v3571 = vrot.slane %v3570, 1
        %v3572 = vmax.f32 %v3570, %v3571
        %v3573 = vsel %vm3019, %v2014, -inf
        %v3574 = vrot.slane %v3573, 4
        %v3575 = vmax.f32 %v3573, %v3574
        %v3576 = vrot.slane %v3575, 2
        %v3577 = vmax.f32 %v3575, %v3576
        %v3578 = vrot.slane %v3577, 1
        %v3579 = vmax.f32 %v3577, %v3578
        %v3580 = vsel %vm3019, %v2022, -inf
        %v3581 = vrot.slane %v3580, 4
        %v3582 = vmax.f32 %v3580, %v3581
        %v3583 = vrot.slane %v3582, 2
        %v3584 = vmax.f32 %v3582, %v3583
        %v3585 = vrot.slane %v3584, 1
        %v3586 = vmax.f32 %v3584, %v3585
        %v3587 = vsel %vm3019, %v2030, -inf
        %v3588 = vrot.slane %v3587, 4
        %v3589 = vmax.f32 %v3587, %v3588
        %v3590 = vrot.slane %v3589, 2
        %v3591 = vmax.f32 %v3589, %v3590
        %v3592 = vrot.slane %v3591, 1
        %v3593 = vmax.f32 %v3591, %v3592
        %v3594 = vsel %vm3019, %v2029, -inf
        %v3595 = vrot.slane %v3594, 4
        %v3596 = vmax.f32 %v3594, %v3595
        %v3597 = vrot.slane %v3596, 2
        %v3598 = vmax.f32 %v3596, %v3597
        %v3599 = vrot.slane %v3598, 1
        %v3600 = vmax.f32 %v3598, %v3599
        %v3601 = vsel %vm3019, %v2031, -inf
        %v3602 = vrot.slane %v3601, 4
        %v3603 = vmax.f32 %v3601, %v3602
        %v3604 = vrot.slane %v3603, 2
        %v3605 = vmax.f32 %v3603, %v3604
        %v3606 = vrot.slane %v3605, 1
        %v3607 = vmax.f32 %v3605, %v3606
        %v3608 = vsel %vm3019, %v2039, -inf
        %v3609 = vrot.slane %v3608, 4
        %v3610 = vmax.f32 %v3608, %v3609
        %v3611 = vrot.slane %v3610, 2
        %v3612 = vmax.f32 %v3610, %v3611
        %v3613 = vrot.slane %v3612, 1
        %v3614 = vmax.f32 %v3612, %v3613
        %v3615 = vsel %vm3019, %v2047, -inf
        %v3616 = vrot.slane %v3615, 4
        %v3617 = vmax.f32 %v3615, %v3616
        %v3618 = vrot.slane %v3617, 2
        %v3619 = vmax.f32 %v3617, %v3618
        %v3620 = vrot.slane %v3619, 1
        %v3621 = vmax.f32 %v3619, %v3620
        %v3622 = vsel %vm3019, %v2046, -inf
        %v3623 = vrot.slane %v3622, 4
        %v3624 = vmax.f32 %v3622, %v3623
        %v3625 = vrot.slane %v3624, 2
        %v3626 = vmax.f32 %v3624, %v3625
        %v3627 = vrot.slane %v3626, 1
        %v3628 = vmax.f32 %v3626, %v3627
        %v3629 = vsel %vm3019, %v2048, -inf
        %v3630 = vrot.slane %v3629, 4
        %v3631 = vmax.f32 %v3629, %v3630
        %v3632 = vrot.slane %v3631, 2
        %v3633 = vmax.f32 %v3631, %v3632
        %v3634 = vrot.slane %v3633, 1
        %v3635 = vmax.f32 %v3633, %v3634
        %v3636 = vsel %vm3019, %v2056, -inf
        %v3637 = vrot.slane %v3636, 4
        %v3638 = vmax.f32 %v3636, %v3637
        %v3639 = vrot.slane %v3638, 2
        %v3640 = vmax.f32 %v3638, %v3639
        %v3641 = vrot.slane %v3640, 1
        %v3642 = vmax.f32 %v3640, %v3641
        %v3643 = vsel %vm3019, %v2064, -inf
        %v3644 = vrot.slane %v3643, 4
        %v3645 = vmax.f32 %v3643, %v3644
        %v3646 = vrot.slane %v3645, 2
        %v3647 = vmax.f32 %v3645, %v3646
        %v3648 = vrot.slane %v3647, 1
        %v3649 = vmax.f32 %v3647, %v3648
        %v3650 = vsel %vm3019, %v2063, -inf
        %v3651 = vrot.slane %v3650, 4
        %v3652 = vmax.f32 %v3650, %v3651
        %v3653 = vrot.slane %v3652, 2
        %v3654 = vmax.f32 %v3652, %v3653
        %v3655 = vrot.slane %v3654, 1
        %v3656 = vmax.f32 %v3654, %v3655
        %v3657 = vsel %vm3019, %v2065, -inf
        %v3658 = vrot.slane %v3657, 4
        %v3659 = vmax.f32 %v3657, %v3658
        %v3660 = vrot.slane %v3659, 2
        %v3661 = vmax.f32 %v3659, %v3660
        %v3662 = vrot.slane %v3661, 1
        %v3663 = vmax.f32 %v3661, %v3662
        %v3664 = vsel %vm3019, %v2073, -inf
        %v3665 = vrot.slane %v3664, 4
        %v3666 = vmax.f32 %v3664, %v3665
        %v3667 = vrot.slane %v3666, 2
        %v3668 = vmax.f32 %v3666, %v3667
        %v3669 = vrot.slane %v3668, 1
        %v3670 = vmax.f32 %v3668, %v3669
        %v3671 = vsel %vm3019, %v2081, -inf
        %v3672 = vrot.slane %v3671, 4
        %v3673 = vmax.f32 %v3671, %v3672
        %v3674 = vrot.slane %v3673, 2
        %v3675 = vmax.f32 %v3673, %v3674
        %v3676 = vrot.slane %v3675, 1
        %v3677 = vmax.f32 %v3675, %v3676
        %v3678 = vsel %vm3019, %v2080, -inf
        %v3679 = vrot.slane %v3678, 4
        %v3680 = vmax.f32 %v3678, %v3679
        %v3681 = vrot.slane %v3680, 2
        %v3682 = vmax.f32 %v3680, %v3681
        %v3683 = vrot.slane %v3682, 1
        %v3684 = vmax.f32 %v3682, %v3683
        %v3685 = vsel %vm3019, %v2082, -inf
        %v3686 = vrot.slane %v3685, 4
        %v3687 = vmax.f32 %v3685, %v3686
        %v3688 = vrot.slane %v3687, 2
        %v3689 = vmax.f32 %v3687, %v3688
        %v3690 = vrot.slane %v3689, 1
        %v3691 = vmax.f32 %v3689, %v3690
        %v3692 = vsel %vm3019, %v2090, -inf
        %v3693 = vrot.slane %v3692, 4
        %v3694 = vmax.f32 %v3692, %v3693
        %v3695 = vrot.slane %v3694, 2
        %v3696 = vmax.f32 %v3694, %v3695
        %v3697 = vrot.slane %v3696, 1
        %v3698 = vmax.f32 %v3696, %v3697
        %v3699 = vsel %vm3019, %v2098, -inf
        %v3700 = vrot.slane %v3699, 4
        %v3701 = vmax.f32 %v3699, %v3700
        %v3702 = vrot.slane %v3701, 2
        %v3703 = vmax.f32 %v3701, %v3702
        %v3704 = vrot.slane %v3703, 1
        %v3705 = vmax.f32 %v3703, %v3704
        %v3706 = vsel %vm3019, %v2097, -inf
        %v3707 = vrot.slane %v3706, 4
        %v3708 = vmax.f32 %v3706, %v3707
        %v3709 = vrot.slane %v3708, 2
        %v3710 = vmax.f32 %v3708, %v3709
        %v3711 = vrot.slane %v3710, 1
        %v3712 = vmax.f32 %v3710, %v3711
        %v3713 = vsel %vm3019, %v2099, -inf
        %v3714 = vrot.slane %v3713, 4
        %v3715 = vmax.f32 %v3713, %v3714
        %v3716 = vrot.slane %v3715, 2
        %v3717 = vmax.f32 %v3715, %v3716
        %v3718 = vrot.slane %v3717, 1
        %v3719 = vmax.f32 %v3717, %v3718
        %v3720 = vsel %vm3019, %v2107, -inf
        %v3721 = vrot.slane %v3720, 4
        %v3722 = vmax.f32 %v3720, %v3721
        %v3723 = vrot.slane %v3722, 2
        %v3724 = vmax.f32 %v3722, %v3723
        %v3725 = vrot.slane %v3724, 1
        %v3726 = vmax.f32 %v3724, %v3725
        %v3727 = vsel %vm3019, %v2115, -inf
        %v3728 = vrot.slane %v3727, 4
        %v3729 = vmax.f32 %v3727, %v3728
        %v3730 = vrot.slane %v3729, 2
        %v3731 = vmax.f32 %v3729, %v3730
        %v3732 = vrot.slane %v3731, 1
        %v3733 = vmax.f32 %v3731, %v3732
        %v3734 = vsel %vm3019, %v2114, -inf
        %v3735 = vrot.slane %v3734, 4
        %v3736 = vmax.f32 %v3734, %v3735
        %v3737 = vrot.slane %v3736, 2
        %v3738 = vmax.f32 %v3736, %v3737
        %v3739 = vrot.slane %v3738, 1
        %v3740 = vmax.f32 %v3738, %v3739
        %v3741 = vsel %vm3019, %v2116, -inf
        %v3742 = vrot.slane %v3741, 4
        %v3743 = vmax.f32 %v3741, %v3742
        %v3744 = vrot.slane %v3743, 2
        %v3745 = vmax.f32 %v3743, %v3744
        %v3746 = vrot.slane %v3745, 1
        %v3747 = vmax.f32 %v3745, %v3746
        %v3748 = vsel %vm3019, %v2124, -inf
        %v3749 = vrot.slane %v3748, 4
        %v3750 = vmax.f32 %v3748, %v3749
        %v3751 = vrot.slane %v3750, 2
        %v3752 = vmax.f32 %v3750, %v3751
        %v3753 = vrot.slane %v3752, 1
        %v3754 = vmax.f32 %v3752, %v3753
        %v3755 = vsel %vm3019, %v2132, -inf
        %v3756 = vrot.slane %v3755, 4
        %v3757 = vmax.f32 %v3755, %v3756
        %v3758 = vrot.slane %v3757, 2
        %v3759 = vmax.f32 %v3757, %v3758
        %v3760 = vrot.slane %v3759, 1
        %v3761 = vmax.f32 %v3759, %v3760
        %v3762 = vsel %vm3019, %v2131, -inf
        %v3763 = vrot.slane %v3762, 4
        %v3764 = vmax.f32 %v3762, %v3763
        %v3765 = vrot.slane %v3764, 2
        %v3766 = vmax.f32 %v3764, %v3765
        %v3767 = vrot.slane %v3766, 1
        %v3768 = vmax.f32 %v3766, %v3767
        %v3769 = vsel %vm3019, %v2133, -inf
        %v3770 = vrot.slane %v3769, 4
        %v3771 = vmax.f32 %v3769, %v3770
        %v3772 = vrot.slane %v3771, 2
        %v3773 = vmax.f32 %v3771, %v3772
        %v3774 = vrot.slane %v3773, 1
        %v3775 = vmax.f32 %v3773, %v3774
        %v3776 = vsel %vm3019, %v2141, -inf
        %v3777 = vrot.slane %v3776, 4
        %v3778 = vmax.f32 %v3776, %v3777
        %v3779 = vrot.slane %v3778, 2
        %v3780 = vmax.f32 %v3778, %v3779
        %v3781 = vrot.slane %v3780, 1
        %v3782 = vmax.f32 %v3780, %v3781
        %v3783 = vsel %vm3019, %v2149, -inf
        %v3784 = vrot.slane %v3783, 4
        %v3785 = vmax.f32 %v3783, %v3784
        %v3786 = vrot.slane %v3785, 2
        %v3787 = vmax.f32 %v3785, %v3786
        %v3788 = vrot.slane %v3787, 1
        %v3789 = vmax.f32 %v3787, %v3788
        %v3790 = vsel %vm3019, %v2148, -inf
        %v3791 = vrot.slane %v3790, 4
        %v3792 = vmax.f32 %v3790, %v3791
        %v3793 = vrot.slane %v3792, 2
        %v3794 = vmax.f32 %v3792, %v3793
        %v3795 = vrot.slane %v3794, 1
        %v3796 = vmax.f32 %v3794, %v3795
        %v3797 = vsel %vm3019, %v2150, -inf
        %v3798 = vrot.slane %v3797, 4
        %v3799 = vmax.f32 %v3797, %v3798
        %v3800 = vrot.slane %v3799, 2
        %v3801 = vmax.f32 %v3799, %v3800
        %v3802 = vrot.slane %v3801, 1
        %v3803 = vmax.f32 %v3801, %v3802
        %v3804 = vsel %vm3019, %v2158, -inf
        %v3805 = vrot.slane %v3804, 4
        %v3806 = vmax.f32 %v3804, %v3805
        %v3807 = vrot.slane %v3806, 2
        %v3808 = vmax.f32 %v3806, %v3807
        %v3809 = vrot.slane %v3808, 1
        %v3810 = vmax.f32 %v3808, %v3809
        %v3811 = vsel %vm3019, %v2166, -inf
        %v3812 = vrot.slane %v3811, 4
        %v3813 = vmax.f32 %v3811, %v3812
        %v3814 = vrot.slane %v3813, 2
        %v3815 = vmax.f32 %v3813, %v3814
        %v3816 = vrot.slane %v3815, 1
        %v3817 = vmax.f32 %v3815, %v3816
        %v3818 = vsel %vm3019, %v2165, -inf
        %v3819 = vrot.slane %v3818, 4
        %v3820 = vmax.f32 %v3818, %v3819
        %v3821 = vrot.slane %v3820, 2
        %v3822 = vmax.f32 %v3820, %v3821
        %v3823 = vrot.slane %v3822, 1
        %v3824 = vmax.f32 %v3822, %v3823
        %v3825 = vsel %vm3019, %v2167, -inf
        %v3826 = vrot.slane %v3825, 4
        %v3827 = vmax.f32 %v3825, %v3826
        %v3828 = vrot.slane %v3827, 2
        %v3829 = vmax.f32 %v3827, %v3828
        %v3830 = vrot.slane %v3829, 1
        %v3831 = vmax.f32 %v3829, %v3830
        %v3832 = vsel %vm3019, %v2175, -inf
        %v3833 = vrot.slane %v3832, 4
        %v3834 = vmax.f32 %v3832, %v3833
        %v3835 = vrot.slane %v3834, 2
        %v3836 = vmax.f32 %v3834, %v3835
        %v3837 = vrot.slane %v3836, 1
        %v3838 = vmax.f32 %v3836, %v3837
        %v3839 = vsel %vm3019, %v2183, -inf
        %v3840 = vrot.slane %v3839, 4
        %v3841 = vmax.f32 %v3839, %v3840
        %v3842 = vrot.slane %v3841, 2
        %v3843 = vmax.f32 %v3841, %v3842
        %v3844 = vrot.slane %v3843, 1
        %v3845 = vmax.f32 %v3843, %v3844
        %v3846 = vsel %vm3019, %v2182, -inf
        %v3847 = vrot.slane %v3846, 4
        %v3848 = vmax.f32 %v3846, %v3847
        %v3849 = vrot.slane %v3848, 2
        %v3850 = vmax.f32 %v3848, %v3849
        %v3851 = vrot.slane %v3850, 1
        %v3852 = vmax.f32 %v3850, %v3851
        %v3853 = vsel %vm3019, %v2184, -inf
        %v3854 = vrot.slane %v3853, 4
        %v3855 = vmax.f32 %v3853, %v3854
        %v3856 = vrot.slane %v3855, 2
        %v3857 = vmax.f32 %v3855, %v3856
        %v3858 = vrot.slane %v3857, 1
        %v3859 = vmax.f32 %v3857, %v3858
        %v3860 = vsel %vm3019, %v2192, -inf
        %v3861 = vrot.slane %v3860, 4
        %v3862 = vmax.f32 %v3860, %v3861
        %v3863 = vrot.slane %v3862, 2
        %v3864 = vmax.f32 %v3862, %v3863
        %v3865 = vrot.slane %v3864, 1
        %v3866 = vmax.f32 %v3864, %v3865
        %v3867 = vsel %vm3019, %v2200, -inf
        %v3868 = vrot.slane %v3867, 4
        %v3869 = vmax.f32 %v3867, %v3868
        %v3870 = vrot.slane %v3869, 2
        %v3871 = vmax.f32 %v3869, %v3870
        %v3872 = vrot.slane %v3871, 1
        %v3873 = vmax.f32 %v3871, %v3872
        %v3874 = vsel %vm3019, %v2199, -inf
        %v3875 = vrot.slane %v3874, 4
        %v3876 = vmax.f32 %v3874, %v3875
        %v3877 = vrot.slane %v3876, 2
        %v3878 = vmax.f32 %v3876, %v3877
        %v3879 = vrot.slane %v3878, 1
        %v3880 = vmax.f32 %v3878, %v3879
        %v3881 = vsel %vm3019, %v2201, -inf
        %v3882 = vrot.slane %v3881, 4
        %v3883 = vmax.f32 %v3881, %v3882
        %v3884 = vrot.slane %v3883, 2
        %v3885 = vmax.f32 %v3883, %v3884
        %v3886 = vrot.slane %v3885, 1
        %v3887 = vmax.f32 %v3885, %v3886
        %v3888 = vsel %vm3019, %v2209, -inf
        %v3889 = vrot.slane %v3888, 4
        %v3890 = vmax.f32 %v3888, %v3889
        %v3891 = vrot.slane %v3890, 2
        %v3892 = vmax.f32 %v3890, %v3891
        %v3893 = vrot.slane %v3892, 1
        %v3894 = vmax.f32 %v3892, %v3893
        %v3895 = vsel %vm3019, %v2217, -inf
        %v3896 = vrot.slane %v3895, 4
        %v3897 = vmax.f32 %v3895, %v3896
        %v3898 = vrot.slane %v3897, 2
        %v3899 = vmax.f32 %v3897, %v3898
        %v3900 = vrot.slane %v3899, 1
        %v3901 = vmax.f32 %v3899, %v3900
        %v3902 = vsel %vm3019, %v2216, -inf
        %v3903 = vrot.slane %v3902, 4
        %v3904 = vmax.f32 %v3902, %v3903
        %v3905 = vrot.slane %v3904, 2
        %v3906 = vmax.f32 %v3904, %v3905
        %v3907 = vrot.slane %v3906, 1
        %v3908 = vmax.f32 %v3906, %v3907
        %v3909 = vsel %vm3019, %v2218, -inf
        %v3910 = vrot.slane %v3909, 4
        %v3911 = vmax.f32 %v3909, %v3910
        %v3912 = vrot.slane %v3911, 2
        %v3913 = vmax.f32 %v3911, %v3912
        %v3914 = vrot.slane %v3913, 1
        %v3915 = vmax.f32 %v3913, %v3914
        %v3916 = vsel %vm3019, %v2226, -inf
        %v3917 = vrot.slane %v3916, 4
        %v3918 = vmax.f32 %v3916, %v3917
        %v3919 = vrot.slane %v3918, 2
        %v3920 = vmax.f32 %v3918, %v3919
        %v3921 = vrot.slane %v3920, 1
        %v3922 = vmax.f32 %v3920, %v3921
        %v3923 = vsel %vm3019, %v2234, -inf
        %v3924 = vrot.slane %v3923, 4
        %v3925 = vmax.f32 %v3923, %v3924
        %v3926 = vrot.slane %v3925, 2
        %v3927 = vmax.f32 %v3925, %v3926
        %v3928 = vrot.slane %v3927, 1
        %v3929 = vmax.f32 %v3927, %v3928
        %v3930 = vsel %vm3019, %v2233, -inf
        %v3931 = vrot.slane %v3930, 4
        %v3932 = vmax.f32 %v3930, %v3931
        %v3933 = vrot.slane %v3932, 2
        %v3934 = vmax.f32 %v3932, %v3933
        %v3935 = vrot.slane %v3934, 1
        %v3936 = vmax.f32 %v3934, %v3935
        %v3937 = vsel %vm3019, %v2235, -inf
        %v3938 = vrot.slane %v3937, 4
        %v3939 = vmax.f32 %v3937, %v3938
        %v3940 = vrot.slane %v3939, 2
        %v3941 = vmax.f32 %v3939, %v3940
        %v3942 = vrot.slane %v3941, 1
        %v3943 = vmax.f32 %v3941, %v3942
        %v3944 = vsel %vm3019, %v2243, -inf
        %v3945 = vrot.slane %v3944, 4
        %v3946 = vmax.f32 %v3944, %v3945
        %v3947 = vrot.slane %v3946, 2
        %v3948 = vmax.f32 %v3946, %v3947
        %v3949 = vrot.slane %v3948, 1
        %v3950 = vmax.f32 %v3948, %v3949
        %v3951 = vsel %vm3019, %v2251, -inf
        %v3952 = vrot.slane %v3951, 4
        %v3953 = vmax.f32 %v3951, %v3952
        %v3954 = vrot.slane %v3953, 2
        %v3955 = vmax.f32 %v3953, %v3954
        %v3956 = vrot.slane %v3955, 1
        %v3957 = vmax.f32 %v3955, %v3956
        %v3958 = vsel %vm3019, %v2250, -inf
        %v3959 = vrot.slane %v3958, 4
        %v3960 = vmax.f32 %v3958, %v3959
        %v3961 = vrot.slane %v3960, 2
        %v3962 = vmax.f32 %v3960, %v3961
        %v3963 = vrot.slane %v3962, 1
        %v3964 = vmax.f32 %v3962, %v3963
        %v3965 = vsel %vm3019, %v2252, -inf
        %v3966 = vrot.slane %v3965, 4
        %v3967 = vmax.f32 %v3965, %v3966
        %v3968 = vrot.slane %v3967, 2
        %v3969 = vmax.f32 %v3967, %v3968
        %v3970 = vrot.slane %v3969, 1
        %v3971 = vmax.f32 %v3969, %v3970
        %v3972 = vsel %vm3019, %v2260, -inf
        %v3973 = vrot.slane %v3972, 4
        %v3974 = vmax.f32 %v3972, %v3973
        %v3975 = vrot.slane %v3974, 2
        %v3976 = vmax.f32 %v3974, %v3975
        %v3977 = vrot.slane %v3976, 1
        %v3978 = vmax.f32 %v3976, %v3977
        %v3979 = vsel %vm3019, %v2268, -inf
        %v3980 = vrot.slane %v3979, 4
        %v3981 = vmax.f32 %v3979, %v3980
        %v3982 = vrot.slane %v3981, 2
        %v3983 = vmax.f32 %v3981, %v3982
        %v3984 = vrot.slane %v3983, 1
        %v3985 = vmax.f32 %v3983, %v3984
        %v3986 = vsel %vm3019, %v2267, -inf
        %v3987 = vrot.slane %v3986, 4
        %v3988 = vmax.f32 %v3986, %v3987
        %v3989 = vrot.slane %v3988, 2
        %v3990 = vmax.f32 %v3988, %v3989
        %v3991 = vrot.slane %v3990, 1
        %v3992 = vmax.f32 %v3990, %v3991
        %v3993 = vsel %vm3019, %v2269, -inf
        %v3994 = vrot.slane %v3993, 4
        %v3995 = vmax.f32 %v3993, %v3994
        %v3996 = vrot.slane %v3995, 2
        %v3997 = vmax.f32 %v3995, %v3996
        %v3998 = vrot.slane %v3997, 1
        %v3999 = vmax.f32 %v3997, %v3998
        %v4000 = vsel %vm3019, %v2277, -inf
        %v4001 = vrot.slane %v4000, 4
        %v4002 = vmax.f32 %v4000, %v4001
        %v4003 = vrot.slane %v4002, 2
        %v4004 = vmax.f32 %v4002, %v4003
        %v4005 = vrot.slane %v4004, 1
        %v4006 = vmax.f32 %v4004, %v4005
        %v4007 = vsel %vm3019, %v2285, -inf
        %v4008 = vrot.slane %v4007, 4
        %v4009 = vmax.f32 %v4007, %v4008
        %v4010 = vrot.slane %v4009, 2
        %v4011 = vmax.f32 %v4009, %v4010
        %v4012 = vrot.slane %v4011, 1
        %v4013 = vmax.f32 %v4011, %v4012
        %v4014 = vsel %vm3019, %v2284, -inf
        %v4015 = vrot.slane %v4014, 4
        %v4016 = vmax.f32 %v4014, %v4015
        %v4017 = vrot.slane %v4016, 2
        %v4018 = vmax.f32 %v4016, %v4017
        %v4019 = vrot.slane %v4018, 1
        %v4020 = vmax.f32 %v4018, %v4019
        %v4021 = vsel %vm3019, %v2286, -inf
        %v4022 = vrot.slane %v4021, 4
        %v4023 = vmax.f32 %v4021, %v4022
        %v4024 = vrot.slane %v4023, 2
        %v4025 = vmax.f32 %v4023, %v4024
        %v4026 = vrot.slane %v4025, 1
        %v4027 = vmax.f32 %v4025, %v4026
        %v4028 = vsel %vm3019, %v2294, -inf
        %v4029 = vrot.slane %v4028, 4
        %v4030 = vmax.f32 %v4028, %v4029
        %v4031 = vrot.slane %v4030, 2
        %v4032 = vmax.f32 %v4030, %v4031
        %v4033 = vrot.slane %v4032, 1
        %v4034 = vmax.f32 %v4032, %v4033
        %v4035 = vsel %vm3019, %v2302, -inf
        %v4036 = vrot.slane %v4035, 4
        %v4037 = vmax.f32 %v4035, %v4036
        %v4038 = vrot.slane %v4037, 2
        %v4039 = vmax.f32 %v4037, %v4038
        %v4040 = vrot.slane %v4039, 1
        %v4041 = vmax.f32 %v4039, %v4040
        %v4042 = vsel %vm3019, %v2301, -inf
        %v4043 = vrot.slane %v4042, 4
        %v4044 = vmax.f32 %v4042, %v4043
        %v4045 = vrot.slane %v4044, 2
        %v4046 = vmax.f32 %v4044, %v4045
        %v4047 = vrot.slane %v4046, 1
        %v4048 = vmax.f32 %v4046, %v4047
        %v4049 = vsel %vm3019, %v2303, -inf
        %v4050 = vrot.slane %v4049, 4
        %v4051 = vmax.f32 %v4049, %v4050
        %v4052 = vrot.slane %v4051, 2
        %v4053 = vmax.f32 %v4051, %v4052
        %v4054 = vrot.slane %v4053, 1
        %v4055 = vmax.f32 %v4053, %v4054
        %v4056 = vsel %vm3019, %v2311, -inf
        %v4057 = vrot.slane %v4056, 4
        %v4058 = vmax.f32 %v4056, %v4057
        %v4059 = vrot.slane %v4058, 2
        %v4060 = vmax.f32 %v4058, %v4059
        %v4061 = vrot.slane %v4060, 1
        %v4062 = vmax.f32 %v4060, %v4061
        %v4063 = vsel %vm3019, %v2319, -inf
        %v4064 = vrot.slane %v4063, 4
        %v4065 = vmax.f32 %v4063, %v4064
        %v4066 = vrot.slane %v4065, 2
        %v4067 = vmax.f32 %v4065, %v4066
        %v4068 = vrot.slane %v4067, 1
        %v4069 = vmax.f32 %v4067, %v4068
        %v4070 = vsel %vm3019, %v2318, -inf
        %v4071 = vrot.slane %v4070, 4
        %v4072 = vmax.f32 %v4070, %v4071
        %v4073 = vrot.slane %v4072, 2
        %v4074 = vmax.f32 %v4072, %v4073
        %v4075 = vrot.slane %v4074, 1
        %v4076 = vmax.f32 %v4074, %v4075
        %v4077 = vsel %vm3019, %v2320, -inf
        %v4078 = vrot.slane %v4077, 4
        %v4079 = vmax.f32 %v4077, %v4078
        %v4080 = vrot.slane %v4079, 2
        %v4081 = vmax.f32 %v4079, %v4080
        %v4082 = vrot.slane %v4081, 1
        %v4083 = vmax.f32 %v4081, %v4082
        %v4084 = vsel %vm3019, %v2328, -inf
        %v4085 = vrot.slane %v4084, 4
        %v4086 = vmax.f32 %v4084, %v4085
        %v4087 = vrot.slane %v4086, 2
        %v4088 = vmax.f32 %v4086, %v4087
        %v4089 = vrot.slane %v4088, 1
        %v4090 = vmax.f32 %v4088, %v4089
        %v4091 = vsel %vm3019, %v2336, -inf
        %v4092 = vrot.slane %v4091, 4
        %v4093 = vmax.f32 %v4091, %v4092
        %v4094 = vrot.slane %v4093, 2
        %v4095 = vmax.f32 %v4093, %v4094
        %v4096 = vrot.slane %v4095, 1
        %v4097 = vmax.f32 %v4095, %v4096
        %v4098 = vsel %vm3019, %v2335, -inf
        %v4099 = vrot.slane %v4098, 4
        %v4100 = vmax.f32 %v4098, %v4099
        %v4101 = vrot.slane %v4100, 2
        %v4102 = vmax.f32 %v4100, %v4101
        %v4103 = vrot.slane %v4102, 1
        %v4104 = vmax.f32 %v4102, %v4103
        %v4105 = vsel %vm3019, %v2337, -inf
        %v4106 = vrot.slane %v4105, 4
        %v4107 = vmax.f32 %v4105, %v4106
        %v4108 = vrot.slane %v4107, 2
        %v4109 = vmax.f32 %v4107, %v4108
        %v4110 = vrot.slane %v4109, 1
        %v4111 = vmax.f32 %v4109, %v4110
        %v4112 = vsel %vm3019, %v2345, -inf
        %v4113 = vrot.slane %v4112, 4
        %v4114 = vmax.f32 %v4112, %v4113
        %v4115 = vrot.slane %v4114, 2
        %v4116 = vmax.f32 %v4114, %v4115
        %v4117 = vrot.slane %v4116, 1
        %v4118 = vmax.f32 %v4116, %v4117
        %v4119 = vsel %vm3019, %v2353, -inf
        %v4120 = vrot.slane %v4119, 4
        %v4121 = vmax.f32 %v4119, %v4120
        %v4122 = vrot.slane %v4121, 2
        %v4123 = vmax.f32 %v4121, %v4122
        %v4124 = vrot.slane %v4123, 1
        %v4125 = vmax.f32 %v4123, %v4124
        %v4126 = vsel %vm3019, %v2352, -inf
        %v4127 = vrot.slane %v4126, 4
        %v4128 = vmax.f32 %v4126, %v4127
        %v4129 = vrot.slane %v4128, 2
        %v4130 = vmax.f32 %v4128, %v4129
        %v4131 = vrot.slane %v4130, 1
        %v4132 = vmax.f32 %v4130, %v4131
        %v4133 = vsel %vm3019, %v2354, -inf
        %v4134 = vrot.slane %v4133, 4
        %v4135 = vmax.f32 %v4133, %v4134
        %v4136 = vrot.slane %v4135, 2
        %v4137 = vmax.f32 %v4135, %v4136
        %v4138 = vrot.slane %v4137, 1
        %v4139 = vmax.f32 %v4137, %v4138
        %v4140 = vsel %vm3019, %v2362, -inf
        %v4141 = vrot.slane %v4140, 4
        %v4142 = vmax.f32 %v4140, %v4141
        %v4143 = vrot.slane %v4142, 2
        %v4144 = vmax.f32 %v4142, %v4143
        %v4145 = vrot.slane %v4144, 1
        %v4146 = vmax.f32 %v4144, %v4145
        %v4147 = vsel %vm3019, %v2370, -inf
        %v4148 = vrot.slane %v4147, 4
        %v4149 = vmax.f32 %v4147, %v4148
        %v4150 = vrot.slane %v4149, 2
        %v4151 = vmax.f32 %v4149, %v4150
        %v4152 = vrot.slane %v4151, 1
        %v4153 = vmax.f32 %v4151, %v4152
        %v4154 = vsel %vm3019, %v2369, -inf
        %v4155 = vrot.slane %v4154, 4
        %v4156 = vmax.f32 %v4154, %v4155
        %v4157 = vrot.slane %v4156, 2
        %v4158 = vmax.f32 %v4156, %v4157
        %v4159 = vrot.slane %v4158, 1
        %v4160 = vmax.f32 %v4158, %v4159
        %v4161 = vsel %vm3019, %v2371, -inf
        %v4162 = vrot.slane %v4161, 4
        %v4163 = vmax.f32 %v4161, %v4162
        %v4164 = vrot.slane %v4163, 2
        %v4165 = vmax.f32 %v4163, %v4164
        %v4166 = vrot.slane %v4165, 1
        %v4167 = vmax.f32 %v4165, %v4166
        %v4168 = vsel %vm3019, %v2379, -inf
        %v4169 = vrot.slane %v4168, 4
        %v4170 = vmax.f32 %v4168, %v4169
        %v4171 = vrot.slane %v4170, 2
        %v4172 = vmax.f32 %v4170, %v4171
        %v4173 = vrot.slane %v4172, 1
        %v4174 = vmax.f32 %v4172, %v4173
        %v4175 = vsel %vm3019, %v2387, -inf
        %v4176 = vrot.slane %v4175, 4
        %v4177 = vmax.f32 %v4175, %v4176
        %v4178 = vrot.slane %v4177, 2
        %v4179 = vmax.f32 %v4177, %v4178
        %v4180 = vrot.slane %v4179, 1
        %v4181 = vmax.f32 %v4179, %v4180
        %v4182 = vsel %vm3019, %v2386, -inf
        %v4183 = vrot.slane %v4182, 4
        %v4184 = vmax.f32 %v4182, %v4183
        %v4185 = vrot.slane %v4184, 2
        %v4186 = vmax.f32 %v4184, %v4185
        %v4187 = vrot.slane %v4186, 1
        %v4188 = vmax.f32 %v4186, %v4187
        %v4189 = vsel %vm3019, %v2388, -inf
        %v4190 = vrot.slane %v4189, 4
        %v4191 = vmax.f32 %v4189, %v4190
        %v4192 = vrot.slane %v4191, 2
        %v4193 = vmax.f32 %v4191, %v4192
        %v4194 = vrot.slane %v4193, 1
        %v4195 = vmax.f32 %v4193, %v4194
        %v4196 = vsel %vm3019, %v2396, -inf
        %v4197 = vrot.slane %v4196, 4
        %v4198 = vmax.f32 %v4196, %v4197
        %v4199 = vrot.slane %v4198, 2
        %v4200 = vmax.f32 %v4198, %v4199
        %v4201 = vrot.slane %v4200, 1
        %v4202 = vmax.f32 %v4200, %v4201
        %v4203 = vsel %vm3019, %v2404, -inf
        %v4204 = vrot.slane %v4203, 4
        %v4205 = vmax.f32 %v4203, %v4204
        %v4206 = vrot.slane %v4205, 2
        %v4207 = vmax.f32 %v4205, %v4206
        %v4208 = vrot.slane %v4207, 1
        %v4209 = vmax.f32 %v4207, %v4208
        %v4210 = vsel %vm3019, %v2403, -inf
        %v4211 = vrot.slane %v4210, 4
        %v4212 = vmax.f32 %v4210, %v4211
        %v4213 = vrot.slane %v4212, 2
        %v4214 = vmax.f32 %v4212, %v4213
        %v4215 = vrot.slane %v4214, 1
        %v4216 = vmax.f32 %v4214, %v4215
        %v4217 = vsel %vm3019, %v2405, -inf
        %v4218 = vrot.slane %v4217, 4
        %v4219 = vmax.f32 %v4217, %v4218
        %v4220 = vrot.slane %v4219, 2
        %v4221 = vmax.f32 %v4219, %v4220
        %v4222 = vrot.slane %v4221, 1
        %v4223 = vmax.f32 %v4221, %v4222
        %v4224 = vsel %vm3019, %v2413, -inf
        %v4225 = vrot.slane %v4224, 4
        %v4226 = vmax.f32 %v4224, %v4225
        %v4227 = vrot.slane %v4226, 2
        %v4228 = vmax.f32 %v4226, %v4227
        %v4229 = vrot.slane %v4228, 1
        %v4230 = vmax.f32 %v4228, %v4229
        %v4231 = vsel %vm3019, %v2421, -inf
        %v4232 = vrot.slane %v4231, 4
        %v4233 = vmax.f32 %v4231, %v4232
        %v4234 = vrot.slane %v4233, 2
        %v4235 = vmax.f32 %v4233, %v4234
        %v4236 = vrot.slane %v4235, 1
        %v4237 = vmax.f32 %v4235, %v4236
        %v4238 = vsel %vm3019, %v2420, -inf
        %v4239 = vrot.slane %v4238, 4
        %v4240 = vmax.f32 %v4238, %v4239
        %v4241 = vrot.slane %v4240, 2
        %v4242 = vmax.f32 %v4240, %v4241
        %v4243 = vrot.slane %v4242, 1
        %v4244 = vmax.f32 %v4242, %v4243
        %v4245 = vsel %vm3019, %v2422, -inf
        %v4246 = vrot.slane %v4245, 4
        %v4247 = vmax.f32 %v4245, %v4246
        %v4248 = vrot.slane %v4247, 2
        %v4249 = vmax.f32 %v4247, %v4248
        %v4250 = vrot.slane %v4249, 1
        %v4251 = vmax.f32 %v4249, %v4250
        %v4252 = vsel %vm3019, %v2430, -inf
        %v4253 = vrot.slane %v4252, 4
        %v4254 = vmax.f32 %v4252, %v4253
        %v4255 = vrot.slane %v4254, 2
        %v4256 = vmax.f32 %v4254, %v4255
        %v4257 = vrot.slane %v4256, 1
        %v4258 = vmax.f32 %v4256, %v4257
        %v4259 = vsel %vm3019, %v2438, -inf
        %v4260 = vrot.slane %v4259, 4
        %v4261 = vmax.f32 %v4259, %v4260
        %v4262 = vrot.slane %v4261, 2
        %v4263 = vmax.f32 %v4261, %v4262
        %v4264 = vrot.slane %v4263, 1
        %v4265 = vmax.f32 %v4263, %v4264
        %v4266 = vsel %vm3019, %v2437, -inf
        %v4267 = vrot.slane %v4266, 4
        %v4268 = vmax.f32 %v4266, %v4267
        %v4269 = vrot.slane %v4268, 2
        %v4270 = vmax.f32 %v4268, %v4269
        %v4271 = vrot.slane %v4270, 1
        %v4272 = vmax.f32 %v4270, %v4271
        %v4273 = vsel %vm3019, %v2439, -inf
        %v4274 = vrot.slane %v4273, 4
        %v4275 = vmax.f32 %v4273, %v4274
        %v4276 = vrot.slane %v4275, 2
        %v4277 = vmax.f32 %v4275, %v4276
        %v4278 = vrot.slane %v4277, 1
        %v4279 = vmax.f32 %v4277, %v4278
        %v4280 = vsel %vm3019, %v2447, -inf
        %v4281 = vrot.slane %v4280, 4
        %v4282 = vmax.f32 %v4280, %v4281
        %v4283 = vrot.slane %v4282, 2
        %v4284 = vmax.f32 %v4282, %v4283
        %v4285 = vrot.slane %v4284, 1
        %v4286 = vmax.f32 %v4284, %v4285
        %v4287 = vsel %vm3019, %v2455, -inf
        %v4288 = vrot.slane %v4287, 4
        %v4289 = vmax.f32 %v4287, %v4288
        %v4290 = vrot.slane %v4289, 2
        %v4291 = vmax.f32 %v4289, %v4290
        %v4292 = vrot.slane %v4291, 1
        %v4293 = vmax.f32 %v4291, %v4292
        %v4294 = vsel %vm3019, %v2454, -inf
        %v4295 = vrot.slane %v4294, 4
        %v4296 = vmax.f32 %v4294, %v4295
        %v4297 = vrot.slane %v4296, 2
        %v4298 = vmax.f32 %v4296, %v4297
        %v4299 = vrot.slane %v4298, 1
        %v4300 = vmax.f32 %v4298, %v4299
        %v4301 = vsel %vm3019, %v2456, -inf
        %v4302 = vrot.slane %v4301, 4
        %v4303 = vmax.f32 %v4301, %v4302
        %v4304 = vrot.slane %v4303, 2
        %v4305 = vmax.f32 %v4303, %v4304
        %v4306 = vrot.slane %v4305, 1
        %v4307 = vmax.f32 %v4305, %v4306
        %v4308 = vsel %vm3019, %v2464, -inf
        %v4309 = vrot.slane %v4308, 4
        %v4310 = vmax.f32 %v4308, %v4309
        %v4311 = vrot.slane %v4310, 2
        %v4312 = vmax.f32 %v4310, %v4311
        %v4313 = vrot.slane %v4312, 1
        %v4314 = vmax.f32 %v4312, %v4313
        %v4315 = vsel %vm3019, %v2472, -inf
        %v4316 = vrot.slane %v4315, 4
        %v4317 = vmax.f32 %v4315, %v4316
        %v4318 = vrot.slane %v4317, 2
        %v4319 = vmax.f32 %v4317, %v4318
        %v4320 = vrot.slane %v4319, 1
        %v4321 = vmax.f32 %v4319, %v4320
        %v4322 = vsel %vm3019, %v2471, -inf
        %v4323 = vrot.slane %v4322, 4
        %v4324 = vmax.f32 %v4322, %v4323
        %v4325 = vrot.slane %v4324, 2
        %v4326 = vmax.f32 %v4324, %v4325
        %v4327 = vrot.slane %v4326, 1
        %v4328 = vmax.f32 %v4326, %v4327
        %v4329 = vsel %vm3019, %v2473, -inf
        %v4330 = vrot.slane %v4329, 4
        %v4331 = vmax.f32 %v4329, %v4330
        %v4332 = vrot.slane %v4331, 2
        %v4333 = vmax.f32 %v4331, %v4332
        %v4334 = vrot.slane %v4333, 1
        %v4335 = vmax.f32 %v4333, %v4334
        %v4336 = vsel %vm3019, %v2481, -inf
        %v4337 = vrot.slane %v4336, 4
        %v4338 = vmax.f32 %v4336, %v4337
        %v4339 = vrot.slane %v4338, 2
        %v4340 = vmax.f32 %v4338, %v4339
        %v4341 = vrot.slane %v4340, 1
        %v4342 = vmax.f32 %v4340, %v4341
        %v4343 = vsel %vm3019, %v2489, -inf
        %v4344 = vrot.slane %v4343, 4
        %v4345 = vmax.f32 %v4343, %v4344
        %v4346 = vrot.slane %v4345, 2
        %v4347 = vmax.f32 %v4345, %v4346
        %v4348 = vrot.slane %v4347, 1
        %v4349 = vmax.f32 %v4347, %v4348
        %v4350 = vsel %vm3019, %v2488, -inf
        %v4351 = vrot.slane %v4350, 4
        %v4352 = vmax.f32 %v4350, %v4351
        %v4353 = vrot.slane %v4352, 2
        %v4354 = vmax.f32 %v4352, %v4353
        %v4355 = vrot.slane %v4354, 1
        %v4356 = vmax.f32 %v4354, %v4355
        %v4357 = vsel %vm3019, %v2490, -inf
        %v4358 = vrot.slane %v4357, 4
        %v4359 = vmax.f32 %v4357, %v4358
        %v4360 = vrot.slane %v4359, 2
        %v4361 = vmax.f32 %v4359, %v4360
        %v4362 = vrot.slane %v4361, 1
        %v4363 = vmax.f32 %v4361, %v4362
        %v4364 = vsel %vm3019, %v2498, -inf
        %v4365 = vrot.slane %v4364, 4
        %v4366 = vmax.f32 %v4364, %v4365
        %v4367 = vrot.slane %v4366, 2
        %v4368 = vmax.f32 %v4366, %v4367
        %v4369 = vrot.slane %v4368, 1
        %v4370 = vmax.f32 %v4368, %v4369
        %v4371 = vsel %vm3019, %v2506, -inf
        %v4372 = vrot.slane %v4371, 4
        %v4373 = vmax.f32 %v4371, %v4372
        %v4374 = vrot.slane %v4373, 2
        %v4375 = vmax.f32 %v4373, %v4374
        %v4376 = vrot.slane %v4375, 1
        %v4377 = vmax.f32 %v4375, %v4376
        %v4378 = vsel %vm3019, %v2505, -inf
        %v4379 = vrot.slane %v4378, 4
        %v4380 = vmax.f32 %v4378, %v4379
        %v4381 = vrot.slane %v4380, 2
        %v4382 = vmax.f32 %v4380, %v4381
        %v4383 = vrot.slane %v4382, 1
        %v4384 = vmax.f32 %v4382, %v4383
        %v4385 = vsel %vm3019, %v2507, -inf
        %v4386 = vrot.slane %v4385, 4
        %v4387 = vmax.f32 %v4385, %v4386
        %v4388 = vrot.slane %v4387, 2
        %v4389 = vmax.f32 %v4387, %v4388
        %v4390 = vrot.slane %v4389, 1
        %v4391 = vmax.f32 %v4389, %v4390
        %v4392 = vsel %vm3019, %v2515, -inf
        %v4393 = vrot.slane %v4392, 4
        %v4394 = vmax.f32 %v4392, %v4393
        %v4395 = vrot.slane %v4394, 2
        %v4396 = vmax.f32 %v4394, %v4395
        %v4397 = vrot.slane %v4396, 1
        %v4398 = vmax.f32 %v4396, %v4397
        %v4399 = vsel %vm3019, %v2523, -inf
        %v4400 = vrot.slane %v4399, 4
        %v4401 = vmax.f32 %v4399, %v4400
        %v4402 = vrot.slane %v4401, 2
        %v4403 = vmax.f32 %v4401, %v4402
        %v4404 = vrot.slane %v4403, 1
        %v4405 = vmax.f32 %v4403, %v4404
        %v4406 = vsel %vm3019, %v2522, -inf
        %v4407 = vrot.slane %v4406, 4
        %v4408 = vmax.f32 %v4406, %v4407
        %v4409 = vrot.slane %v4408, 2
        %v4410 = vmax.f32 %v4408, %v4409
        %v4411 = vrot.slane %v4410, 1
        %v4412 = vmax.f32 %v4410, %v4411
        %v4413 = vsel %vm3019, %v2524, -inf
        %v4414 = vrot.slane %v4413, 4
        %v4415 = vmax.f32 %v4413, %v4414
        %v4416 = vrot.slane %v4415, 2
        %v4417 = vmax.f32 %v4415, %v4416
        %v4418 = vrot.slane %v4417, 1
        %v4419 = vmax.f32 %v4417, %v4418
        %v4420 = vsel %vm3019, %v2532, -inf
        %v4421 = vrot.slane %v4420, 4
        %v4422 = vmax.f32 %v4420, %v4421
        %v4423 = vrot.slane %v4422, 2
        %v4424 = vmax.f32 %v4422, %v4423
        %v4425 = vrot.slane %v4424, 1
        %v4426 = vmax.f32 %v4424, %v4425
        %v4427 = vsel %vm3019, %v2540, -inf
        %v4428 = vrot.slane %v4427, 4
        %v4429 = vmax.f32 %v4427, %v4428
        %v4430 = vrot.slane %v4429, 2
        %v4431 = vmax.f32 %v4429, %v4430
        %v4432 = vrot.slane %v4431, 1
        %v4433 = vmax.f32 %v4431, %v4432
        %v4434 = vsel %vm3019, %v2539, -inf
        %v4435 = vrot.slane %v4434, 4
        %v4436 = vmax.f32 %v4434, %v4435
        %v4437 = vrot.slane %v4436, 2
        %v4438 = vmax.f32 %v4436, %v4437
        %v4439 = vrot.slane %v4438, 1
        %v4440 = vmax.f32 %v4438, %v4439
        %v4441 = vsel %vm3019, %v2541, -inf
        %v4442 = vrot.slane %v4441, 4
        %v4443 = vmax.f32 %v4441, %v4442
        %v4444 = vrot.slane %v4443, 2
        %v4445 = vmax.f32 %v4443, %v4444
        %v4446 = vrot.slane %v4445, 1
        %v4447 = vmax.f32 %v4445, %v4446
        %v4448 = vsel %vm3019, %v2549, -inf
        %v4449 = vrot.slane %v4448, 4
        %v4450 = vmax.f32 %v4448, %v4449
        %v4451 = vrot.slane %v4450, 2
        %v4452 = vmax.f32 %v4450, %v4451
        %v4453 = vrot.slane %v4452, 1
        %v4454 = vmax.f32 %v4452, %v4453
        %v4455 = vsel %vm3019, %v2557, -inf
        %v4456 = vrot.slane %v4455, 4
        %v4457 = vmax.f32 %v4455, %v4456
        %v4458 = vrot.slane %v4457, 2
        %v4459 = vmax.f32 %v4457, %v4458
        %v4460 = vrot.slane %v4459, 1
        %v4461 = vmax.f32 %v4459, %v4460
        %v4462 = vsel %vm3019, %v2556, -inf
        %v4463 = vrot.slane %v4462, 4
        %v4464 = vmax.f32 %v4462, %v4463
        %v4465 = vrot.slane %v4464, 2
        %v4466 = vmax.f32 %v4464, %v4465
        %v4467 = vrot.slane %v4466, 1
        %v4468 = vmax.f32 %v4466, %v4467
        %v4469 = vsel %vm3019, %v2558, -inf
        %v4470 = vrot.slane %v4469, 4
        %v4471 = vmax.f32 %v4469, %v4470
        %v4472 = vrot.slane %v4471, 2
        %v4473 = vmax.f32 %v4471, %v4472
        %v4474 = vrot.slane %v4473, 1
        %v4475 = vmax.f32 %v4473, %v4474
        %v4476 = vsel %vm3019, %v2566, -inf
        %v4477 = vrot.slane %v4476, 4
        %v4478 = vmax.f32 %v4476, %v4477
        %v4479 = vrot.slane %v4478, 2
        %v4480 = vmax.f32 %v4478, %v4479
        %v4481 = vrot.slane %v4480, 1
        %v4482 = vmax.f32 %v4480, %v4481
        %v4483 = vsel %vm3019, %v2574, -inf
        %v4484 = vrot.slane %v4483, 4
        %v4485 = vmax.f32 %v4483, %v4484
        %v4486 = vrot.slane %v4485, 2
        %v4487 = vmax.f32 %v4485, %v4486
        %v4488 = vrot.slane %v4487, 1
        %v4489 = vmax.f32 %v4487, %v4488
        %v4490 = vsel %vm3019, %v2573, -inf
        %v4491 = vrot.slane %v4490, 4
        %v4492 = vmax.f32 %v4490, %v4491
        %v4493 = vrot.slane %v4492, 2
        %v4494 = vmax.f32 %v4492, %v4493
        %v4495 = vrot.slane %v4494, 1
        %v4496 = vmax.f32 %v4494, %v4495
        %v4497 = vsel %vm3019, %v2575, -inf
        %v4498 = vrot.slane %v4497, 4
        %v4499 = vmax.f32 %v4497, %v4498
        %v4500 = vrot.slane %v4499, 2
        %v4501 = vmax.f32 %v4499, %v4500
        %v4502 = vrot.slane %v4501, 1
        %v4503 = vmax.f32 %v4501, %v4502
        %v4504 = vsel %vm3019, %v2583, -inf
        %v4505 = vrot.slane %v4504, 4
        %v4506 = vmax.f32 %v4504, %v4505
        %v4507 = vrot.slane %v4506, 2
        %v4508 = vmax.f32 %v4506, %v4507
        %v4509 = vrot.slane %v4508, 1
        %v4510 = vmax.f32 %v4508, %v4509
        %v4511 = vsel %vm3019, %v2591, -inf
        %v4512 = vrot.slane %v4511, 4
        %v4513 = vmax.f32 %v4511, %v4512
        %v4514 = vrot.slane %v4513, 2
        %v4515 = vmax.f32 %v4513, %v4514
        %v4516 = vrot.slane %v4515, 1
        %v4517 = vmax.f32 %v4515, %v4516
        %v4518 = vsel %vm3019, %v2590, -inf
        %v4519 = vrot.slane %v4518, 4
        %v4520 = vmax.f32 %v4518, %v4519
        %v4521 = vrot.slane %v4520, 2
        %v4522 = vmax.f32 %v4520, %v4521
        %v4523 = vrot.slane %v4522, 1
        %v4524 = vmax.f32 %v4522, %v4523
        %v4525 = vsel %vm3019, %v2592, -inf
        %v4526 = vrot.slane %v4525, 4
        %v4527 = vmax.f32 %v4525, %v4526
        %v4528 = vrot.slane %v4527, 2
        %v4529 = vmax.f32 %v4527, %v4528
        %v4530 = vrot.slane %v4529, 1
        %v4531 = vmax.f32 %v4529, %v4530
        %v4532 = vsel %vm3019, %v2600, -inf
        %v4533 = vrot.slane %v4532, 4
        %v4534 = vmax.f32 %v4532, %v4533
        %v4535 = vrot.slane %v4534, 2
        %v4536 = vmax.f32 %v4534, %v4535
        %v4537 = vrot.slane %v4536, 1
        %v4538 = vmax.f32 %v4536, %v4537
        %v4539 = vsel %vm3019, %v2608, -inf
        %v4540 = vrot.slane %v4539, 4
        %v4541 = vmax.f32 %v4539, %v4540
        %v4542 = vrot.slane %v4541, 2
        %v4543 = vmax.f32 %v4541, %v4542
        %v4544 = vrot.slane %v4543, 1
        %v4545 = vmax.f32 %v4543, %v4544
        %v4546 = vsel %vm3019, %v2607, -inf
        %v4547 = vrot.slane %v4546, 4
        %v4548 = vmax.f32 %v4546, %v4547
        %v4549 = vrot.slane %v4548, 2
        %v4550 = vmax.f32 %v4548, %v4549
        %v4551 = vrot.slane %v4550, 1
        %v4552 = vmax.f32 %v4550, %v4551
        %v4553 = vsel %vm3019, %v2609, -inf
        %v4554 = vrot.slane %v4553, 4
        %v4555 = vmax.f32 %v4553, %v4554
        %v4556 = vrot.slane %v4555, 2
        %v4557 = vmax.f32 %v4555, %v4556
        %v4558 = vrot.slane %v4557, 1
        %v4559 = vmax.f32 %v4557, %v4558
        %v4560 = vsel %vm3019, %v2617, -inf
        %v4561 = vrot.slane %v4560, 4
        %v4562 = vmax.f32 %v4560, %v4561
        %v4563 = vrot.slane %v4562, 2
        %v4564 = vmax.f32 %v4562, %v4563
        %v4565 = vrot.slane %v4564, 1
        %v4566 = vmax.f32 %v4564, %v4565
        %v4567 = vsel %vm3019, %v2625, -inf
        %v4568 = vrot.slane %v4567, 4
        %v4569 = vmax.f32 %v4567, %v4568
        %v4570 = vrot.slane %v4569, 2
        %v4571 = vmax.f32 %v4569, %v4570
        %v4572 = vrot.slane %v4571, 1
        %v4573 = vmax.f32 %v4571, %v4572
        %v4574 = vsel %vm3019, %v2624, -inf
        %v4575 = vrot.slane %v4574, 4
        %v4576 = vmax.f32 %v4574, %v4575
        %v4577 = vrot.slane %v4576, 2
        %v4578 = vmax.f32 %v4576, %v4577
        %v4579 = vrot.slane %v4578, 1
        %v4580 = vmax.f32 %v4578, %v4579
        %v4581 = vsel %vm3019, %v2626, -inf
        %v4582 = vrot.slane %v4581, 4
        %v4583 = vmax.f32 %v4581, %v4582
        %v4584 = vrot.slane %v4583, 2
        %v4585 = vmax.f32 %v4583, %v4584
        %v4586 = vrot.slane %v4585, 1
        %v4587 = vmax.f32 %v4585, %v4586
        %v4588 = vsel %vm3019, %v2634, -inf
        %v4589 = vrot.slane %v4588, 4
        %v4590 = vmax.f32 %v4588, %v4589
        %v4591 = vrot.slane %v4590, 2
        %v4592 = vmax.f32 %v4590, %v4591
        %v4593 = vrot.slane %v4592, 1
        %v4594 = vmax.f32 %v4592, %v4593
        %v4595 = vsel %vm3019, %v2642, -inf
        %v4596 = vrot.slane %v4595, 4
        %v4597 = vmax.f32 %v4595, %v4596
        %v4598 = vrot.slane %v4597, 2
        %v4599 = vmax.f32 %v4597, %v4598
        %v4600 = vrot.slane %v4599, 1
        %v4601 = vmax.f32 %v4599, %v4600
        %v4602 = vsel %vm3019, %v2641, -inf
        %v4603 = vrot.slane %v4602, 4
        %v4604 = vmax.f32 %v4602, %v4603
        %v4605 = vrot.slane %v4604, 2
        %v4606 = vmax.f32 %v4604, %v4605
        %v4607 = vrot.slane %v4606, 1
        %v4608 = vmax.f32 %v4606, %v4607
        %v4609 = vsel %vm3019, %v2643, -inf
        %v4610 = vrot.slane %v4609, 4
        %v4611 = vmax.f32 %v4609, %v4610
        %v4612 = vrot.slane %v4611, 2
        %v4613 = vmax.f32 %v4611, %v4612
        %v4614 = vrot.slane %v4613, 1
        %v4615 = vmax.f32 %v4613, %v4614
        %v4616 = vsel %vm3019, %v2651, -inf
        %v4617 = vrot.slane %v4616, 4
        %v4618 = vmax.f32 %v4616, %v4617
        %v4619 = vrot.slane %v4618, 2
        %v4620 = vmax.f32 %v4618, %v4619
        %v4621 = vrot.slane %v4620, 1
        %v4622 = vmax.f32 %v4620, %v4621
        %v4623 = vsel %vm3019, %v2659, -inf
        %v4624 = vrot.slane %v4623, 4
        %v4625 = vmax.f32 %v4623, %v4624
        %v4626 = vrot.slane %v4625, 2
        %v4627 = vmax.f32 %v4625, %v4626
        %v4628 = vrot.slane %v4627, 1
        %v4629 = vmax.f32 %v4627, %v4628
        %v4630 = vsel %vm3019, %v2658, -inf
        %v4631 = vrot.slane %v4630, 4
        %v4632 = vmax.f32 %v4630, %v4631
        %v4633 = vrot.slane %v4632, 2
        %v4634 = vmax.f32 %v4632, %v4633
        %v4635 = vrot.slane %v4634, 1
        %v4636 = vmax.f32 %v4634, %v4635
        %v4637 = vsel %vm3019, %v2660, -inf
        %v4638 = vrot.slane %v4637, 4
        %v4639 = vmax.f32 %v4637, %v4638
        %v4640 = vrot.slane %v4639, 2
        %v4641 = vmax.f32 %v4639, %v4640
        %v4642 = vrot.slane %v4641, 1
        %v4643 = vmax.f32 %v4641, %v4642
        %v4644 = vsel %vm3019, %v2668, -inf
        %v4645 = vrot.slane %v4644, 4
        %v4646 = vmax.f32 %v4644, %v4645
        %v4647 = vrot.slane %v4646, 2
        %v4648 = vmax.f32 %v4646, %v4647
        %v4649 = vrot.slane %v4648, 1
        %v4650 = vmax.f32 %v4648, %v4649
        %v4651 = vsel %vm3019, %v2676, -inf
        %v4652 = vrot.slane %v4651, 4
        %v4653 = vmax.f32 %v4651, %v4652
        %v4654 = vrot.slane %v4653, 2
        %v4655 = vmax.f32 %v4653, %v4654
        %v4656 = vrot.slane %v4655, 1
        %v4657 = vmax.f32 %v4655, %v4656
        %v4658 = vsel %vm3019, %v2675, -inf
        %v4659 = vrot.slane %v4658, 4
        %v4660 = vmax.f32 %v4658, %v4659
        %v4661 = vrot.slane %v4660, 2
        %v4662 = vmax.f32 %v4660, %v4661
        %v4663 = vrot.slane %v4662, 1
        %v4664 = vmax.f32 %v4662, %v4663
        %v4665 = vsel %vm3019, %v2677, -inf
        %v4666 = vrot.slane %v4665, 4
        %v4667 = vmax.f32 %v4665, %v4666
        %v4668 = vrot.slane %v4667, 2
        %v4669 = vmax.f32 %v4667, %v4668
        %v4670 = vrot.slane %v4669, 1
        %v4671 = vmax.f32 %v4669, %v4670
        %v4672 = vsel %vm3019, %v2685, -inf
        %v4673 = vrot.slane %v4672, 4
        %v4674 = vmax.f32 %v4672, %v4673
        %v4675 = vrot.slane %v4674, 2
        %v4676 = vmax.f32 %v4674, %v4675
        %v4677 = vrot.slane %v4676, 1
        %v4678 = vmax.f32 %v4676, %v4677
        %v4679 = vsel %vm3019, %v2693, -inf
        %v4680 = vrot.slane %v4679, 4
        %v4681 = vmax.f32 %v4679, %v4680
        %v4682 = vrot.slane %v4681, 2
        %v4683 = vmax.f32 %v4681, %v4682
        %v4684 = vrot.slane %v4683, 1
        %v4685 = vmax.f32 %v4683, %v4684
        %v4686 = vsel %vm3019, %v2692, -inf
        %v4687 = vrot.slane %v4686, 4
        %v4688 = vmax.f32 %v4686, %v4687
        %v4689 = vrot.slane %v4688, 2
        %v4690 = vmax.f32 %v4688, %v4689
        %v4691 = vrot.slane %v4690, 1
        %v4692 = vmax.f32 %v4690, %v4691
        %v4693 = vsel %vm3019, %v2694, -inf
        %v4694 = vrot.slane %v4693, 4
        %v4695 = vmax.f32 %v4693, %v4694
        %v4696 = vrot.slane %v4695, 2
        %v4697 = vmax.f32 %v4695, %v4696
        %v4698 = vrot.slane %v4697, 1
        %v4699 = vmax.f32 %v4697, %v4698
        %v4700 = vsel %vm3019, %v2702, -inf
        %v4701 = vrot.slane %v4700, 4
        %v4702 = vmax.f32 %v4700, %v4701
        %v4703 = vrot.slane %v4702, 2
        %v4704 = vmax.f32 %v4702, %v4703
        %v4705 = vrot.slane %v4704, 1
        %v4706 = vmax.f32 %v4704, %v4705
        %v4707 = vsel %vm3019, %v2710, -inf
        %v4708 = vrot.slane %v4707, 4
        %v4709 = vmax.f32 %v4707, %v4708
        %v4710 = vrot.slane %v4709, 2
        %v4711 = vmax.f32 %v4709, %v4710
        %v4712 = vrot.slane %v4711, 1
        %v4713 = vmax.f32 %v4711, %v4712
        %v4714 = vsel %vm3019, %v2709, -inf
        %v4715 = vrot.slane %v4714, 4
        %v4716 = vmax.f32 %v4714, %v4715
        %v4717 = vrot.slane %v4716, 2
        %v4718 = vmax.f32 %v4716, %v4717
        %v4719 = vrot.slane %v4718, 1
        %v4720 = vmax.f32 %v4718, %v4719
        %v4721 = vsel %vm3019, %v2711, -inf
        %v4722 = vrot.slane %v4721, 4
        %v4723 = vmax.f32 %v4721, %v4722
        %v4724 = vrot.slane %v4723, 2
        %v4725 = vmax.f32 %v4723, %v4724
        %v4726 = vrot.slane %v4725, 1
        %v4727 = vmax.f32 %v4725, %v4726
        %v4728 = vsel %vm3019, %v2719, -inf
        %v4729 = vrot.slane %v4728, 4
        %v4730 = vmax.f32 %v4728, %v4729
        %v4731 = vrot.slane %v4730, 2
        %v4732 = vmax.f32 %v4730, %v4731
        %v4733 = vrot.slane %v4732, 1
        %v4734 = vmax.f32 %v4732, %v4733
        %v4735 = vsel %vm3019, %v2727, -inf
        %v4736 = vrot.slane %v4735, 4
        %v4737 = vmax.f32 %v4735, %v4736
        %v4738 = vrot.slane %v4737, 2
        %v4739 = vmax.f32 %v4737, %v4738
        %v4740 = vrot.slane %v4739, 1
        %v4741 = vmax.f32 %v4739, %v4740
        %v4742 = vsel %vm3019, %v2726, -inf
        %v4743 = vrot.slane %v4742, 4
        %v4744 = vmax.f32 %v4742, %v4743
        %v4745 = vrot.slane %v4744, 2
        %v4746 = vmax.f32 %v4744, %v4745
        %v4747 = vrot.slane %v4746, 1
        %v4748 = vmax.f32 %v4746, %v4747
        %v4749 = vsel %vm3019, %v2728, -inf
        %v4750 = vrot.slane %v4749, 4
        %v4751 = vmax.f32 %v4749, %v4750
        %v4752 = vrot.slane %v4751, 2
        %v4753 = vmax.f32 %v4751, %v4752
        %v4754 = vrot.slane %v4753, 1
        %v4755 = vmax.f32 %v4753, %v4754
        %v4756 = vsel %vm3019, %v2736, -inf
        %v4757 = vrot.slane %v4756, 4
        %v4758 = vmax.f32 %v4756, %v4757
        %v4759 = vrot.slane %v4758, 2
        %v4760 = vmax.f32 %v4758, %v4759
        %v4761 = vrot.slane %v4760, 1
        %v4762 = vmax.f32 %v4760, %v4761
        %v4763 = vsel %vm3019, %v2744, -inf
        %v4764 = vrot.slane %v4763, 4
        %v4765 = vmax.f32 %v4763, %v4764
        %v4766 = vrot.slane %v4765, 2
        %v4767 = vmax.f32 %v4765, %v4766
        %v4768 = vrot.slane %v4767, 1
        %v4769 = vmax.f32 %v4767, %v4768
        %v4770 = vsel %vm3019, %v2743, -inf
        %v4771 = vrot.slane %v4770, 4
        %v4772 = vmax.f32 %v4770, %v4771
        %v4773 = vrot.slane %v4772, 2
        %v4774 = vmax.f32 %v4772, %v4773
        %v4775 = vrot.slane %v4774, 1
        %v4776 = vmax.f32 %v4774, %v4775
        %v4777 = vsel %vm3019, %v2745, -inf
        %v4778 = vrot.slane %v4777, 4
        %v4779 = vmax.f32 %v4777, %v4778
        %v4780 = vrot.slane %v4779, 2
        %v4781 = vmax.f32 %v4779, %v4780
        %v4782 = vrot.slane %v4781, 1
        %v4783 = vmax.f32 %v4781, %v4782
        %v4784 = vsel %vm3019, %v2753, -inf
        %v4785 = vrot.slane %v4784, 4
        %v4786 = vmax.f32 %v4784, %v4785
        %v4787 = vrot.slane %v4786, 2
        %v4788 = vmax.f32 %v4786, %v4787
        %v4789 = vrot.slane %v4788, 1
        %v4790 = vmax.f32 %v4788, %v4789
        %v4791 = vsel %vm3019, %v2761, -inf
        %v4792 = vrot.slane %v4791, 4
        %v4793 = vmax.f32 %v4791, %v4792
        %v4794 = vrot.slane %v4793, 2
        %v4795 = vmax.f32 %v4793, %v4794
        %v4796 = vrot.slane %v4795, 1
        %v4797 = vmax.f32 %v4795, %v4796
        %v4798 = vsel %vm3019, %v2760, -inf
        %v4799 = vrot.slane %v4798, 4
        %v4800 = vmax.f32 %v4798, %v4799
        %v4801 = vrot.slane %v4800, 2
        %v4802 = vmax.f32 %v4800, %v4801
        %v4803 = vrot.slane %v4802, 1
        %v4804 = vmax.f32 %v4802, %v4803
        %v4805 = vsel %vm3019, %v2762, -inf
        %v4806 = vrot.slane %v4805, 4
        %v4807 = vmax.f32 %v4805, %v4806
        %v4808 = vrot.slane %v4807, 2
        %v4809 = vmax.f32 %v4807, %v4808
        %v4810 = vrot.slane %v4809, 1
        %v4811 = vmax.f32 %v4809, %v4810
        %v4812 = vpack.c.bf16 %v3026, %v3026
        %v4813 = vpack.c.bf16 %v3033, %v3033
        %v4814 = vpack.c.bf16 %v3040, %v3040
        %v4815 = vpack.c.bf16 %v3047, %v3047
        %v4816 = vpack.c.bf16 %v3054, %v3054
        %v4817 = vpack.c.bf16 %v3061, %v3061
        %v4818 = vpack.c.bf16 %v3068, %v3068
        %v4819 = vpack.c.bf16 %v3075, %v3075
        %v4820 = vpack.c.bf16 %v3082, %v3082
        %v4821 = vpack.c.bf16 %v3089, %v3089
        %v4822 = vpack.c.bf16 %v3096, %v3096
        %v4823 = vpack.c.bf16 %v3103, %v3103
        %v4824 = vpack.c.bf16 %v3110, %v3110
        %v4825 = vpack.c.bf16 %v3117, %v3117
        %v4826 = vpack.c.bf16 %v3124, %v3124
        %v4827 = vpack.c.bf16 %v3131, %v3131
        %v4828 = vpack.c.bf16 %v3138, %v3138
        %v4829 = vpack.c.bf16 %v3145, %v3145
        %v4830 = vpack.c.bf16 %v3152, %v3152
        %v4831 = vpack.c.bf16 %v3159, %v3159
        %v4832 = vpack.c.bf16 %v3166, %v3166
        %v4833 = vpack.c.bf16 %v3173, %v3173
        %v4834 = vpack.c.bf16 %v3180, %v3180
        %v4835 = vpack.c.bf16 %v3187, %v3187
        %v4836 = vpack.c.bf16 %v3194, %v3194
        %v4837 = vpack.c.bf16 %v3201, %v3201
        %v4838 = vpack.c.bf16 %v3208, %v3208
        %v4839 = vpack.c.bf16 %v3215, %v3215
        %v4840 = vpack.c.bf16 %v3222, %v3222
        %v4841 = vpack.c.bf16 %v3229, %v3229
        %v4842 = vpack.c.bf16 %v3236, %v3236
        %v4843 = vpack.c.bf16 %v3243, %v3243
        %v4844 = vpack.c.bf16 %v3250, %v3250
        %v4845 = vpack.c.bf16 %v3257, %v3257
        %v4846 = vpack.c.bf16 %v3264, %v3264
        %v4847 = vpack.c.bf16 %v3271, %v3271
        %v4848 = vpack.c.bf16 %v3278, %v3278
        %v4849 = vpack.c.bf16 %v3285, %v3285
        %v4850 = vpack.c.bf16 %v3292, %v3292
        %v4851 = vpack.c.bf16 %v3299, %v3299
        %v4852 = vpack.c.bf16 %v3306, %v3306
        %v4853 = vpack.c.bf16 %v3313, %v3313
        %v4854 = vpack.c.bf16 %v3320, %v3320
        %v4855 = vpack.c.bf16 %v3327, %v3327
        %v4856 = vpack.c.bf16 %v3334, %v3334
        %v4857 = vpack.c.bf16 %v3341, %v3341
        %v4858 = vpack.c.bf16 %v3348, %v3348
        %v4859 = vpack.c.bf16 %v3355, %v3355
        %v4860 = vpack.c.bf16 %v3362, %v3362
        %v4861 = vpack.c.bf16 %v3369, %v3369
        %v4862 = vpack.c.bf16 %v3376, %v3376
        %v4863 = vpack.c.bf16 %v3383, %v3383
        %v4864 = vpack.c.bf16 %v3390, %v3390
        %v4865 = vpack.c.bf16 %v3397, %v3397
        %v4866 = vpack.c.bf16 %v3404, %v3404
        %v4867 = vpack.c.bf16 %v3411, %v3411
        %v4868 = vpack.c.bf16 %v3418, %v3418
        %v4869 = vpack.c.bf16 %v3425, %v3425
        %v4870 = vpack.c.bf16 %v3432, %v3432
        %v4871 = vpack.c.bf16 %v3439, %v3439
        %v4872 = vpack.c.bf16 %v3446, %v3446
        %v4873 = vpack.c.bf16 %v3453, %v3453
        %v4874 = vpack.c.bf16 %v3460, %v3460
        %v4875 = vpack.c.bf16 %v3467, %v3467
        %v4876 = vpack.c.bf16 %v3474, %v3474
        %v4877 = vpack.c.bf16 %v3481, %v3481
        %v4878 = vpack.c.bf16 %v3488, %v3488
        %v4879 = vpack.c.bf16 %v3495, %v3495
        %v4880 = vpack.c.bf16 %v3502, %v3502
        %v4881 = vpack.c.bf16 %v3509, %v3509
        %v4882 = vpack.c.bf16 %v3516, %v3516
        %v4883 = vpack.c.bf16 %v3523, %v3523
        %v4884 = vpack.c.bf16 %v3530, %v3530
        %v4885 = vpack.c.bf16 %v3537, %v3537
        %v4886 = vpack.c.bf16 %v3544, %v3544
        %v4887 = vpack.c.bf16 %v3551, %v3551
        %v4888 = vpack.c.bf16 %v3558, %v3558
        %v4889 = vpack.c.bf16 %v3565, %v3565
        %v4890 = vpack.c.bf16 %v3572, %v3572
        %v4891 = vpack.c.bf16 %v3579, %v3579
        %v4892 = vpack.c.bf16 %v3586, %v3586
        %v4893 = vpack.c.bf16 %v3593, %v3593
        %v4894 = vpack.c.bf16 %v3600, %v3600
        %v4895 = vpack.c.bf16 %v3607, %v3607
        %v4896 = vpack.c.bf16 %v3614, %v3614
        %v4897 = vpack.c.bf16 %v3621, %v3621
        %v4898 = vpack.c.bf16 %v3628, %v3628
        %v4899 = vpack.c.bf16 %v3635, %v3635
        %v4900 = vpack.c.bf16 %v3642, %v3642
        %v4901 = vpack.c.bf16 %v3649, %v3649
        %v4902 = vpack.c.bf16 %v3656, %v3656
        %v4903 = vpack.c.bf16 %v3663, %v3663
        %v4904 = vpack.c.bf16 %v3670, %v3670
        %v4905 = vpack.c.bf16 %v3677, %v3677
        %v4906 = vpack.c.bf16 %v3684, %v3684
        %v4907 = vpack.c.bf16 %v3691, %v3691
        %v4908 = vpack.c.bf16 %v3698, %v3698
        %v4909 = vpack.c.bf16 %v3705, %v3705
        %v4910 = vpack.c.bf16 %v3712, %v3712
        %v4911 = vpack.c.bf16 %v3719, %v3719
        %v4912 = vpack.c.bf16 %v3726, %v3726
        %v4913 = vpack.c.bf16 %v3733, %v3733
        %v4914 = vpack.c.bf16 %v3740, %v3740
        %v4915 = vpack.c.bf16 %v3747, %v3747
        %v4916 = vpack.c.bf16 %v3754, %v3754
        %v4917 = vpack.c.bf16 %v3761, %v3761
        %v4918 = vpack.c.bf16 %v3768, %v3768
        %v4919 = vpack.c.bf16 %v3775, %v3775
        %v4920 = vpack.c.bf16 %v3782, %v3782
        %v4921 = vpack.c.bf16 %v3789, %v3789
        %v4922 = vpack.c.bf16 %v3796, %v3796
        %v4923 = vpack.c.bf16 %v3803, %v3803
        %v4924 = vpack.c.bf16 %v3810, %v3810
        %v4925 = vpack.c.bf16 %v3817, %v3817
        %v4926 = vpack.c.bf16 %v3824, %v3824
        %v4927 = vpack.c.bf16 %v3831, %v3831
        %v4928 = vpack.c.bf16 %v3838, %v3838
        %v4929 = vpack.c.bf16 %v3845, %v3845
        %v4930 = vpack.c.bf16 %v3852, %v3852
        %v4931 = vpack.c.bf16 %v3859, %v3859
        %v4932 = vpack.c.bf16 %v3866, %v3866
        %v4933 = vpack.c.bf16 %v3873, %v3873
        %v4934 = vpack.c.bf16 %v3880, %v3880
        %v4935 = vpack.c.bf16 %v3887, %v3887
        %v4936 = vpack.c.bf16 %v3894, %v3894
        %v4937 = vpack.c.bf16 %v3901, %v3901
        %v4938 = vpack.c.bf16 %v3908, %v3908
        %v4939 = vpack.c.bf16 %v3915, %v3915
        %v4940 = vpack.c.bf16 %v3922, %v3922
        %v4941 = vpack.c.bf16 %v3929, %v3929
        %v4942 = vpack.c.bf16 %v3936, %v3936
        %v4943 = vpack.c.bf16 %v3943, %v3943
        %v4944 = vpack.c.bf16 %v3950, %v3950
        %v4945 = vpack.c.bf16 %v3957, %v3957
        %v4946 = vpack.c.bf16 %v3964, %v3964
        %v4947 = vpack.c.bf16 %v3971, %v3971
        %v4948 = vpack.c.bf16 %v3978, %v3978
        %v4949 = vpack.c.bf16 %v3985, %v3985
        %v4950 = vpack.c.bf16 %v3992, %v3992
        %v4951 = vpack.c.bf16 %v3999, %v3999
        %v4952 = vpack.c.bf16 %v4006, %v4006
        %v4953 = vpack.c.bf16 %v4013, %v4013
        %v4954 = vpack.c.bf16 %v4020, %v4020
        %v4955 = vpack.c.bf16 %v4027, %v4027
        %v4956 = vpack.c.bf16 %v4034, %v4034
        %v4957 = vpack.c.bf16 %v4041, %v4041
        %v4958 = vpack.c.bf16 %v4048, %v4048
        %v4959 = vpack.c.bf16 %v4055, %v4055
        %v4960 = vpack.c.bf16 %v4062, %v4062
        %v4961 = vpack.c.bf16 %v4069, %v4069
        %v4962 = vpack.c.bf16 %v4076, %v4076
        %v4963 = vpack.c.bf16 %v4083, %v4083
        %v4964 = vpack.c.bf16 %v4090, %v4090
        %v4965 = vpack.c.bf16 %v4097, %v4097
        %v4966 = vpack.c.bf16 %v4104, %v4104
        %v4967 = vpack.c.bf16 %v4111, %v4111
        %v4968 = vpack.c.bf16 %v4118, %v4118
        %v4969 = vpack.c.bf16 %v4125, %v4125
        %v4970 = vpack.c.bf16 %v4132, %v4132
        %v4971 = vpack.c.bf16 %v4139, %v4139
        %v4972 = vpack.c.bf16 %v4146, %v4146
        %v4973 = vpack.c.bf16 %v4153, %v4153
        %v4974 = vpack.c.bf16 %v4160, %v4160
        %v4975 = vpack.c.bf16 %v4167, %v4167
        %v4976 = vpack.c.bf16 %v4174, %v4174
        %v4977 = vpack.c.bf16 %v4181, %v4181
        %v4978 = vpack.c.bf16 %v4188, %v4188
        %v4979 = vpack.c.bf16 %v4195, %v4195
        %v4980 = vpack.c.bf16 %v4202, %v4202
        %v4981 = vpack.c.bf16 %v4209, %v4209
        %v4982 = vpack.c.bf16 %v4216, %v4216
        %v4983 = vpack.c.bf16 %v4223, %v4223
        %v4984 = vpack.c.bf16 %v4230, %v4230
        %v4985 = vpack.c.bf16 %v4237, %v4237
        %v4986 = vpack.c.bf16 %v4244, %v4244
        %v4987 = vpack.c.bf16 %v4251, %v4251
        %v4988 = vpack.c.bf16 %v4258, %v4258
        %v4989 = vpack.c.bf16 %v4265, %v4265
        %v4990 = vpack.c.bf16 %v4272, %v4272
        %v4991 = vpack.c.bf16 %v4279, %v4279
        %v4992 = vpack.c.bf16 %v4286, %v4286
        %v4993 = vpack.c.bf16 %v4293, %v4293
        %v4994 = vpack.c.bf16 %v4300, %v4300
        %v4995 = vpack.c.bf16 %v4307, %v4307
        %v4996 = vpack.c.bf16 %v4314, %v4314
        %v4997 = vpack.c.bf16 %v4321, %v4321
        %v4998 = vpack.c.bf16 %v4328, %v4328
        %v4999 = vpack.c.bf16 %v4335, %v4335
        %v5000 = vpack.c.bf16 %v4342, %v4342
        %v5001 = vpack.c.bf16 %v4349, %v4349
        %v5002 = vpack.c.bf16 %v4356, %v4356
        %v5003 = vpack.c.bf16 %v4363, %v4363
        %v5004 = vpack.c.bf16 %v4370, %v4370
        %v5005 = vpack.c.bf16 %v4377, %v4377
        %v5006 = vpack.c.bf16 %v4384, %v4384
        %v5007 = vpack.c.bf16 %v4391, %v4391
        %v5008 = vpack.c.bf16 %v4398, %v4398
        %v5009 = vpack.c.bf16 %v4405, %v4405
        %v5010 = vpack.c.bf16 %v4412, %v4412
        %v5011 = vpack.c.bf16 %v4419, %v4419
        %v5012 = vpack.c.bf16 %v4426, %v4426
        %v5013 = vpack.c.bf16 %v4433, %v4433
        %v5014 = vpack.c.bf16 %v4440, %v4440
        %v5015 = vpack.c.bf16 %v4447, %v4447
        %v5016 = vpack.c.bf16 %v4454, %v4454
        %v5017 = vpack.c.bf16 %v4461, %v4461
        %v5018 = vpack.c.bf16 %v4468, %v4468
        %v5019 = vpack.c.bf16 %v4475, %v4475
        %v5020 = vpack.c.bf16 %v4482, %v4482
        %v5021 = vpack.c.bf16 %v4489, %v4489
        %v5022 = vpack.c.bf16 %v4496, %v4496
        %v5023 = vpack.c.bf16 %v4503, %v4503
        %v5024 = vpack.c.bf16 %v4510, %v4510
        %v5025 = vpack.c.bf16 %v4517, %v4517
        %v5026 = vpack.c.bf16 %v4524, %v4524
        %v5027 = vpack.c.bf16 %v4531, %v4531
        %v5028 = vpack.c.bf16 %v4538, %v4538
        %v5029 = vpack.c.bf16 %v4545, %v4545
        %v5030 = vpack.c.bf16 %v4552, %v4552
        %v5031 = vpack.c.bf16 %v4559, %v4559
        %v5032 = vpack.c.bf16 %v4566, %v4566
        %v5033 = vpack.c.bf16 %v4573, %v4573
        %v5034 = vpack.c.bf16 %v4580, %v4580
        %v5035 = vpack.c.bf16 %v4587, %v4587
        %v5036 = vpack.c.bf16 %v4594, %v4594
        %v5037 = vpack.c.bf16 %v4601, %v4601
        %v5038 = vpack.c.bf16 %v4608, %v4608
        %v5039 = vpack.c.bf16 %v4615, %v4615
        %v5040 = vpack.c.bf16 %v4622, %v4622
        %v5041 = vpack.c.bf16 %v4629, %v4629
        %v5042 = vpack.c.bf16 %v4636, %v4636
        %v5043 = vpack.c.bf16 %v4643, %v4643
        %v5044 = vpack.c.bf16 %v4650, %v4650
        %v5045 = vpack.c.bf16 %v4657, %v4657
        %v5046 = vpack.c.bf16 %v4664, %v4664
        %v5047 = vpack.c.bf16 %v4671, %v4671
        %v5048 = vpack.c.bf16 %v4678, %v4678
        %v5049 = vpack.c.bf16 %v4685, %v4685
        %v5050 = vpack.c.bf16 %v4692, %v4692
        %v5051 = vpack.c.bf16 %v4699, %v4699
        %v5052 = vpack.c.bf16 %v4706, %v4706
        %v5053 = vpack.c.bf16 %v4713, %v4713
        %v5054 = vpack.c.bf16 %v4720, %v4720
        %v5055 = vpack.c.bf16 %v4727, %v4727
        %v5056 = vpack.c.bf16 %v4734, %v4734
        %v5057 = vpack.c.bf16 %v4741, %v4741
        %v5058 = vpack.c.bf16 %v4748, %v4748
        %v5059 = vpack.c.bf16 %v4755, %v4755
        %v5060 = vpack.c.bf16 %v4762, %v4762
        %v5061 = vpack.c.bf16 %v4769, %v4769
        %v5062 = vpack.c.bf16 %v4776, %v4776
        %v5063 = vpack.c.bf16 %v4783, %v4783
        %v5064 = vpack.c.bf16 %v4790, %v4790
        %v5065 = vpack.c.bf16 %v4797, %v4797
        %v5066 = vpack.c.bf16 %v4804, %v4804
        %v5067 = vpack.c.bf16 %v4811, %v4811
        %v5324 = vunpack.c.l.b16 %v4812
        %v5325 = vunpack.c.l.b16 %v4813
        %v5326 = vunpack.c.l.b16 %v4814
        %v5327 = vunpack.c.l.b16 %v4815
        %v5328 = vunpack.c.l.b16 %v4816
        %v5329 = vunpack.c.l.b16 %v4817
        %v5330 = vunpack.c.l.b16 %v4818
        %v5331 = vunpack.c.l.b16 %v4819
        %v5332 = vunpack.c.l.b16 %v4820
        %v5333 = vunpack.c.l.b16 %v4821
        %v5334 = vunpack.c.l.b16 %v4822
        %v5335 = vunpack.c.l.b16 %v4823
        %v5336 = vunpack.c.l.b16 %v4824
        %v5337 = vunpack.c.l.b16 %v4825
        %v5338 = vunpack.c.l.b16 %v4826
        %v5339 = vunpack.c.l.b16 %v4827
        %v5340 = vunpack.c.l.b16 %v4828
        %v5341 = vunpack.c.l.b16 %v4829
        %v5342 = vunpack.c.l.b16 %v4830
        %v5343 = vunpack.c.l.b16 %v4831
        %v5344 = vunpack.c.l.b16 %v4832
        %v5345 = vunpack.c.l.b16 %v4833
        %v5346 = vunpack.c.l.b16 %v4834
        %v5347 = vunpack.c.l.b16 %v4835
        %v5348 = vunpack.c.l.b16 %v4836
        %v5349 = vunpack.c.l.b16 %v4837
        %v5350 = vunpack.c.l.b16 %v4838
        %v5351 = vunpack.c.l.b16 %v4839
        %v5352 = vunpack.c.l.b16 %v4840
        %v5353 = vunpack.c.l.b16 %v4841
        %v5354 = vunpack.c.l.b16 %v4842
        %v5355 = vunpack.c.l.b16 %v4843
        %v5356 = vunpack.c.l.b16 %v4844
        %v5357 = vunpack.c.l.b16 %v4845
        %v5358 = vunpack.c.l.b16 %v4846
        %v5359 = vunpack.c.l.b16 %v4847
        %v5360 = vunpack.c.l.b16 %v4848
        %v5361 = vunpack.c.l.b16 %v4849
        %v5362 = vunpack.c.l.b16 %v4850
        %v5363 = vunpack.c.l.b16 %v4851
        %v5364 = vunpack.c.l.b16 %v4852
        %v5365 = vunpack.c.l.b16 %v4853
        %v5366 = vunpack.c.l.b16 %v4854
        %v5367 = vunpack.c.l.b16 %v4855
        %v5368 = vunpack.c.l.b16 %v4856
        %v5369 = vunpack.c.l.b16 %v4857
        %v5370 = vunpack.c.l.b16 %v4858
        %v5371 = vunpack.c.l.b16 %v4859
        %v5372 = vunpack.c.l.b16 %v4860
        %v5373 = vunpack.c.l.b16 %v4861
        %v5374 = vunpack.c.l.b16 %v4862
        %v5375 = vunpack.c.l.b16 %v4863
        %v5376 = vunpack.c.l.b16 %v4864
        %v5377 = vunpack.c.l.b16 %v4865
        %v5378 = vunpack.c.l.b16 %v4866
        %v5379 = vunpack.c.l.b16 %v4867
        %v5380 = vunpack.c.l.b16 %v4868
        %v5381 = vunpack.c.l.b16 %v4869
        %v5382 = vunpack.c.l.b16 %v4870
        %v5383 = vunpack.c.l.b16 %v4871
        %v5384 = vunpack.c.l.b16 %v4872
        %v5385 = vunpack.c.l.b16 %v4873
        %v5386 = vunpack.c.l.b16 %v4874
        %v5387 = vunpack.c.l.b16 %v4875
        %v5388 = vunpack.c.l.b16 %v4876
        %v5389 = vunpack.c.l.b16 %v4877
        %v5390 = vunpack.c.l.b16 %v4878
        %v5391 = vunpack.c.l.b16 %v4879
        %v5392 = vunpack.c.l.b16 %v4880
        %v5393 = vunpack.c.l.b16 %v4881
        %v5394 = vunpack.c.l.b16 %v4882
        %v5395 = vunpack.c.l.b16 %v4883
        %v5396 = vunpack.c.l.b16 %v4884
        %v5397 = vunpack.c.l.b16 %v4885
        %v5398 = vunpack.c.l.b16 %v4886
        %v5399 = vunpack.c.l.b16 %v4887
        %v5400 = vunpack.c.l.b16 %v4888
        %v5401 = vunpack.c.l.b16 %v4889
        %v5402 = vunpack.c.l.b16 %v4890
        %v5403 = vunpack.c.l.b16 %v4891
        %v5404 = vunpack.c.l.b16 %v4892
        %v5405 = vunpack.c.l.b16 %v4893
        %v5406 = vunpack.c.l.b16 %v4894
        %v5407 = vunpack.c.l.b16 %v4895
        %v5408 = vunpack.c.l.b16 %v4896
        %v5409 = vunpack.c.l.b16 %v4897
        %v5410 = vunpack.c.l.b16 %v4898
        %v5411 = vunpack.c.l.b16 %v4899
        %v5412 = vunpack.c.l.b16 %v4900
        %v5413 = vunpack.c.l.b16 %v4901
        %v5414 = vunpack.c.l.b16 %v4902
        %v5415 = vunpack.c.l.b16 %v4903
        %v5416 = vunpack.c.l.b16 %v4904
        %v5417 = vunpack.c.l.b16 %v4905
        %v5418 = vunpack.c.l.b16 %v4906
        %v5419 = vunpack.c.l.b16 %v4907
        %v5420 = vunpack.c.l.b16 %v4908
        %v5421 = vunpack.c.l.b16 %v4909
        %v5422 = vunpack.c.l.b16 %v4910
        %v5423 = vunpack.c.l.b16 %v4911
        %v5424 = vunpack.c.l.b16 %v4912
        %v5425 = vunpack.c.l.b16 %v4913
        %v5426 = vunpack.c.l.b16 %v4914
        %v5427 = vunpack.c.l.b16 %v4915
        %v5428 = vunpack.c.l.b16 %v4916
        %v5429 = vunpack.c.l.b16 %v4917
        %v5430 = vunpack.c.l.b16 %v4918
        %v5431 = vunpack.c.l.b16 %v4919
        %v5432 = vunpack.c.l.b16 %v4920
        %v5433 = vunpack.c.l.b16 %v4921
        %v5434 = vunpack.c.l.b16 %v4922
        %v5435 = vunpack.c.l.b16 %v4923
        %v5436 = vunpack.c.l.b16 %v4924
        %v5437 = vunpack.c.l.b16 %v4925
        %v5438 = vunpack.c.l.b16 %v4926
        %v5439 = vunpack.c.l.b16 %v4927
        %v5440 = vunpack.c.l.b16 %v4928
        %v5441 = vunpack.c.l.b16 %v4929
        %v5442 = vunpack.c.l.b16 %v4930
        %v5443 = vunpack.c.l.b16 %v4931
        %v5444 = vunpack.c.l.b16 %v4932
        %v5445 = vunpack.c.l.b16 %v4933
        %v5446 = vunpack.c.l.b16 %v4934
        %v5447 = vunpack.c.l.b16 %v4935
        %v5448 = vunpack.c.l.b16 %v4936
        %v5449 = vunpack.c.l.b16 %v4937
        %v5450 = vunpack.c.l.b16 %v4938
        %v5451 = vunpack.c.l.b16 %v4939
        %v5452 = vunpack.c.l.b16 %v4940
        %v5453 = vunpack.c.l.b16 %v4941
        %v5454 = vunpack.c.l.b16 %v4942
        %v5455 = vunpack.c.l.b16 %v4943
        %v5456 = vunpack.c.l.b16 %v4944
        %v5457 = vunpack.c.l.b16 %v4945
        %v5458 = vunpack.c.l.b16 %v4946
        %v5459 = vunpack.c.l.b16 %v4947
        %v5460 = vunpack.c.l.b16 %v4948
        %v5461 = vunpack.c.l.b16 %v4949
        %v5462 = vunpack.c.l.b16 %v4950
        %v5463 = vunpack.c.l.b16 %v4951
        %v5464 = vunpack.c.l.b16 %v4952
        %v5465 = vunpack.c.l.b16 %v4953
        %v5466 = vunpack.c.l.b16 %v4954
        %v5467 = vunpack.c.l.b16 %v4955
        %v5468 = vunpack.c.l.b16 %v4956
        %v5469 = vunpack.c.l.b16 %v4957
        %v5470 = vunpack.c.l.b16 %v4958
        %v5471 = vunpack.c.l.b16 %v4959
        %v5472 = vunpack.c.l.b16 %v4960
        %v5473 = vunpack.c.l.b16 %v4961
        %v5474 = vunpack.c.l.b16 %v4962
        %v5475 = vunpack.c.l.b16 %v4963
        %v5476 = vunpack.c.l.b16 %v4964
        %v5477 = vunpack.c.l.b16 %v4965
        %v5478 = vunpack.c.l.b16 %v4966
        %v5479 = vunpack.c.l.b16 %v4967
        %v5480 = vunpack.c.l.b16 %v4968
        %v5481 = vunpack.c.l.b16 %v4969
        %v5482 = vunpack.c.l.b16 %v4970
        %v5483 = vunpack.c.l.b16 %v4971
        %v5484 = vunpack.c.l.b16 %v4972
        %v5485 = vunpack.c.l.b16 %v4973
        %v5486 = vunpack.c.l.b16 %v4974
        %v5487 = vunpack.c.l.b16 %v4975
        %v5488 = vunpack.c.l.b16 %v4976
        %v5489 = vunpack.c.l.b16 %v4977
        %v5490 = vunpack.c.l.b16 %v4978
        %v5491 = vunpack.c.l.b16 %v4979
        %v5492 = vunpack.c.l.b16 %v4980
        %v5493 = vunpack.c.l.b16 %v4981
        %v5494 = vunpack.c.l.b16 %v4982
        %v5495 = vunpack.c.l.b16 %v4983
        %v5496 = vunpack.c.l.b16 %v4984
        %v5497 = vunpack.c.l.b16 %v4985
        %v5498 = vunpack.c.l.b16 %v4986
        %v5499 = vunpack.c.l.b16 %v4987
        %v5500 = vunpack.c.l.b16 %v4988
        %v5501 = vunpack.c.l.b16 %v4989
        %v5502 = vunpack.c.l.b16 %v4990
        %v5503 = vunpack.c.l.b16 %v4991
        %v5504 = vunpack.c.l.b16 %v4992
        %v5505 = vunpack.c.l.b16 %v4993
        %v5506 = vunpack.c.l.b16 %v4994
        %v5507 = vunpack.c.l.b16 %v4995
        %v5508 = vunpack.c.l.b16 %v4996
        %v5509 = vunpack.c.l.b16 %v4997
        %v5510 = vunpack.c.l.b16 %v4998
        %v5511 = vunpack.c.l.b16 %v4999
        %v5512 = vunpack.c.l.b16 %v5000
        %v5513 = vunpack.c.l.b16 %v5001
        %v5514 = vunpack.c.l.b16 %v5002
        %v5515 = vunpack.c.l.b16 %v5003
        %v5516 = vunpack.c.l.b16 %v5004
        %v5517 = vunpack.c.l.b16 %v5005
        %v5518 = vunpack.c.l.b16 %v5006
        %v5519 = vunpack.c.l.b16 %v5007
        %v5520 = vunpack.c.l.b16 %v5008
        %v5521 = vunpack.c.l.b16 %v5009
        %v5522 = vunpack.c.l.b16 %v5010
        %v5523 = vunpack.c.l.b16 %v5011
        %v5524 = vunpack.c.l.b16 %v5012
        %v5525 = vunpack.c.l.b16 %v5013
        %v5526 = vunpack.c.l.b16 %v5014
        %v5527 = vunpack.c.l.b16 %v5015
        %v5528 = vunpack.c.l.b16 %v5016
        %v5529 = vunpack.c.l.b16 %v5017
        %v5530 = vunpack.c.l.b16 %v5018
        %v5531 = vunpack.c.l.b16 %v5019
        %v5532 = vunpack.c.l.b16 %v5020
        %v5533 = vunpack.c.l.b16 %v5021
        %v5534 = vunpack.c.l.b16 %v5022
        %v5535 = vunpack.c.l.b16 %v5023
        %v5536 = vunpack.c.l.b16 %v5024
        %v5537 = vunpack.c.l.b16 %v5025
        %v5538 = vunpack.c.l.b16 %v5026
        %v5539 = vunpack.c.l.b16 %v5027
        %v5540 = vunpack.c.l.b16 %v5028
        %v5541 = vunpack.c.l.b16 %v5029
        %v5542 = vunpack.c.l.b16 %v5030
        %v5543 = vunpack.c.l.b16 %v5031
        %v5544 = vunpack.c.l.b16 %v5032
        %v5545 = vunpack.c.l.b16 %v5033
        %v5546 = vunpack.c.l.b16 %v5034
        %v5547 = vunpack.c.l.b16 %v5035
        %v5548 = vunpack.c.l.b16 %v5036
        %v5549 = vunpack.c.l.b16 %v5037
        %v5550 = vunpack.c.l.b16 %v5038
        %v5551 = vunpack.c.l.b16 %v5039
        %v5552 = vunpack.c.l.b16 %v5040
        %v5553 = vunpack.c.l.b16 %v5041
        %v5554 = vunpack.c.l.b16 %v5042
        %v5555 = vunpack.c.l.b16 %v5043
        %v5556 = vunpack.c.l.b16 %v5044
        %v5557 = vunpack.c.l.b16 %v5045
        %v5558 = vunpack.c.l.b16 %v5046
        %v5559 = vunpack.c.l.b16 %v5047
        %v5560 = vunpack.c.l.b16 %v5048
        %v5561 = vunpack.c.l.b16 %v5049
        %v5562 = vunpack.c.l.b16 %v5050
        %v5563 = vunpack.c.l.b16 %v5051
        %v5564 = vunpack.c.l.b16 %v5052
        %v5565 = vunpack.c.l.b16 %v5053
        %v5566 = vunpack.c.l.b16 %v5054
        %v5567 = vunpack.c.l.b16 %v5055
        %v5568 = vunpack.c.l.b16 %v5056
        %v5569 = vunpack.c.l.b16 %v5057
        %v5570 = vunpack.c.l.b16 %v5058
        %v5571 = vunpack.c.l.b16 %v5059
        %v5572 = vunpack.c.l.b16 %v5060
        %v5573 = vunpack.c.l.b16 %v5061
        %v5574 = vunpack.c.l.b16 %v5062
        %v5575 = vunpack.c.l.b16 %v5063
        %v5576 = vunpack.c.l.b16 %v5064
        %v5577 = vunpack.c.l.b16 %v5065
        %v5578 = vunpack.c.l.b16 %v5066
        %v5579 = vunpack.c.l.b16 %v5067
        %v5580 = vpack.c.b16 %v5324, %v5324
        %v5581 = vpack.c.b16 %v5325, %v5325
        %v5582 = vpack.c.b16 %v5326, %v5326
        %v5583 = vpack.c.b16 %v5327, %v5327
        %v5584 = vpack.c.b16 %v5328, %v5328
        %v5585 = vpack.c.b16 %v5329, %v5329
        %v5586 = vpack.c.b16 %v5330, %v5330
        %v5587 = vpack.c.b16 %v5331, %v5331
        %v5588 = vpack.c.b16 %v5332, %v5332
        %v5589 = vpack.c.b16 %v5333, %v5333
        %v5590 = vpack.c.b16 %v5334, %v5334
        %v5591 = vpack.c.b16 %v5335, %v5335
        %v5592 = vpack.c.b16 %v5336, %v5336
        %v5593 = vpack.c.b16 %v5337, %v5337
        %v5594 = vpack.c.b16 %v5338, %v5338
        %v5595 = vpack.c.b16 %v5339, %v5339
        %v5596 = vpack.c.b16 %v5340, %v5340
        %v5597 = vpack.c.b16 %v5341, %v5341
        %v5598 = vpack.c.b16 %v5342, %v5342
        %v5599 = vpack.c.b16 %v5343, %v5343
        %v5600 = vpack.c.b16 %v5344, %v5344
        %v5601 = vpack.c.b16 %v5345, %v5345
        %v5602 = vpack.c.b16 %v5346, %v5346
        %v5603 = vpack.c.b16 %v5347, %v5347
        %v5604 = vpack.c.b16 %v5348, %v5348
        %v5605 = vpack.c.b16 %v5349, %v5349
        %v5606 = vpack.c.b16 %v5350, %v5350
        %v5607 = vpack.c.b16 %v5351, %v5351
        %v5608 = vpack.c.b16 %v5352, %v5352
        %v5609 = vpack.c.b16 %v5353, %v5353
        %v5610 = vpack.c.b16 %v5354, %v5354
        %v5611 = vpack.c.b16 %v5355, %v5355
        %v5612 = vpack.c.b16 %v5356, %v5356
        %v5613 = vpack.c.b16 %v5357, %v5357
        %v5614 = vpack.c.b16 %v5358, %v5358
        %v5615 = vpack.c.b16 %v5359, %v5359
        %v5616 = vpack.c.b16 %v5360, %v5360
        %v5617 = vpack.c.b16 %v5361, %v5361
        %v5618 = vpack.c.b16 %v5362, %v5362
        %v5619 = vpack.c.b16 %v5363, %v5363
        %v5620 = vpack.c.b16 %v5364, %v5364
        %v5621 = vpack.c.b16 %v5365, %v5365
        %v5622 = vpack.c.b16 %v5366, %v5366
        %v5623 = vpack.c.b16 %v5367, %v5367
        %v5624 = vpack.c.b16 %v5368, %v5368
        %v5625 = vpack.c.b16 %v5369, %v5369
        %v5626 = vpack.c.b16 %v5370, %v5370
        %v5627 = vpack.c.b16 %v5371, %v5371
        %v5628 = vpack.c.b16 %v5372, %v5372
        %v5629 = vpack.c.b16 %v5373, %v5373
        %v5630 = vpack.c.b16 %v5374, %v5374
        %v5631 = vpack.c.b16 %v5375, %v5375
        %v5632 = vpack.c.b16 %v5376, %v5376
        %v5633 = vpack.c.b16 %v5377, %v5377
        %v5634 = vpack.c.b16 %v5378, %v5378
        %v5635 = vpack.c.b16 %v5379, %v5379
        %v5636 = vpack.c.b16 %v5380, %v5380
        %v5637 = vpack.c.b16 %v5381, %v5381
        %v5638 = vpack.c.b16 %v5382, %v5382
        %v5639 = vpack.c.b16 %v5383, %v5383
        %v5640 = vpack.c.b16 %v5384, %v5384
        %v5641 = vpack.c.b16 %v5385, %v5385
        %v5642 = vpack.c.b16 %v5386, %v5386
        %v5643 = vpack.c.b16 %v5387, %v5387
        %v5644 = vpack.c.b16 %v5388, %v5388
        %v5645 = vpack.c.b16 %v5389, %v5389
        %v5646 = vpack.c.b16 %v5390, %v5390
        %v5647 = vpack.c.b16 %v5391, %v5391
        %v5648 = vpack.c.b16 %v5392, %v5392
        %v5649 = vpack.c.b16 %v5393, %v5393
        %v5650 = vpack.c.b16 %v5394, %v5394
        %v5651 = vpack.c.b16 %v5395, %v5395
        %v5652 = vpack.c.b16 %v5396, %v5396
        %v5653 = vpack.c.b16 %v5397, %v5397
        %v5654 = vpack.c.b16 %v5398, %v5398
        %v5655 = vpack.c.b16 %v5399, %v5399
        %v5656 = vpack.c.b16 %v5400, %v5400
        %v5657 = vpack.c.b16 %v5401, %v5401
        %v5658 = vpack.c.b16 %v5402, %v5402
        %v5659 = vpack.c.b16 %v5403, %v5403
        %v5660 = vpack.c.b16 %v5404, %v5404
        %v5661 = vpack.c.b16 %v5405, %v5405
        %v5662 = vpack.c.b16 %v5406, %v5406
        %v5663 = vpack.c.b16 %v5407, %v5407
        %v5664 = vpack.c.b16 %v5408, %v5408
        %v5665 = vpack.c.b16 %v5409, %v5409
        %v5666 = vpack.c.b16 %v5410, %v5410
        %v5667 = vpack.c.b16 %v5411, %v5411
        %v5668 = vpack.c.b16 %v5412, %v5412
        %v5669 = vpack.c.b16 %v5413, %v5413
        %v5670 = vpack.c.b16 %v5414, %v5414
        %v5671 = vpack.c.b16 %v5415, %v5415
        %v5672 = vpack.c.b16 %v5416, %v5416
        %v5673 = vpack.c.b16 %v5417, %v5417
        %v5674 = vpack.c.b16 %v5418, %v5418
        %v5675 = vpack.c.b16 %v5419, %v5419
        %v5676 = vpack.c.b16 %v5420, %v5420
        %v5677 = vpack.c.b16 %v5421, %v5421
        %v5678 = vpack.c.b16 %v5422, %v5422
        %v5679 = vpack.c.b16 %v5423, %v5423
        %v5680 = vpack.c.b16 %v5424, %v5424
        %v5681 = vpack.c.b16 %v5425, %v5425
        %v5682 = vpack.c.b16 %v5426, %v5426
        %v5683 = vpack.c.b16 %v5427, %v5427
        %v5684 = vpack.c.b16 %v5428, %v5428
        %v5685 = vpack.c.b16 %v5429, %v5429
        %v5686 = vpack.c.b16 %v5430, %v5430
        %v5687 = vpack.c.b16 %v5431, %v5431
        %v5688 = vpack.c.b16 %v5432, %v5432
        %v5689 = vpack.c.b16 %v5433, %v5433
        %v5690 = vpack.c.b16 %v5434, %v5434
        %v5691 = vpack.c.b16 %v5435, %v5435
        %v5692 = vpack.c.b16 %v5436, %v5436
        %v5693 = vpack.c.b16 %v5437, %v5437
        %v5694 = vpack.c.b16 %v5438, %v5438
        %v5695 = vpack.c.b16 %v5439, %v5439
        %v5696 = vpack.c.b16 %v5440, %v5440
        %v5697 = vpack.c.b16 %v5441, %v5441
        %v5698 = vpack.c.b16 %v5442, %v5442
        %v5699 = vpack.c.b16 %v5443, %v5443
        %v5700 = vpack.c.b16 %v5444, %v5444
        %v5701 = vpack.c.b16 %v5445, %v5445
        %v5702 = vpack.c.b16 %v5446, %v5446
        %v5703 = vpack.c.b16 %v5447, %v5447
        %v5704 = vpack.c.b16 %v5448, %v5448
        %v5705 = vpack.c.b16 %v5449, %v5449
        %v5706 = vpack.c.b16 %v5450, %v5450
        %v5707 = vpack.c.b16 %v5451, %v5451
        %v5708 = vpack.c.b16 %v5452, %v5452
        %v5709 = vpack.c.b16 %v5453, %v5453
        %v5710 = vpack.c.b16 %v5454, %v5454
        %v5711 = vpack.c.b16 %v5455, %v5455
        %v5712 = vpack.c.b16 %v5456, %v5456
        %v5713 = vpack.c.b16 %v5457, %v5457
        %v5714 = vpack.c.b16 %v5458, %v5458
        %v5715 = vpack.c.b16 %v5459, %v5459
        %v5716 = vpack.c.b16 %v5460, %v5460
        %v5717 = vpack.c.b16 %v5461, %v5461
        %v5718 = vpack.c.b16 %v5462, %v5462
        %v5719 = vpack.c.b16 %v5463, %v5463
        %v5720 = vpack.c.b16 %v5464, %v5464
        %v5721 = vpack.c.b16 %v5465, %v5465
        %v5722 = vpack.c.b16 %v5466, %v5466
        %v5723 = vpack.c.b16 %v5467, %v5467
        %v5724 = vpack.c.b16 %v5468, %v5468
        %v5725 = vpack.c.b16 %v5469, %v5469
        %v5726 = vpack.c.b16 %v5470, %v5470
        %v5727 = vpack.c.b16 %v5471, %v5471
        %v5728 = vpack.c.b16 %v5472, %v5472
        %v5729 = vpack.c.b16 %v5473, %v5473
        %v5730 = vpack.c.b16 %v5474, %v5474
        %v5731 = vpack.c.b16 %v5475, %v5475
        %v5732 = vpack.c.b16 %v5476, %v5476
        %v5733 = vpack.c.b16 %v5477, %v5477
        %v5734 = vpack.c.b16 %v5478, %v5478
        %v5735 = vpack.c.b16 %v5479, %v5479
        %v5736 = vpack.c.b16 %v5480, %v5480
        %v5737 = vpack.c.b16 %v5481, %v5481
        %v5738 = vpack.c.b16 %v5482, %v5482
        %v5739 = vpack.c.b16 %v5483, %v5483
        %v5740 = vpack.c.b16 %v5484, %v5484
        %v5741 = vpack.c.b16 %v5485, %v5485
        %v5742 = vpack.c.b16 %v5486, %v5486
        %v5743 = vpack.c.b16 %v5487, %v5487
        %v5744 = vpack.c.b16 %v5488, %v5488
        %v5745 = vpack.c.b16 %v5489, %v5489
        %v5746 = vpack.c.b16 %v5490, %v5490
        %v5747 = vpack.c.b16 %v5491, %v5491
        %v5748 = vpack.c.b16 %v5492, %v5492
        %v5749 = vpack.c.b16 %v5493, %v5493
        %v5750 = vpack.c.b16 %v5494, %v5494
        %v5751 = vpack.c.b16 %v5495, %v5495
        %v5752 = vpack.c.b16 %v5496, %v5496
        %v5753 = vpack.c.b16 %v5497, %v5497
        %v5754 = vpack.c.b16 %v5498, %v5498
        %v5755 = vpack.c.b16 %v5499, %v5499
        %v5756 = vpack.c.b16 %v5500, %v5500
        %v5757 = vpack.c.b16 %v5501, %v5501
        %v5758 = vpack.c.b16 %v5502, %v5502
        %v5759 = vpack.c.b16 %v5503, %v5503
        %v5760 = vpack.c.b16 %v5504, %v5504
        %v5761 = vpack.c.b16 %v5505, %v5505
        %v5762 = vpack.c.b16 %v5506, %v5506
        %v5763 = vpack.c.b16 %v5507, %v5507
        %v5764 = vpack.c.b16 %v5508, %v5508
        %v5765 = vpack.c.b16 %v5509, %v5509
        %v5766 = vpack.c.b16 %v5510, %v5510
        %v5767 = vpack.c.b16 %v5511, %v5511
        %v5768 = vpack.c.b16 %v5512, %v5512
        %v5769 = vpack.c.b16 %v5513, %v5513
        %v5770 = vpack.c.b16 %v5514, %v5514
        %v5771 = vpack.c.b16 %v5515, %v5515
        %v5772 = vpack.c.b16 %v5516, %v5516
        %v5773 = vpack.c.b16 %v5517, %v5517
        %v5774 = vpack.c.b16 %v5518, %v5518
        %v5775 = vpack.c.b16 %v5519, %v5519
        %v5776 = vpack.c.b16 %v5520, %v5520
        %v5777 = vpack.c.b16 %v5521, %v5521
        %v5778 = vpack.c.b16 %v5522, %v5522
        %v5779 = vpack.c.b16 %v5523, %v5523
        %v5780 = vpack.c.b16 %v5524, %v5524
        %v5781 = vpack.c.b16 %v5525, %v5525
        %v5782 = vpack.c.b16 %v5526, %v5526
        %v5783 = vpack.c.b16 %v5527, %v5527
        %v5784 = vpack.c.b16 %v5528, %v5528
        %v5785 = vpack.c.b16 %v5529, %v5529
        %v5786 = vpack.c.b16 %v5530, %v5530
        %v5787 = vpack.c.b16 %v5531, %v5531
        %v5788 = vpack.c.b16 %v5532, %v5532
        %v5789 = vpack.c.b16 %v5533, %v5533
        %v5790 = vpack.c.b16 %v5534, %v5534
        %v5791 = vpack.c.b16 %v5535, %v5535
        %v5792 = vpack.c.b16 %v5536, %v5536
        %v5793 = vpack.c.b16 %v5537, %v5537
        %v5794 = vpack.c.b16 %v5538, %v5538
        %v5795 = vpack.c.b16 %v5539, %v5539
        %v5796 = vpack.c.b16 %v5540, %v5540
        %v5797 = vpack.c.b16 %v5541, %v5541
        %v5798 = vpack.c.b16 %v5542, %v5542
        %v5799 = vpack.c.b16 %v5543, %v5543
        %v5800 = vpack.c.b16 %v5544, %v5544
        %v5801 = vpack.c.b16 %v5545, %v5545
        %v5802 = vpack.c.b16 %v5546, %v5546
        %v5803 = vpack.c.b16 %v5547, %v5547
        %v5804 = vpack.c.b16 %v5548, %v5548
        %v5805 = vpack.c.b16 %v5549, %v5549
        %v5806 = vpack.c.b16 %v5550, %v5550
        %v5807 = vpack.c.b16 %v5551, %v5551
        %v5808 = vpack.c.b16 %v5552, %v5552
        %v5809 = vpack.c.b16 %v5553, %v5553
        %v5810 = vpack.c.b16 %v5554, %v5554
        %v5811 = vpack.c.b16 %v5555, %v5555
        %v5812 = vpack.c.b16 %v5556, %v5556
        %v5813 = vpack.c.b16 %v5557, %v5557
        %v5814 = vpack.c.b16 %v5558, %v5558
        %v5815 = vpack.c.b16 %v5559, %v5559
        %v5816 = vpack.c.b16 %v5560, %v5560
        %v5817 = vpack.c.b16 %v5561, %v5561
        %v5818 = vpack.c.b16 %v5562, %v5562
        %v5819 = vpack.c.b16 %v5563, %v5563
        %v5820 = vpack.c.b16 %v5564, %v5564
        %v5821 = vpack.c.b16 %v5565, %v5565
        %v5822 = vpack.c.b16 %v5566, %v5566
        %v5823 = vpack.c.b16 %v5567, %v5567
        %v5824 = vpack.c.b16 %v5568, %v5568
        %v5825 = vpack.c.b16 %v5569, %v5569
        %v5826 = vpack.c.b16 %v5570, %v5570
        %v5827 = vpack.c.b16 %v5571, %v5571
        %v5828 = vpack.c.b16 %v5572, %v5572
        %v5829 = vpack.c.b16 %v5573, %v5573
        %v5830 = vpack.c.b16 %v5574, %v5574
        %v5831 = vpack.c.b16 %v5575, %v5575
        %v5832 = vpack.c.b16 %v5576, %v5576
        %v5833 = vpack.c.b16 %v5577, %v5577
        %v5834 = vpack.c.b16 %v5578, %v5578
        %v5835 = vpack.c.b16 %v5579, %v5579
        %v5836 = vunpack.c.l.b16 %v5580
        %v5837 = vunpack.c.l.b16 %v5581
        %v5838 = vunpack.c.l.b16 %v5582
        %v5839 = vunpack.c.l.b16 %v5583
        %v5840 = vunpack.c.l.b16 %v5584
        %v5841 = vunpack.c.l.b16 %v5585
        %v5842 = vunpack.c.l.b16 %v5586
        %v5843 = vunpack.c.l.b16 %v5587
        %v5844 = vunpack.c.l.b16 %v5588
        %v5845 = vunpack.c.l.b16 %v5589
        %v5846 = vunpack.c.l.b16 %v5590
        %v5847 = vunpack.c.l.b16 %v5591
        %v5848 = vunpack.c.l.b16 %v5592
        %v5849 = vunpack.c.l.b16 %v5593
        %v5850 = vunpack.c.l.b16 %v5594
        %v5851 = vunpack.c.l.b16 %v5595
        %v5852 = vunpack.c.l.b16 %v5596
        %v5853 = vunpack.c.l.b16 %v5597
        %v5854 = vunpack.c.l.b16 %v5598
        %v5855 = vunpack.c.l.b16 %v5599
        %v5856 = vunpack.c.l.b16 %v5600
        %v5857 = vunpack.c.l.b16 %v5601
        %v5858 = vunpack.c.l.b16 %v5602
        %v5859 = vunpack.c.l.b16 %v5603
        %v5860 = vunpack.c.l.b16 %v5604
        %v5861 = vunpack.c.l.b16 %v5605
        %v5862 = vunpack.c.l.b16 %v5606
        %v5863 = vunpack.c.l.b16 %v5607
        %v5864 = vunpack.c.l.b16 %v5608
        %v5865 = vunpack.c.l.b16 %v5609
        %v5866 = vunpack.c.l.b16 %v5610
        %v5867 = vunpack.c.l.b16 %v5611
        %v5868 = vunpack.c.l.b16 %v5612
        %v5869 = vunpack.c.l.b16 %v5613
        %v5870 = vunpack.c.l.b16 %v5614
        %v5871 = vunpack.c.l.b16 %v5615
        %v5872 = vunpack.c.l.b16 %v5616
        %v5873 = vunpack.c.l.b16 %v5617
        %v5874 = vunpack.c.l.b16 %v5618
        %v5875 = vunpack.c.l.b16 %v5619
        %v5876 = vunpack.c.l.b16 %v5620
        %v5877 = vunpack.c.l.b16 %v5621
        %v5878 = vunpack.c.l.b16 %v5622
        %v5879 = vunpack.c.l.b16 %v5623
        %v5880 = vunpack.c.l.b16 %v5624
        %v5881 = vunpack.c.l.b16 %v5625
        %v5882 = vunpack.c.l.b16 %v5626
        %v5883 = vunpack.c.l.b16 %v5627
        %v5884 = vunpack.c.l.b16 %v5628
        %v5885 = vunpack.c.l.b16 %v5629
        %v5886 = vunpack.c.l.b16 %v5630
        %v5887 = vunpack.c.l.b16 %v5631
        %v5888 = vunpack.c.l.b16 %v5632
        %v5889 = vunpack.c.l.b16 %v5633
        %v5890 = vunpack.c.l.b16 %v5634
        %v5891 = vunpack.c.l.b16 %v5635
        %v5892 = vunpack.c.l.b16 %v5636
        %v5893 = vunpack.c.l.b16 %v5637
        %v5894 = vunpack.c.l.b16 %v5638
        %v5895 = vunpack.c.l.b16 %v5639
        %v5896 = vunpack.c.l.b16 %v5640
        %v5897 = vunpack.c.l.b16 %v5641
        %v5898 = vunpack.c.l.b16 %v5642
        %v5899 = vunpack.c.l.b16 %v5643
        %v5900 = vunpack.c.l.b16 %v5644
        %v5901 = vunpack.c.l.b16 %v5645
        %v5902 = vunpack.c.l.b16 %v5646
        %v5903 = vunpack.c.l.b16 %v5647
        %v5904 = vunpack.c.l.b16 %v5648
        %v5905 = vunpack.c.l.b16 %v5649
        %v5906 = vunpack.c.l.b16 %v5650
        %v5907 = vunpack.c.l.b16 %v5651
        %v5908 = vunpack.c.l.b16 %v5652
        %v5909 = vunpack.c.l.b16 %v5653
        %v5910 = vunpack.c.l.b16 %v5654
        %v5911 = vunpack.c.l.b16 %v5655
        %v5912 = vunpack.c.l.b16 %v5656
        %v5913 = vunpack.c.l.b16 %v5657
        %v5914 = vunpack.c.l.b16 %v5658
        %v5915 = vunpack.c.l.b16 %v5659
        %v5916 = vunpack.c.l.b16 %v5660
        %v5917 = vunpack.c.l.b16 %v5661
        %v5918 = vunpack.c.l.b16 %v5662
        %v5919 = vunpack.c.l.b16 %v5663
        %v5920 = vunpack.c.l.b16 %v5664
        %v5921 = vunpack.c.l.b16 %v5665
        %v5922 = vunpack.c.l.b16 %v5666
        %v5923 = vunpack.c.l.b16 %v5667
        %v5924 = vunpack.c.l.b16 %v5668
        %v5925 = vunpack.c.l.b16 %v5669
        %v5926 = vunpack.c.l.b16 %v5670
        %v5927 = vunpack.c.l.b16 %v5671
        %v5928 = vunpack.c.l.b16 %v5672
        %v5929 = vunpack.c.l.b16 %v5673
        %v5930 = vunpack.c.l.b16 %v5674
        %v5931 = vunpack.c.l.b16 %v5675
        %v5932 = vunpack.c.l.b16 %v5676
        %v5933 = vunpack.c.l.b16 %v5677
        %v5934 = vunpack.c.l.b16 %v5678
        %v5935 = vunpack.c.l.b16 %v5679
        %v5936 = vunpack.c.l.b16 %v5680
        %v5937 = vunpack.c.l.b16 %v5681
        %v5938 = vunpack.c.l.b16 %v5682
        %v5939 = vunpack.c.l.b16 %v5683
        %v5940 = vunpack.c.l.b16 %v5684
        %v5941 = vunpack.c.l.b16 %v5685
        %v5942 = vunpack.c.l.b16 %v5686
        %v5943 = vunpack.c.l.b16 %v5687
        %v5944 = vunpack.c.l.b16 %v5688
        %v5945 = vunpack.c.l.b16 %v5689
        %v5946 = vunpack.c.l.b16 %v5690
        %v5947 = vunpack.c.l.b16 %v5691
        %v5948 = vunpack.c.l.b16 %v5692
        %v5949 = vunpack.c.l.b16 %v5693
        %v5950 = vunpack.c.l.b16 %v5694
        %v5951 = vunpack.c.l.b16 %v5695
        %v5952 = vunpack.c.l.b16 %v5696
        %v5953 = vunpack.c.l.b16 %v5697
        %v5954 = vunpack.c.l.b16 %v5698
        %v5955 = vunpack.c.l.b16 %v5699
        %v5956 = vunpack.c.l.b16 %v5700
        %v5957 = vunpack.c.l.b16 %v5701
        %v5958 = vunpack.c.l.b16 %v5702
        %v5959 = vunpack.c.l.b16 %v5703
        %v5960 = vunpack.c.l.b16 %v5704
        %v5961 = vunpack.c.l.b16 %v5705
        %v5962 = vunpack.c.l.b16 %v5706
        %v5963 = vunpack.c.l.b16 %v5707
        %v5964 = vunpack.c.l.b16 %v5708
        %v5965 = vunpack.c.l.b16 %v5709
        %v5966 = vunpack.c.l.b16 %v5710
        %v5967 = vunpack.c.l.b16 %v5711
        %v5968 = vunpack.c.l.b16 %v5712
        %v5969 = vunpack.c.l.b16 %v5713
        %v5970 = vunpack.c.l.b16 %v5714
        %v5971 = vunpack.c.l.b16 %v5715
        %v5972 = vunpack.c.l.b16 %v5716
        %v5973 = vunpack.c.l.b16 %v5717
        %v5974 = vunpack.c.l.b16 %v5718
        %v5975 = vunpack.c.l.b16 %v5719
        %v5976 = vunpack.c.l.b16 %v5720
        %v5977 = vunpack.c.l.b16 %v5721
        %v5978 = vunpack.c.l.b16 %v5722
        %v5979 = vunpack.c.l.b16 %v5723
        %v5980 = vunpack.c.l.b16 %v5724
        %v5981 = vunpack.c.l.b16 %v5725
        %v5982 = vunpack.c.l.b16 %v5726
        %v5983 = vunpack.c.l.b16 %v5727
        %v5984 = vunpack.c.l.b16 %v5728
        %v5985 = vunpack.c.l.b16 %v5729
        %v5986 = vunpack.c.l.b16 %v5730
        %v5987 = vunpack.c.l.b16 %v5731
        %v5988 = vunpack.c.l.b16 %v5732
        %v5989 = vunpack.c.l.b16 %v5733
        %v5990 = vunpack.c.l.b16 %v5734
        %v5991 = vunpack.c.l.b16 %v5735
        %v5992 = vunpack.c.l.b16 %v5736
        %v5993 = vunpack.c.l.b16 %v5737
        %v5994 = vunpack.c.l.b16 %v5738
        %v5995 = vunpack.c.l.b16 %v5739
        %v5996 = vunpack.c.l.b16 %v5740
        %v5997 = vunpack.c.l.b16 %v5741
        %v5998 = vunpack.c.l.b16 %v5742
        %v5999 = vunpack.c.l.b16 %v5743
        %v6000 = vunpack.c.l.b16 %v5744
        %v6001 = vunpack.c.l.b16 %v5745
        %v6002 = vunpack.c.l.b16 %v5746
        %v6003 = vunpack.c.l.b16 %v5747
        %v6004 = vunpack.c.l.b16 %v5748
        %v6005 = vunpack.c.l.b16 %v5749
        %v6006 = vunpack.c.l.b16 %v5750
        %v6007 = vunpack.c.l.b16 %v5751
        %v6008 = vunpack.c.l.b16 %v5752
        %v6009 = vunpack.c.l.b16 %v5753
        %v6010 = vunpack.c.l.b16 %v5754
        %v6011 = vunpack.c.l.b16 %v5755
        %v6012 = vunpack.c.l.b16 %v5756
        %v6013 = vunpack.c.l.b16 %v5757
        %v6014 = vunpack.c.l.b16 %v5758
        %v6015 = vunpack.c.l.b16 %v5759
        %v6016 = vunpack.c.l.b16 %v5760
        %v6017 = vunpack.c.l.b16 %v5761
        %v6018 = vunpack.c.l.b16 %v5762
        %v6019 = vunpack.c.l.b16 %v5763
        %v6020 = vunpack.c.l.b16 %v5764
        %v6021 = vunpack.c.l.b16 %v5765
        %v6022 = vunpack.c.l.b16 %v5766
        %v6023 = vunpack.c.l.b16 %v5767
        %v6024 = vunpack.c.l.b16 %v5768
        %v6025 = vunpack.c.l.b16 %v5769
        %v6026 = vunpack.c.l.b16 %v5770
        %v6027 = vunpack.c.l.b16 %v5771
        %v6028 = vunpack.c.l.b16 %v5772
        %v6029 = vunpack.c.l.b16 %v5773
        %v6030 = vunpack.c.l.b16 %v5774
        %v6031 = vunpack.c.l.b16 %v5775
        %v6032 = vunpack.c.l.b16 %v5776
        %v6033 = vunpack.c.l.b16 %v5777
        %v6034 = vunpack.c.l.b16 %v5778
        %v6035 = vunpack.c.l.b16 %v5779
        %v6036 = vunpack.c.l.b16 %v5780
        %v6037 = vunpack.c.l.b16 %v5781
        %v6038 = vunpack.c.l.b16 %v5782
        %v6039 = vunpack.c.l.b16 %v5783
        %v6040 = vunpack.c.l.b16 %v5784
        %v6041 = vunpack.c.l.b16 %v5785
        %v6042 = vunpack.c.l.b16 %v5786
        %v6043 = vunpack.c.l.b16 %v5787
        %v6044 = vunpack.c.l.b16 %v5788
        %v6045 = vunpack.c.l.b16 %v5789
        %v6046 = vunpack.c.l.b16 %v5790
        %v6047 = vunpack.c.l.b16 %v5791
        %v6048 = vunpack.c.l.b16 %v5792
        %v6049 = vunpack.c.l.b16 %v5793
        %v6050 = vunpack.c.l.b16 %v5794
        %v6051 = vunpack.c.l.b16 %v5795
        %v6052 = vunpack.c.l.b16 %v5796
        %v6053 = vunpack.c.l.b16 %v5797
        %v6054 = vunpack.c.l.b16 %v5798
        %v6055 = vunpack.c.l.b16 %v5799
        %v6056 = vunpack.c.l.b16 %v5800
        %v6057 = vunpack.c.l.b16 %v5801
        %v6058 = vunpack.c.l.b16 %v5802
        %v6059 = vunpack.c.l.b16 %v5803
        %v6060 = vunpack.c.l.b16 %v5804
        %v6061 = vunpack.c.l.b16 %v5805
        %v6062 = vunpack.c.l.b16 %v5806
        %v6063 = vunpack.c.l.b16 %v5807
        %v6064 = vunpack.c.l.b16 %v5808
        %v6065 = vunpack.c.l.b16 %v5809
        %v6066 = vunpack.c.l.b16 %v5810
        %v6067 = vunpack.c.l.b16 %v5811
        %v6068 = vunpack.c.l.b16 %v5812
        %v6069 = vunpack.c.l.b16 %v5813
        %v6070 = vunpack.c.l.b16 %v5814
        %v6071 = vunpack.c.l.b16 %v5815
        %v6072 = vunpack.c.l.b16 %v5816
        %v6073 = vunpack.c.l.b16 %v5817
        %v6074 = vunpack.c.l.b16 %v5818
        %v6075 = vunpack.c.l.b16 %v5819
        %v6076 = vunpack.c.l.b16 %v5820
        %v6077 = vunpack.c.l.b16 %v5821
        %v6078 = vunpack.c.l.b16 %v5822
        %v6079 = vunpack.c.l.b16 %v5823
        %v6080 = vunpack.c.l.b16 %v5824
        %v6081 = vunpack.c.l.b16 %v5825
        %v6082 = vunpack.c.l.b16 %v5826
        %v6083 = vunpack.c.l.b16 %v5827
        %v6084 = vunpack.c.l.b16 %v5828
        %v6085 = vunpack.c.l.b16 %v5829
        %v6086 = vunpack.c.l.b16 %v5830
        %v6087 = vunpack.c.l.b16 %v5831
        %v6088 = vunpack.c.l.b16 %v5832
        %v6089 = vunpack.c.l.b16 %v5833
        %v6090 = vunpack.c.l.b16 %v5834
        %v6091 = vunpack.c.l.b16 %v5835
        %vm6092 = vcmask 1041409
        %v6093 = vsel %vm6092, %v5837, %v5836
        %vm6094 = vcmask 1042434
        %v6095 = vsel %vm6094, %v5838, %v6093
        %vm6096 = vcmask 1043459
        %v6097 = vsel %vm6096, %v5839, %v6095
        %vm6098 = vcmask 1044484
        %v6099 = vsel %vm6098, %v5840, %v6097
        %vm6100 = vcmask 1045509
        %v6101 = vsel %vm6100, %v5841, %v6099
        %vm6102 = vcmask 1046534
        %v6103 = vsel %vm6102, %v5842, %v6101
        %vm6104 = vcmask 1047559
        %v6105 = vsel %vm6104, %v5843, %v6103
        %v6106 = vsel %vm6092, %v5845, %v5844
        %v6107 = vsel %vm6094, %v5846, %v6106
        %v6108 = vsel %vm6096, %v5847, %v6107
        %v6109 = vsel %vm6098, %v5848, %v6108
        %v6110 = vsel %vm6100, %v5849, %v6109
        %v6111 = vsel %vm6102, %v5850, %v6110
        %v6112 = vsel %vm6104, %v5851, %v6111
        %v6113 = vsel %vm6092, %v5853, %v5852
        %v6114 = vsel %vm6094, %v5854, %v6113
        %v6115 = vsel %vm6096, %v5855, %v6114
        %v6116 = vsel %vm6098, %v5856, %v6115
        %v6117 = vsel %vm6100, %v5857, %v6116
        %v6118 = vsel %vm6102, %v5858, %v6117
        %v6119 = vsel %vm6104, %v5859, %v6118
        %v6120 = vsel %vm6092, %v5861, %v5860
        %v6121 = vsel %vm6094, %v5862, %v6120
        %v6122 = vsel %vm6096, %v5863, %v6121
        %v6123 = vsel %vm6098, %v5864, %v6122
        %v6124 = vsel %vm6100, %v5865, %v6123
        %v6125 = vsel %vm6102, %v5866, %v6124
        %v6126 = vsel %vm6104, %v5867, %v6125
        %v6127 = vsel %vm6092, %v5869, %v5868
        %v6128 = vsel %vm6094, %v5870, %v6127
        %v6129 = vsel %vm6096, %v5871, %v6128
        %v6130 = vsel %vm6098, %v5872, %v6129
        %v6131 = vsel %vm6100, %v5873, %v6130
        %v6132 = vsel %vm6102, %v5874, %v6131
        %v6133 = vsel %vm6104, %v5875, %v6132
        %v6134 = vsel %vm6092, %v5877, %v5876
        %v6135 = vsel %vm6094, %v5878, %v6134
        %v6136 = vsel %vm6096, %v5879, %v6135
        %v6137 = vsel %vm6098, %v5880, %v6136
        %v6138 = vsel %vm6100, %v5881, %v6137
        %v6139 = vsel %vm6102, %v5882, %v6138
        %v6140 = vsel %vm6104, %v5883, %v6139
        %v6141 = vsel %vm6092, %v5885, %v5884
        %v6142 = vsel %vm6094, %v5886, %v6141
        %v6143 = vsel %vm6096, %v5887, %v6142
        %v6144 = vsel %vm6098, %v5888, %v6143
        %v6145 = vsel %vm6100, %v5889, %v6144
        %v6146 = vsel %vm6102, %v5890, %v6145
        %v6147 = vsel %vm6104, %v5891, %v6146
        %v6148 = vsel %vm6092, %v5893, %v5892
        %v6149 = vsel %vm6094, %v5894, %v6148
        %v6150 = vsel %vm6096, %v5895, %v6149
        %v6151 = vsel %vm6098, %v5896, %v6150
        %v6152 = vsel %vm6100, %v5897, %v6151
        %v6153 = vsel %vm6102, %v5898, %v6152
        %v6154 = vsel %vm6104, %v5899, %v6153
        %v6155 = vsel %vm6092, %v5901, %v5900
        %v6156 = vsel %vm6094, %v5902, %v6155
        %v6157 = vsel %vm6096, %v5903, %v6156
        %v6158 = vsel %vm6098, %v5904, %v6157
        %v6159 = vsel %vm6100, %v5905, %v6158
        %v6160 = vsel %vm6102, %v5906, %v6159
        %v6161 = vsel %vm6104, %v5907, %v6160
        %v6162 = vsel %vm6092, %v5909, %v5908
        %v6163 = vsel %vm6094, %v5910, %v6162
        %v6164 = vsel %vm6096, %v5911, %v6163
        %v6165 = vsel %vm6098, %v5912, %v6164
        %v6166 = vsel %vm6100, %v5913, %v6165
        %v6167 = vsel %vm6102, %v5914, %v6166
        %v6168 = vsel %vm6104, %v5915, %v6167
        %v6169 = vsel %vm6092, %v5917, %v5916
        %v6170 = vsel %vm6094, %v5918, %v6169
        %v6171 = vsel %vm6096, %v5919, %v6170
        %v6172 = vsel %vm6098, %v5920, %v6171
        %v6173 = vsel %vm6100, %v5921, %v6172
        %v6174 = vsel %vm6102, %v5922, %v6173
        %v6175 = vsel %vm6104, %v5923, %v6174
        %v6176 = vsel %vm6092, %v5925, %v5924
        %v6177 = vsel %vm6094, %v5926, %v6176
        %v6178 = vsel %vm6096, %v5927, %v6177
        %v6179 = vsel %vm6098, %v5928, %v6178
        %v6180 = vsel %vm6100, %v5929, %v6179
        %v6181 = vsel %vm6102, %v5930, %v6180
        %v6182 = vsel %vm6104, %v5931, %v6181
        %v6183 = vsel %vm6092, %v5933, %v5932
        %v6184 = vsel %vm6094, %v5934, %v6183
        %v6185 = vsel %vm6096, %v5935, %v6184
        %v6186 = vsel %vm6098, %v5936, %v6185
        %v6187 = vsel %vm6100, %v5937, %v6186
        %v6188 = vsel %vm6102, %v5938, %v6187
        %v6189 = vsel %vm6104, %v5939, %v6188
        %v6190 = vsel %vm6092, %v5941, %v5940
        %v6191 = vsel %vm6094, %v5942, %v6190
        %v6192 = vsel %vm6096, %v5943, %v6191
        %v6193 = vsel %vm6098, %v5944, %v6192
        %v6194 = vsel %vm6100, %v5945, %v6193
        %v6195 = vsel %vm6102, %v5946, %v6194
        %v6196 = vsel %vm6104, %v5947, %v6195
        %v6197 = vsel %vm6092, %v5949, %v5948
        %v6198 = vsel %vm6094, %v5950, %v6197
        %v6199 = vsel %vm6096, %v5951, %v6198
        %v6200 = vsel %vm6098, %v5952, %v6199
        %v6201 = vsel %vm6100, %v5953, %v6200
        %v6202 = vsel %vm6102, %v5954, %v6201
        %v6203 = vsel %vm6104, %v5955, %v6202
        %v6204 = vsel %vm6092, %v5957, %v5956
        %v6205 = vsel %vm6094, %v5958, %v6204
        %v6206 = vsel %vm6096, %v5959, %v6205
        %v6207 = vsel %vm6098, %v5960, %v6206
        %v6208 = vsel %vm6100, %v5961, %v6207
        %v6209 = vsel %vm6102, %v5962, %v6208
        %v6210 = vsel %vm6104, %v5963, %v6209
        %v6211 = vsel %vm6092, %v5965, %v5964
        %v6212 = vsel %vm6094, %v5966, %v6211
        %v6213 = vsel %vm6096, %v5967, %v6212
        %v6214 = vsel %vm6098, %v5968, %v6213
        %v6215 = vsel %vm6100, %v5969, %v6214
        %v6216 = vsel %vm6102, %v5970, %v6215
        %v6217 = vsel %vm6104, %v5971, %v6216
        %v6218 = vsel %vm6092, %v5973, %v5972
        %v6219 = vsel %vm6094, %v5974, %v6218
        %v6220 = vsel %vm6096, %v5975, %v6219
        %v6221 = vsel %vm6098, %v5976, %v6220
        %v6222 = vsel %vm6100, %v5977, %v6221
        %v6223 = vsel %vm6102, %v5978, %v6222
        %v6224 = vsel %vm6104, %v5979, %v6223
        %v6225 = vsel %vm6092, %v5981, %v5980
        %v6226 = vsel %vm6094, %v5982, %v6225
        %v6227 = vsel %vm6096, %v5983, %v6226
        %v6228 = vsel %vm6098, %v5984, %v6227
        %v6229 = vsel %vm6100, %v5985, %v6228
        %v6230 = vsel %vm6102, %v5986, %v6229
        %v6231 = vsel %vm6104, %v5987, %v6230
        %v6232 = vsel %vm6092, %v5989, %v5988
        %v6233 = vsel %vm6094, %v5990, %v6232
        %v6234 = vsel %vm6096, %v5991, %v6233
        %v6235 = vsel %vm6098, %v5992, %v6234
        %v6236 = vsel %vm6100, %v5993, %v6235
        %v6237 = vsel %vm6102, %v5994, %v6236
        %v6238 = vsel %vm6104, %v5995, %v6237
        %v6239 = vsel %vm6092, %v5997, %v5996
        %v6240 = vsel %vm6094, %v5998, %v6239
        %v6241 = vsel %vm6096, %v5999, %v6240
        %v6242 = vsel %vm6098, %v6000, %v6241
        %v6243 = vsel %vm6100, %v6001, %v6242
        %v6244 = vsel %vm6102, %v6002, %v6243
        %v6245 = vsel %vm6104, %v6003, %v6244
        %v6246 = vsel %vm6092, %v6005, %v6004
        %v6247 = vsel %vm6094, %v6006, %v6246
        %v6248 = vsel %vm6096, %v6007, %v6247
        %v6249 = vsel %vm6098, %v6008, %v6248
        %v6250 = vsel %vm6100, %v6009, %v6249
        %v6251 = vsel %vm6102, %v6010, %v6250
        %v6252 = vsel %vm6104, %v6011, %v6251
        %v6253 = vsel %vm6092, %v6013, %v6012
        %v6254 = vsel %vm6094, %v6014, %v6253
        %v6255 = vsel %vm6096, %v6015, %v6254
        %v6256 = vsel %vm6098, %v6016, %v6255
        %v6257 = vsel %vm6100, %v6017, %v6256
        %v6258 = vsel %vm6102, %v6018, %v6257
        %v6259 = vsel %vm6104, %v6019, %v6258
        %v6260 = vsel %vm6092, %v6021, %v6020
        %v6261 = vsel %vm6094, %v6022, %v6260
        %v6262 = vsel %vm6096, %v6023, %v6261
        %v6263 = vsel %vm6098, %v6024, %v6262
        %v6264 = vsel %vm6100, %v6025, %v6263
        %v6265 = vsel %vm6102, %v6026, %v6264
        %v6266 = vsel %vm6104, %v6027, %v6265
        %v6267 = vsel %vm6092, %v6029, %v6028
        %v6268 = vsel %vm6094, %v6030, %v6267
        %v6269 = vsel %vm6096, %v6031, %v6268
        %v6270 = vsel %vm6098, %v6032, %v6269
        %v6271 = vsel %vm6100, %v6033, %v6270
        %v6272 = vsel %vm6102, %v6034, %v6271
        %v6273 = vsel %vm6104, %v6035, %v6272
        %v6274 = vsel %vm6092, %v6037, %v6036
        %v6275 = vsel %vm6094, %v6038, %v6274
        %v6276 = vsel %vm6096, %v6039, %v6275
        %v6277 = vsel %vm6098, %v6040, %v6276
        %v6278 = vsel %vm6100, %v6041, %v6277
        %v6279 = vsel %vm6102, %v6042, %v6278
        %v6280 = vsel %vm6104, %v6043, %v6279
        %v6281 = vsel %vm6092, %v6045, %v6044
        %v6282 = vsel %vm6094, %v6046, %v6281
        %v6283 = vsel %vm6096, %v6047, %v6282
        %v6284 = vsel %vm6098, %v6048, %v6283
        %v6285 = vsel %vm6100, %v6049, %v6284
        %v6286 = vsel %vm6102, %v6050, %v6285
        %v6287 = vsel %vm6104, %v6051, %v6286
        %v6288 = vsel %vm6092, %v6053, %v6052
        %v6289 = vsel %vm6094, %v6054, %v6288
        %v6290 = vsel %vm6096, %v6055, %v6289
        %v6291 = vsel %vm6098, %v6056, %v6290
        %v6292 = vsel %vm6100, %v6057, %v6291
        %v6293 = vsel %vm6102, %v6058, %v6292
        %v6294 = vsel %vm6104, %v6059, %v6293
        %v6295 = vsel %vm6092, %v6061, %v6060
        %v6296 = vsel %vm6094, %v6062, %v6295
        %v6297 = vsel %vm6096, %v6063, %v6296
        %v6298 = vsel %vm6098, %v6064, %v6297
        %v6299 = vsel %vm6100, %v6065, %v6298
        %v6300 = vsel %vm6102, %v6066, %v6299
        %v6301 = vsel %vm6104, %v6067, %v6300
        %v6302 = vsel %vm6092, %v6069, %v6068
        %v6303 = vsel %vm6094, %v6070, %v6302
        %v6304 = vsel %vm6096, %v6071, %v6303
        %v6305 = vsel %vm6098, %v6072, %v6304
        %v6306 = vsel %vm6100, %v6073, %v6305
        %v6307 = vsel %vm6102, %v6074, %v6306
        %v6308 = vsel %vm6104, %v6075, %v6307
        %v6309 = vsel %vm6092, %v6077, %v6076
        %v6310 = vsel %vm6094, %v6078, %v6309
        %v6311 = vsel %vm6096, %v6079, %v6310
        %v6312 = vsel %vm6098, %v6080, %v6311
        %v6313 = vsel %vm6100, %v6081, %v6312
        %v6314 = vsel %vm6102, %v6082, %v6313
        %v6315 = vsel %vm6104, %v6083, %v6314
        %v6316 = vsel %vm6092, %v6085, %v6084
        %v6317 = vsel %vm6094, %v6086, %v6316
        %v6318 = vsel %vm6096, %v6087, %v6317
        %v6319 = vsel %vm6098, %v6088, %v6318
        %v6320 = vsel %vm6100, %v6089, %v6319
        %v6321 = vsel %vm6102, %v6090, %v6320
        %v6322 = vsel %vm6104, %v6091, %v6321
        %v6323 = vpack.c.b16 %v6105, %v6105
        %v6324 = vpack.c.b16 %v6112, %v6112
        %v6325 = vpack.c.b16 %v6119, %v6119
        %v6326 = vpack.c.b16 %v6126, %v6126
        %v6327 = vpack.c.b16 %v6133, %v6133
        %v6328 = vpack.c.b16 %v6140, %v6140
        %v6329 = vpack.c.b16 %v6147, %v6147
        %v6330 = vpack.c.b16 %v6154, %v6154
        %v6331 = vpack.c.b16 %v6161, %v6161
        %v6332 = vpack.c.b16 %v6168, %v6168
        %v6333 = vpack.c.b16 %v6175, %v6175
        %v6334 = vpack.c.b16 %v6182, %v6182
        %v6335 = vpack.c.b16 %v6189, %v6189
        %v6336 = vpack.c.b16 %v6196, %v6196
        %v6337 = vpack.c.b16 %v6203, %v6203
        %v6338 = vpack.c.b16 %v6210, %v6210
        %v6339 = vpack.c.b16 %v6217, %v6217
        %v6340 = vpack.c.b16 %v6224, %v6224
        %v6341 = vpack.c.b16 %v6231, %v6231
        %v6342 = vpack.c.b16 %v6238, %v6238
        %v6343 = vpack.c.b16 %v6245, %v6245
        %v6344 = vpack.c.b16 %v6252, %v6252
        %v6345 = vpack.c.b16 %v6259, %v6259
        %v6346 = vpack.c.b16 %v6266, %v6266
        %v6347 = vpack.c.b16 %v6273, %v6273
        %v6348 = vpack.c.b16 %v6280, %v6280
        %v6349 = vpack.c.b16 %v6287, %v6287
        %v6350 = vpack.c.b16 %v6294, %v6294
        %v6351 = vpack.c.b16 %v6301, %v6301
        %v6352 = vpack.c.b16 %v6308, %v6308
        %v6353 = vpack.c.b16 %v6315, %v6315
        %v6354 = vpack.c.b16 %v6322, %v6322
        %6387 = vst [vmem:[%s190] sm:$0xf] %v6323
        %6388 = vst [vmem:[%s190 + $0x4] sm:$0xf] %v6324
        %6389 = vst [vmem:[%s190 + $0x8] sm:$0xf] %v6325
        %6390 = vst [vmem:[%s190 + $0xc] sm:$0xf] %v6326
        %6391 = vst [vmem:[%s190 + $0x10] sm:$0xf] %v6327
        %6392 = vst [vmem:[%s190 + $0x14] sm:$0xf] %v6328
        %6393 = vst [vmem:[%s190 + $0x18] sm:$0xf] %v6329
        %6394 = vst [vmem:[%s190 + $0x1c] sm:$0xf] %v6330
        %6395 = vst [vmem:[%s190 + $0x20] sm:$0xf] %v6331
        %6396 = vst [vmem:[%s190 + $0x24] sm:$0xf] %v6332
        %6397 = vst [vmem:[%s190 + $0x28] sm:$0xf] %v6333
        %6398 = vst [vmem:[%s190 + $0x2c] sm:$0xf] %v6334
        %6399 = vst [vmem:[%s190 + $0x30] sm:$0xf] %v6335
        %6400 = vst [vmem:[%s190 + $0x34] sm:$0xf] %v6336
        %6401 = vst [vmem:[%s190 + $0x38] sm:$0xf] %v6337
        %6402 = vst [vmem:[%s190 + $0x3c] sm:$0xf] %v6338
        %6403 = vst [vmem:[%s190 + $0x40] sm:$0xf] %v6339
        %6404 = vst [vmem:[%s190 + $0x44] sm:$0xf] %v6340
        %6405 = vst [vmem:[%s190 + $0x48] sm:$0xf] %v6341
        %6406 = vst [vmem:[%s190 + $0x4c] sm:$0xf] %v6342
        %6407 = vst [vmem:[%s190 + $0x50] sm:$0xf] %v6343
        %6408 = vst [vmem:[%s190 + $0x54] sm:$0xf] %v6344
        %6409 = vst [vmem:[%s190 + $0x58] sm:$0xf] %v6345
        %6410 = vst [vmem:[%s190 + $0x5c] sm:$0xf] %v6346
        %6411 = vst [vmem:[%s190 + $0x60] sm:$0xf] %v6347
        %6412 = vst [vmem:[%s190 + $0x64] sm:$0xf] %v6348
        %6413 = vst [vmem:[%s190 + $0x68] sm:$0xf] %v6349
        %6414 = vst [vmem:[%s190 + $0x6c] sm:$0xf] %v6350
        %6415 = vst [vmem:[%s190 + $0x70] sm:$0xf] %v6351
        %6416 = vst [vmem:[%s190 + $0x74] sm:$0xf] %v6352
        %6417 = vst [vmem:[%s190 + $0x78] sm:$0xf] %v6353
        %6418 = vst [vmem:[%s190 + $0x7c] sm:$0xf] %v6354
        %s6419 = sand.u32 %s109, 1
        %s6420 = scalar_lea.sflag [#allocation3], %s6419
        %s6421 = sand.u32 %s109, 1
        %s6422 = smul.addr %s6421, 128
        %s6423 = scalar_lea.vmem [#allocation2], %s6422
        // Predicated region
        $region33: #{tpu_custom_call.1} parent=31 // pred_check
          %p6424 = pneg %p119
        $region34: #{tpu_custom_call.1} parent=31 // pred_check_branch
          %6426 = sbr.rel (%p6424) target = $region36
        $region35: #{tpu_custom_call.1} parent=31 // pred_region
          %s6427 = smul.u32 4, %s22
          %s6429 = ssub.s32 2048, 2048
          %6430 = vsyncadd %s6420, %s6429
          %s6431 = smul.addr %s6427, 8
          %s6432 = smul.addr %s21, 512
          %s6433 = sadd.s32 %s6431, %s6432
          %s6434 = smul.addr %s6433, 64
          %s6435 = scalar_lea.hbm %s3, %s6434
          %s6436 = sshll.u32 %s6423, 4
          %s6437 = int_to_ptr.vmem [resolvable:$true] %s6436
          %6442 = dma.vmem_to_hbm [thread:$0]  %s6437, 2048, %s6435, %s6420, 64, 64, 4
        $region36: #{tpu_custom_call.1} parent=31 // pred_fallthru
          _
      $region32: #{tpu_custom_call.1} parent=5 // pred_fallthru
        _
      %p6443 = scmp.le.s32.totalorder 2, %s12
      // Predicated region
      $region37: #{tpu_custom_call.1} parent=5 // pred_check
        %p6444 = pneg %p6443
      $region38: #{tpu_custom_call.1} parent=5 // pred_check_branch
        %6446 = sbr.rel (%p6444) target = $region40
      $region39: #{tpu_custom_call.1} parent=5 // pred_region
        %s6447 = ssub.s32 %s12, 2
        // Predicated region
        $region41: #{tpu_custom_call.1} parent=39 // pred_check
          %p6448 = pneg %p125
        $region42: #{tpu_custom_call.1} parent=39 // pred_check_branch
          %6450 = sbr.rel (%p6448) target = $region44
        $region43: #{tpu_custom_call.1} parent=39 // pred_region
          %s6451 = sand.u32 %s110, 1
          %s6452 = scalar_lea.sflag [#allocation3], %s6451
          %s6453 = sand.u32 %s110, 1
          %s6454 = smul.addr %s6453, 128
          %s6455 = scalar_lea.vmem [#allocation2], %s6454
          %6456 = dma.done %s6452, 2048
        $region44: #{tpu_custom_call.1} parent=39 // pred_fallthru
          _
      $region40: #{tpu_custom_call.1} parent=5 // pred_fallthru
        _
    $region6: #{tpu_custom_call.1} parent=1 // loop_footer
      %s16 = sadd.s32 1, %s12
    $region7: #{tpu_custom_call.1} parent=1 // loop_footer_branch
      %11 = sbr.rel target = $region3
    $region8: #{tpu_custom_call.1} parent=1 // loop_exit
      _
    %6457 = vsyncpa [#allocation3], 1
    %s6458 = scalar_lea.sflag [#allocation3], 1
    %6459 = vsyncpa %s6458, 1

</llo_original>
